<compile_context>
chip_gen: v7x
topology: tpu7x:2x2x1
jax: 0.10.0
libtpu: 0.0.40
codegen_flags: <defaults>
</compile_context>

<pallas_src>
import functools
import math

import jax
import jax.numpy as jnp
from jax import lax
from jax.experimental import pallas as pl
from jax.experimental.pallas import tpu as pltpu


# ----------------------------------------------------------------------------
# Kernel
# ----------------------------------------------------------------------------
def _layernorm(v, g, b, eps=1e-5):
    mu = jnp.mean(v, axis=-1, keepdims=True)
    var = jnp.mean((v - mu) ** 2, axis=-1, keepdims=True)
    return (v - mu) * lax.rsqrt(var + eps) * g + b


def _cluster_kernel(keep_ref, kbias_ref, x_ref,
                    ln1g_ref, ln1b_ref, wqkv_ref, bqkv_ref, wo_ref, bo_ref,
                    ln2g_ref, ln2b_ref, w1_ref, b1_ref, w2_ref, b2_ref,
                    og_ref, ob_ref, o_ref, *, n_head, num_layers, bt, seq):
    """One grid step = `bt` clusters through all layers + final LayerNorm.

    keep_ref  : (bt*seq, 1)  f32  1.0 valid / 0.0 padded (row zeroing)
    kbias_ref : (bt, 1, seq) f32  additive key bias (-1e9 at padded keys)
    x_ref     : (bt*seq, D)  f32  activations, clusters stacked along rows
    weights   : pre-transposed (contraction dim leading); matmul weights bf16
    """
    x0 = x_ref[...]                               # (R, D) f32, R = bt*seq
    keep = keep_ref[...]                          # (R, 1)
    kbias = kbias_ref[...]                        # (bt, 1, seq)
    R, D = x0.shape
    hd = D // n_head
    scale = jnp.float32(1.0 / math.sqrt(hd))

    # Weights: loaded once, resident across the whole layer loop.
    ln1_g = ln1g_ref[...]
    ln1_b = ln1b_ref[...]
    ln2_g = ln2g_ref[...]
    ln2_b = ln2b_ref[...]
    out_g = og_ref[...]
    out_b = ob_ref[...]
    wqkv = wqkv_ref[...]                          # (D, 3D)  bf16
    wo = wo_ref[...]                              # (D, D)   bf16
    w1 = w1_ref[...]                              # (D, 4D)  bf16
    w2 = w2_ref[...]                              # (4D, D)  bf16
    bqkv = bqkv_ref[...]                          # (1, 3D)  f32
    bo = bo_ref[...]                              # (1, D)   f32
    b1 = b1_ref[...]                              # (1, 4D)  f32
    b2 = b2_ref[...]                              # (1, D)   f32

    def one_layer(_, xc):
        # ---- self-attention branch (bf16 matmuls, f32 accumulation) ---------
        h = _layernorm(xc, ln1_g, ln1_b).astype(jnp.bfloat16)
        qkv = jnp.dot(h, wqkv, preferred_element_type=jnp.float32) + bqkv
        # split into per-cluster views (leading-dim split only, lane dim fixed)
        q3 = (qkv[:, 0:D] * scale).reshape(bt, seq, D)
        k3 = qkv[:, D:2 * D].reshape(bt, seq, D)
        v3 = qkv[:, 2 * D:3 * D].reshape(bt, seq, D)

        # Per-head attention batched over the bt clusters; no head transposes.
        ctx_heads = []
        for hidx in range(n_head):
            lo, hi = hidx * hd, (hidx + 1) * hd
            qh = q3[:, :, lo:hi].astype(jnp.bfloat16)        # (bt, seq, hd)
            kh = k3[:, :, lo:hi].astype(jnp.bfloat16)
            vh = v3[:, :, lo:hi].astype(jnp.bfloat16)
            s = jnp.einsum('bqd,bkd->bqk', qh, kh,
                           preferred_element_type=jnp.float32) + kbias
            m = jnp.max(s, axis=-1, keepdims=True)
            p = jnp.exp(s - m)
            p = p * pl.reciprocal(jnp.sum(p, axis=-1, keepdims=True),
                                  approx=True)
            ch = jnp.einsum('bqk,bkd->bqd', p.astype(jnp.bfloat16), vh,
                            preferred_element_type=jnp.float32)
            ctx_heads.append(ch.reshape(R, hd))
        ctx = jnp.concatenate(ctx_heads, axis=-1).astype(jnp.bfloat16)
        attn = jnp.dot(ctx, wo, preferred_element_type=jnp.float32) + bo
        xc = xc + attn

        # ---- MLP branch ------------------------------------------------------
        h2 = _layernorm(xc, ln2_g, ln2_b).astype(jnp.bfloat16)
        hm = jnp.dot(h2, w1, preferred_element_type=jnp.float32) + b1
        # QuickGELU: x * sigmoid(1.702 x); reciprocal runs on the EUP slot.
        hm = hm * pl.reciprocal(1.0 + jnp.exp(-1.702 * hm), approx=True)
        mlp = jnp.dot(hm.astype(jnp.bfloat16), w2,
                      preferred_element_type=jnp.float32) + b2
        return xc + mlp

    xf = lax.fori_loop(0, num_layers, one_layer, x0,
                       unroll=num_layers if num_layers <= 4 else 1)

    # Zero padded rows once (equivalent to the per-layer zeroing in PyTorch:
    # padded rows never influence valid rows because their keys are masked),
    # then the fused final LayerNorm (padded rows -> beta, as in PyTorch).
    xf = xf * keep
    o_ref[...] = _layernorm(xf, out_g, out_b)


# ----------------------------------------------------------------------------
# pallas_call builder
# ----------------------------------------------------------------------------
def _vmem_limit_bytes(bt, seq, D):
    rows = bt * seq
    weights = 12 * D * D * 2 + 16 * D * 4               # bf16 matmuls + f32 vecs
    acts = 2 * rows * D * 4 * 2                         # x in + out, dbl-buffered
    masks = 2 * (rows * 4 + bt * seq * 4)
    live = rows * (3 * D + 4 * D + 2 * D) * 4           # qkv + mlp hidden + temps
    est = weights + acts + masks + live
    # generous headroom, but never request more than ~56 MiB (v7x TC = 64 MiB)
    return int(min(max(2 * est, 32 * 1024 * 1024), 56 * 1024 * 1024))


def make_cluster_call(Bp, Lp, D, n_head, num_layers, bt):
    R = bt * Lp
    kernel = functools.partial(_cluster_kernel, n_head=n_head,
                               num_layers=num_layers, bt=bt, seq=Lp)
    row_map = lambda i: (i, 0)          # activation row-blocks (bt*Lp rows)
    b3_map = lambda i: (i, 0, 0)        # per-cluster key-bias blocks
    const2 = lambda i: (0, 0)           # weights: fetched once, stay resident

    def wspec(shape):
        # Constant index map + single pipeline buffer: no dead second copy.
        return pl.BlockSpec(shape, const2, pipeline_mode=pl.Buffered(1))

    in_specs = [
        pl.BlockSpec((R, 1), row_map),            # keep mask (row zeroing)
        pl.BlockSpec((bt, 1, Lp), b3_map),        # additive key bias
        pl.BlockSpec((R, D), row_map),            # x (clusters stacked on rows)
        wspec((1, D)),                            # ln1_g
        wspec((1, D)),                            # ln1_b
        wspec((D, 3 * D)),                        # wqkv^T (bf16)
        wspec((1, 3 * D)),                        # bqkv
        wspec((D, D)),                            # wo^T (bf16)
        wspec((1, D)),                            # bo
        wspec((1, D)),                            # ln2_g
        wspec((1, D)),                            # ln2_b
        wspec((D, 4 * D)),                        # w1^T (bf16)
        wspec((1, 4 * D)),                        # b1
        wspec((4 * D, D)),                        # w2^T (bf16)
        wspec((1, D)),                            # b2
        wspec((1, D)),                            # out_ln_g
        wspec((1, D)),                            # out_ln_b
    ]
    return pl.pallas_call(
        kernel,
        out_shape=jax.ShapeDtypeStruct((Bp * Lp, D), jnp.float32),
        grid=(Bp // bt,),
        in_specs=in_specs,
        out_specs=pl.BlockSpec((R, D), row_map),
        compiler_params=pltpu.CompilerParams(
            dimension_semantics=("parallel",),
            vmem_limit_bytes=_vmem_limit_bytes(bt, Lp, D)),
    )


def _choose_block_batch(B, Lp, target_rows=256):
    """Pick Bt so each grid step has ~256 matmul rows (fills a 256-wide MXU),
    while keeping at least two grid steps so both v7x TensorCores get work."""
    bt = max(1, min(B, target_rows // Lp)) if Lp <= target_rows else 1
    if B >= 2:
        bt = min(bt, -(-B // 2))
    return bt


# ----------------------------------------------------------------------------
# Parameters & wrapper
# ----------------------------------------------------------------------------
def init_params(key, d_model):
    """Deterministic synthetic weights. One block shared by all layers (the
    PyTorch __init__ deepcopies a single block).  Matmul weights stored
    pre-transposed (contraction dim leading) in bf16."""
    D = d_model
    ks = jax.random.split(key, 4)
    s = 0.02
    w_qkv = s * jax.random.normal(ks[0], (3 * D, D), jnp.float32)   # torch (out,in)
    w_o = s * jax.random.normal(ks[1], (D, D), jnp.float32)
    w_1 = s * jax.random.normal(ks[2], (4 * D, D), jnp.float32)
    w_2 = s * jax.random.normal(ks[3], (D, 4 * D), jnp.float32)
    return {
        'ln1_g': jnp.ones((1, D), jnp.float32),
        'ln1_b': jnp.zeros((1, D), jnp.float32),
        'wqkv_t': jnp.transpose(w_qkv).astype(jnp.bfloat16),        # (D, 3D)
        'bqkv': jnp.zeros((1, 3 * D), jnp.float32),
        'wo_t': jnp.transpose(w_o).astype(jnp.bfloat16),            # (D, D)
        'bo': jnp.zeros((1, D), jnp.float32),
        'ln2_g': jnp.ones((1, D), jnp.float32),
        'ln2_b': jnp.zeros((1, D), jnp.float32),
        'w1_t': jnp.transpose(w_1).astype(jnp.bfloat16),            # (D, 4D)
        'b1': jnp.zeros((1, 4 * D), jnp.float32),
        'w2_t': jnp.transpose(w_2).astype(jnp.bfloat16),            # (4D, D)
        'b2': jnp.zeros((1, D), jnp.float32),
        'out_ln_g': jnp.ones((1, D), jnp.float32),
        'out_ln_b': jnp.zeros((1, D), jnp.float32),
    }


def cluster_transformer_forward(x_bdl, mask_bool, params, *, n_head, num_layers,
                                block_batch=None):
    """x_bdl: (B, D, L); mask_bool: (B, L) bool (True == padding).
    Returns (B, D, L), matching ClusterTransformer.forward with attn_all."""
    B, D, L = x_bdl.shape
    assert D % n_head == 0
    Lp = -(-L // 8) * 8                                   # sublane-align seq
    bt = _choose_block_batch(B, Lp) if block_batch is None else block_batch
    Bp = -(-B // bt) * bt                                 # batch multiple of bt

    # (B, D, L) -> (B, L, D).  TODO(synk): accept (B, L, D) upstream to drop
    # this extra HBM transpose pass (kept to preserve the PyTorch interface).
    x = jnp.transpose(x_bdl, (0, 2, 1)).astype(jnp.float32)
    x = jnp.pad(x, ((0, Bp - B), (0, Lp - L), (0, 0)))
    pad = jnp.pad(mask_bool, ((0, Bp - B), (0, Lp - L)), constant_values=True)

    keep = (~pad).astype(jnp.float32).reshape(Bp * Lp, 1)             # (Bp*Lp,1)
    kbias = jnp.where(pad, jnp.float32(-1e9),
                      jnp.float32(0.0))[:, None, :]                   # (Bp,1,Lp)
    x2 = x.reshape(Bp * Lp, D)                                        # free reshape

    call = make_cluster_call(Bp, Lp, D, n_head, num_layers, bt)
    out = call(keep, kbias, x2,
               params['ln1_g'], params['ln1_b'],
               params['wqkv_t'], params['bqkv'],
               params['wo_t'], params['bo'],
               params['ln2_g'], params['ln2_b'],
               params['w1_t'], params['b1'],
               params['w2_t'], params['b2'],
               params['out_ln_g'], params['out_ln_b'])
    out = out.reshape(Bp, Lp, D)[:B, :L]
    return jnp.transpose(out, (0, 2, 1))                              # (B, D, L)


# ----------------------------------------------------------------------------
# Demo
# ----------------------------------------------------------------------------
if __name__ == "__main__":
    B, D, L = 4, 128, 8          # D a multiple of 128 for lane-dense tiles
    n_head, num_layers = 4, 2

    key = jax.random.PRNGKey(0)
    kx, kp = jax.random.split(key)

    x = jax.random.normal(kx, (B, D, L), dtype=jnp.float32)
    # mask: True for padding.
    lengths = jnp.array([L, L - 3, L, 2])
    mask = jnp.arange(L)[None, :] >= lengths[:, None]                 # (B, L) bool

    params = init_params(kp, D)

    fwd = jax.jit(functools.partial(cluster_transformer_forward,
                                    n_head=n_head, num_layers=num_layers))
    out = fwd(x, mask, params)
    jax.block_until_ready(out)
    assert out.shape == (B, D, L)
    assert bool(jnp.all(jnp.isfinite(out)))
    print("KERNEL_OK")
</pallas_src>

<mosaic_0001>
module attributes {stable_mosaic.version = 11 : i64} {
  func.func @_cluster_kernel(%arg0: i32, %arg1: memref<16x1xf32, #tpu.memory_space<vmem>>, %arg2: memref<2x1x8xf32, #tpu.memory_space<vmem>>, %arg3: memref<16x128xf32, #tpu.memory_space<vmem>>, %arg4: memref<1x128xf32, #tpu.memory_space<vmem>>, %arg5: memref<1x128xf32, #tpu.memory_space<vmem>>, %arg6: memref<128x384xbf16, #tpu.memory_space<vmem>>, %arg7: memref<1x384xf32, #tpu.memory_space<vmem>>, %arg8: memref<128x128xbf16, #tpu.memory_space<vmem>>, %arg9: memref<1x128xf32, #tpu.memory_space<vmem>>, %arg10: memref<1x128xf32, #tpu.memory_space<vmem>>, %arg11: memref<1x128xf32, #tpu.memory_space<vmem>>, %arg12: memref<128x512xbf16, #tpu.memory_space<vmem>>, %arg13: memref<1x512xf32, #tpu.memory_space<vmem>>, %arg14: memref<512x128xbf16, #tpu.memory_space<vmem>>, %arg15: memref<1x128xf32, #tpu.memory_space<vmem>>, %arg16: memref<1x128xf32, #tpu.memory_space<vmem>>, %arg17: memref<1x128xf32, #tpu.memory_space<vmem>>, %arg18: memref<16x128xf32, #tpu.memory_space<vmem>>) attributes {dimension_semantics = [#tpu.dimension_semantics<parallel>], iteration_bounds = array<i64: 2>, scalar_prefetch = 0 : i64, scratch_operands = 0 : i64, tpu.core_type = #tpu.core_type<tc>, window_params = [{transform_indices = @transform_0, window_bounds = array<i64: 16, 1>}, {transform_indices = @transform_1, window_bounds = array<i64: 2, 1, 8>}, {transform_indices = @transform_2, window_bounds = array<i64: 16, 128>}, {pipeline_mode = #tpu.pipeline_mode<synchronous>, transform_indices = @transform_3, window_bounds = array<i64: 1, 128>}, {pipeline_mode = #tpu.pipeline_mode<synchronous>, transform_indices = @transform_4, window_bounds = array<i64: 1, 128>}, {pipeline_mode = #tpu.pipeline_mode<synchronous>, transform_indices = @transform_5, window_bounds = array<i64: 128, 384>}, {pipeline_mode = #tpu.pipeline_mode<synchronous>, transform_indices = @transform_6, window_bounds = array<i64: 1, 384>}, {pipeline_mode = #tpu.pipeline_mode<synchronous>, transform_indices = @transform_7, window_bounds = array<i64: 128, 128>}, {pipeline_mode = #tpu.pipeline_mode<synchronous>, transform_indices = @transform_8, window_bounds = array<i64: 1, 128>}, {pipeline_mode = #tpu.pipeline_mode<synchronous>, transform_indices = @transform_9, window_bounds = array<i64: 1, 128>}, {pipeline_mode = #tpu.pipeline_mode<synchronous>, transform_indices = @transform_10, window_bounds = array<i64: 1, 128>}, {pipeline_mode = #tpu.pipeline_mode<synchronous>, transform_indices = @transform_11, window_bounds = array<i64: 128, 512>}, {pipeline_mode = #tpu.pipeline_mode<synchronous>, transform_indices = @transform_12, window_bounds = array<i64: 1, 512>}, {pipeline_mode = #tpu.pipeline_mode<synchronous>, transform_indices = @transform_13, window_bounds = array<i64: 512, 128>}, {pipeline_mode = #tpu.pipeline_mode<synchronous>, transform_indices = @transform_14, window_bounds = array<i64: 1, 128>}, {pipeline_mode = #tpu.pipeline_mode<synchronous>, transform_indices = @transform_15, window_bounds = array<i64: 1, 128>}, {pipeline_mode = #tpu.pipeline_mode<synchronous>, transform_indices = @transform_16, window_bounds = array<i64: 1, 128>}, {transform_indices = @transform_17, window_bounds = array<i64: 16, 128>}]} {
    %c0 = arith.constant 0 : index
    %c0_0 = arith.constant 0 : index
    %0 = vector.load %arg3[%c0, %c0_0] : memref<16x128xf32, #tpu.memory_space<vmem>>, vector<16x128xf32>
    %c0_1 = arith.constant 0 : index
    %c0_2 = arith.constant 0 : index
    %1 = vector.load %arg1[%c0_1, %c0_2] : memref<16x1xf32, #tpu.memory_space<vmem>>, vector<16x1xf32>
    %c0_3 = arith.constant 0 : index
    %c0_4 = arith.constant 0 : index
    %c0_5 = arith.constant 0 : index
    %2 = vector.load %arg2[%c0_3, %c0_4, %c0_5] : memref<2x1x8xf32, #tpu.memory_space<vmem>>, vector<2x1x8xf32>
    %c0_6 = arith.constant 0 : index
    %c0_7 = arith.constant 0 : index
    %3 = vector.load %arg4[%c0_6, %c0_7] : memref<1x128xf32, #tpu.memory_space<vmem>>, vector<1x128xf32>
    %c0_8 = arith.constant 0 : index
    %c0_9 = arith.constant 0 : index
    %4 = vector.load %arg5[%c0_8, %c0_9] : memref<1x128xf32, #tpu.memory_space<vmem>>, vector<1x128xf32>
    %c0_10 = arith.constant 0 : index
    %c0_11 = arith.constant 0 : index
    %5 = vector.load %arg10[%c0_10, %c0_11] : memref<1x128xf32, #tpu.memory_space<vmem>>, vector<1x128xf32>
    %c0_12 = arith.constant 0 : index
    %c0_13 = arith.constant 0 : index
    %6 = vector.load %arg11[%c0_12, %c0_13] : memref<1x128xf32, #tpu.memory_space<vmem>>, vector<1x128xf32>
    %c0_14 = arith.constant 0 : index
    %c0_15 = arith.constant 0 : index
    %7 = vector.load %arg16[%c0_14, %c0_15] : memref<1x128xf32, #tpu.memory_space<vmem>>, vector<1x128xf32>
    %c0_16 = arith.constant 0 : index
    %c0_17 = arith.constant 0 : index
    %8 = vector.load %arg17[%c0_16, %c0_17] : memref<1x128xf32, #tpu.memory_space<vmem>>, vector<1x128xf32>
    %c0_18 = arith.constant 0 : index
    %c0_19 = arith.constant 0 : index
    %9 = vector.load %arg6[%c0_18, %c0_19] : memref<128x384xbf16, #tpu.memory_space<vmem>>, vector<128x384xbf16>
    %c0_20 = arith.constant 0 : index
    %c0_21 = arith.constant 0 : index
    %10 = vector.load %arg8[%c0_20, %c0_21] : memref<128x128xbf16, #tpu.memory_space<vmem>>, vector<128x128xbf16>
    %c0_22 = arith.constant 0 : index
    %c0_23 = arith.constant 0 : index
    %11 = vector.load %arg12[%c0_22, %c0_23] : memref<128x512xbf16, #tpu.memory_space<vmem>>, vector<128x512xbf16>
    %c0_24 = arith.constant 0 : index
    %c0_25 = arith.constant 0 : index
    %12 = vector.load %arg14[%c0_24, %c0_25] : memref<512x128xbf16, #tpu.memory_space<vmem>>, vector<512x128xbf16>
    %c0_26 = arith.constant 0 : index
    %c0_27 = arith.constant 0 : index
    %13 = vector.load %arg7[%c0_26, %c0_27] : memref<1x384xf32, #tpu.memory_space<vmem>>, vector<1x384xf32>
    %c0_28 = arith.constant 0 : index
    %c0_29 = arith.constant 0 : index
    %14 = vector.load %arg9[%c0_28, %c0_29] : memref<1x128xf32, #tpu.memory_space<vmem>>, vector<1x128xf32>
    %c0_30 = arith.constant 0 : index
    %c0_31 = arith.constant 0 : index
    %15 = vector.load %arg13[%c0_30, %c0_31] : memref<1x512xf32, #tpu.memory_space<vmem>>, vector<1x512xf32>
    %c0_32 = arith.constant 0 : index
    %c0_33 = arith.constant 0 : index
    %16 = vector.load %arg15[%c0_32, %c0_33] : memref<1x128xf32, #tpu.memory_space<vmem>>, vector<1x128xf32>
    %cst = arith.constant 0.176776692 : f32
    %c0_i32 = arith.constant 0 : i32
    %cst_34 = arith.constant dense<0.000000e+00> : vector<16xf32>
    %17 = vector.multi_reduction <add>, %0, %cst_34 [1] : vector<16x128xf32> to vector<16xf32>
    %18 = vector.shape_cast %17 : vector<16xf32> to vector<16x1xf32>
    %cst_35 = arith.constant 1.280000e+02 : f32
    %19 = vector.broadcast %cst_35 : f32 to vector<16x1xf32>
    %20 = arith.divf %18, %19 : vector<16x1xf32>
    %21 = vector.broadcast %20 : vector<16x1xf32> to vector<16x128xf32>
    %22 = arith.subf %0, %21 : vector<16x128xf32>
    %23 = arith.mulf %22, %22 : vector<16x128xf32>
    %cst_36 = arith.constant dense<0.000000e+00> : vector<16xf32>
    %24 = vector.multi_reduction <add>, %23, %cst_36 [1] : vector<16x128xf32> to vector<16xf32>
    %25 = vector.shape_cast %24 : vector<16xf32> to vector<16x1xf32>
    %cst_37 = arith.constant 1.280000e+02 : f32
    %26 = vector.broadcast %cst_37 : f32 to vector<16x1xf32>
    %27 = arith.divf %25, %26 : vector<16x1xf32>
    %28 = vector.broadcast %20 : vector<16x1xf32> to vector<16x128xf32>
    %29 = arith.subf %0, %28 : vector<16x128xf32>
    %cst_38 = arith.constant 9.99999974E-6 : f32
    %30 = vector.broadcast %cst_38 : f32 to vector<16x1xf32>
    %31 = arith.addf %27, %30 : vector<16x1xf32>
    %32 = math.rsqrt %31 : vector<16x1xf32>
    %33 = vector.broadcast %32 : vector<16x1xf32> to vector<16x128xf32>
    %34 = arith.mulf %29, %33 : vector<16x128xf32>
    %35 = vector.broadcast %3 : vector<1x128xf32> to vector<16x128xf32>
    %36 = arith.mulf %34, %35 : vector<16x128xf32>
    %37 = vector.broadcast %4 : vector<1x128xf32> to vector<16x128xf32>
    %38 = arith.addf %36, %37 : vector<16x128xf32>
    %39 = arith.truncf %38 : vector<16x128xf32> to vector<16x128xbf16>
    %cst_39 = arith.constant dense<0.000000e+00> : vector<16x384xf32>
    %40 = tpu.matmul %39, %9, %cst_39 {dimension_numbers = #tpu.dot_dimension_numbers<[1], [0], [0], [1], [0, 0, 1, 1], [], []>} : vector<16x128xbf16>, vector<128x384xbf16>, vector<16x384xf32> -> vector<16x384xf32>
    %41 = vector.broadcast %13 : vector<1x384xf32> to vector<16x384xf32>
    %42 = arith.addf %40, %41 : vector<16x384xf32>
    %43 = vector.extract_strided_slice %42 {offsets = [0, 0], sizes = [16, 128], strides = [1, 1]} : vector<16x384xf32> to vector<16x128xf32>
    %44 = vector.broadcast %cst : f32 to vector<16x128xf32>
    %45 = arith.mulf %43, %44 : vector<16x128xf32>
    %46 = vector.shape_cast %45 : vector<16x128xf32> to vector<2x8x128xf32>
    %47 = vector.extract_strided_slice %42 {offsets = [0, 128], sizes = [16, 128], strides = [1, 1]} : vector<16x384xf32> to vector<16x128xf32>
    %48 = vector.shape_cast %47 : vector<16x128xf32> to vector<2x8x128xf32>
    %49 = vector.extract_strided_slice %42 {offsets = [0, 256], sizes = [16, 128], strides = [1, 1]} : vector<16x384xf32> to vector<16x128xf32>
    %50 = vector.shape_cast %49 : vector<16x128xf32> to vector<2x8x128xf32>
    %51 = vector.extract_strided_slice %46 {offsets = [0, 0, 0], sizes = [2, 8, 32], strides = [1, 1, 1]} : vector<2x8x128xf32> to vector<2x8x32xf32>
    %52 = arith.truncf %51 : vector<2x8x32xf32> to vector<2x8x32xbf16>
    %53 = vector.extract_strided_slice %48 {offsets = [0, 0, 0], sizes = [2, 8, 32], strides = [1, 1, 1]} : vector<2x8x128xf32> to vector<2x8x32xf32>
    %54 = arith.truncf %53 : vector<2x8x32xf32> to vector<2x8x32xbf16>
    %55 = vector.extract_strided_slice %50 {offsets = [0, 0, 0], sizes = [2, 8, 32], strides = [1, 1, 1]} : vector<2x8x128xf32> to vector<2x8x32xf32>
    %56 = arith.truncf %55 : vector<2x8x32xf32> to vector<2x8x32xbf16>
    "tpu.trace_start"() <{level = 10 : i32, message = "bqd,bkd->bqk"}> : () -> ()
    %cst_40 = arith.constant dense<0.000000e+00> : vector<2x8x8xf32>
    %57 = tpu.matmul %52, %54, %cst_40 {dimension_numbers = #tpu.dot_dimension_numbers<[2], [2], [1], [1], [0, 0, 0, 1, 1, 1], [0], [0]>} : vector<2x8x32xbf16>, vector<2x8x32xbf16>, vector<2x8x8xf32> -> vector<2x8x8xf32>
    "tpu.trace_stop"() : () -> ()
    %58 = vector.broadcast %2 : vector<2x1x8xf32> to vector<2x8x8xf32>
    %59 = arith.addf %57, %58 : vector<2x8x8xf32>
    %cst_41 = arith.constant dense<0xFF800000> : vector<2x8xf32>
    %60 = vector.multi_reduction <maximumf>, %59, %cst_41 [2] : vector<2x8x8xf32> to vector<2x8xf32>
    %61 = vector.shape_cast %60 : vector<2x8xf32> to vector<2x8x1xf32>
    %62 = vector.broadcast %61 : vector<2x8x1xf32> to vector<2x8x8xf32>
    %63 = arith.subf %59, %62 : vector<2x8x8xf32>
    %64 = math.exp %63 : vector<2x8x8xf32>
    %cst_42 = arith.constant dense<0.000000e+00> : vector<2x8xf32>
    %65 = vector.multi_reduction <add>, %64, %cst_42 [2] : vector<2x8x8xf32> to vector<2x8xf32>
    %66 = vector.shape_cast %65 : vector<2x8xf32> to vector<2x8x1xf32>
    %67 = tpu.reciprocal %66 {approx = true} : vector<2x8x1xf32> -> vector<2x8x1xf32>
    %68 = vector.broadcast %67 : vector<2x8x1xf32> to vector<2x8x8xf32>
    %69 = arith.mulf %64, %68 : vector<2x8x8xf32>
    %70 = arith.truncf %69 : vector<2x8x8xf32> to vector<2x8x8xbf16>
    "tpu.trace_start"() <{level = 10 : i32, message = "bqk,bkd->bqd"}> : () -> ()
    %cst_43 = arith.constant dense<0.000000e+00> : vector<2x8x32xf32>
    %71 = tpu.matmul %70, %56, %cst_43 {dimension_numbers = #tpu.dot_dimension_numbers<[2], [1], [1], [2], [0, 0, 0, 1, 1, 2], [0], [0]>} : vector<2x8x8xbf16>, vector<2x8x32xbf16>, vector<2x8x32xf32> -> vector<2x8x32xf32>
    "tpu.trace_stop"() : () -> ()
    %72 = vector.shape_cast %71 : vector<2x8x32xf32> to vector<16x32xf32>
    %73 = vector.extract_strided_slice %46 {offsets = [0, 0, 32], sizes = [2, 8, 32], strides = [1, 1, 1]} : vector<2x8x128xf32> to vector<2x8x32xf32>
    %74 = arith.truncf %73 : vector<2x8x32xf32> to vector<2x8x32xbf16>
    %75 = vector.extract_strided_slice %48 {offsets = [0, 0, 32], sizes = [2, 8, 32], strides = [1, 1, 1]} : vector<2x8x128xf32> to vector<2x8x32xf32>
    %76 = arith.truncf %75 : vector<2x8x32xf32> to vector<2x8x32xbf16>
    %77 = vector.extract_strided_slice %50 {offsets = [0, 0, 32], sizes = [2, 8, 32], strides = [1, 1, 1]} : vector<2x8x128xf32> to vector<2x8x32xf32>
    %78 = arith.truncf %77 : vector<2x8x32xf32> to vector<2x8x32xbf16>
    "tpu.trace_start"() <{level = 10 : i32, message = "bqd,bkd->bqk"}> : () -> ()
    %cst_44 = arith.constant dense<0.000000e+00> : vector<2x8x8xf32>
    %79 = tpu.matmul %74, %76, %cst_44 {dimension_numbers = #tpu.dot_dimension_numbers<[2], [2], [1], [1], [0, 0, 0, 1, 1, 1], [0], [0]>} : vector<2x8x32xbf16>, vector<2x8x32xbf16>, vector<2x8x8xf32> -> vector<2x8x8xf32>
    "tpu.trace_stop"() : () -> ()
    %80 = vector.broadcast %2 : vector<2x1x8xf32> to vector<2x8x8xf32>
    %81 = arith.addf %79, %80 : vector<2x8x8xf32>
    %cst_45 = arith.constant dense<0xFF800000> : vector<2x8xf32>
    %82 = vector.multi_reduction <maximumf>, %81, %cst_45 [2] : vector<2x8x8xf32> to vector<2x8xf32>
    %83 = vector.shape_cast %82 : vector<2x8xf32> to vector<2x8x1xf32>
    %84 = vector.broadcast %83 : vector<2x8x1xf32> to vector<2x8x8xf32>
    %85 = arith.subf %81, %84 : vector<2x8x8xf32>
    %86 = math.exp %85 : vector<2x8x8xf32>
    %cst_46 = arith.constant dense<0.000000e+00> : vector<2x8xf32>
    %87 = vector.multi_reduction <add>, %86, %cst_46 [2] : vector<2x8x8xf32> to vector<2x8xf32>
    %88 = vector.shape_cast %87 : vector<2x8xf32> to vector<2x8x1xf32>
    %89 = tpu.reciprocal %88 {approx = true} : vector<2x8x1xf32> -> vector<2x8x1xf32>
    %90 = vector.broadcast %89 : vector<2x8x1xf32> to vector<2x8x8xf32>
    %91 = arith.mulf %86, %90 : vector<2x8x8xf32>
    %92 = arith.truncf %91 : vector<2x8x8xf32> to vector<2x8x8xbf16>
    "tpu.trace_start"() <{level = 10 : i32, message = "bqk,bkd->bqd"}> : () -> ()
    %cst_47 = arith.constant dense<0.000000e+00> : vector<2x8x32xf32>
    %93 = tpu.matmul %92, %78, %cst_47 {dimension_numbers = #tpu.dot_dimension_numbers<[2], [1], [1], [2], [0, 0, 0, 1, 1, 2], [0], [0]>} : vector<2x8x8xbf16>, vector<2x8x32xbf16>, vector<2x8x32xf32> -> vector<2x8x32xf32>
    "tpu.trace_stop"() : () -> ()
    %94 = vector.shape_cast %93 : vector<2x8x32xf32> to vector<16x32xf32>
    %95 = vector.extract_strided_slice %46 {offsets = [0, 0, 64], sizes = [2, 8, 32], strides = [1, 1, 1]} : vector<2x8x128xf32> to vector<2x8x32xf32>
    %96 = arith.truncf %95 : vector<2x8x32xf32> to vector<2x8x32xbf16>
    %97 = vector.extract_strided_slice %48 {offsets = [0, 0, 64], sizes = [2, 8, 32], strides = [1, 1, 1]} : vector<2x8x128xf32> to vector<2x8x32xf32>
    %98 = arith.truncf %97 : vector<2x8x32xf32> to vector<2x8x32xbf16>
    %99 = vector.extract_strided_slice %50 {offsets = [0, 0, 64], sizes = [2, 8, 32], strides = [1, 1, 1]} : vector<2x8x128xf32> to vector<2x8x32xf32>
    %100 = arith.truncf %99 : vector<2x8x32xf32> to vector<2x8x32xbf16>
    "tpu.trace_start"() <{level = 10 : i32, message = "bqd,bkd->bqk"}> : () -> ()
    %cst_48 = arith.constant dense<0.000000e+00> : vector<2x8x8xf32>
    %101 = tpu.matmul %96, %98, %cst_48 {dimension_numbers = #tpu.dot_dimension_numbers<[2], [2], [1], [1], [0, 0, 0, 1, 1, 1], [0], [0]>} : vector<2x8x32xbf16>, vector<2x8x32xbf16>, vector<2x8x8xf32> -> vector<2x8x8xf32>
    "tpu.trace_stop"() : () -> ()
    %102 = vector.broadcast %2 : vector<2x1x8xf32> to vector<2x8x8xf32>
    %103 = arith.addf %101, %102 : vector<2x8x8xf32>
    %cst_49 = arith.constant dense<0xFF800000> : vector<2x8xf32>
    %104 = vector.multi_reduction <maximumf>, %103, %cst_49 [2] : vector<2x8x8xf32> to vector<2x8xf32>
    %105 = vector.shape_cast %104 : vector<2x8xf32> to vector<2x8x1xf32>
    %106 = vector.broadcast %105 : vector<2x8x1xf32> to vector<2x8x8xf32>
    %107 = arith.subf %103, %106 : vector<2x8x8xf32>
    %108 = math.exp %107 : vector<2x8x8xf32>
    %cst_50 = arith.constant dense<0.000000e+00> : vector<2x8xf32>
    %109 = vector.multi_reduction <add>, %108, %cst_50 [2] : vector<2x8x8xf32> to vector<2x8xf32>
    %110 = vector.shape_cast %109 : vector<2x8xf32> to vector<2x8x1xf32>
    %111 = tpu.reciprocal %110 {approx = true} : vector<2x8x1xf32> -> vector<2x8x1xf32>
    %112 = vector.broadcast %111 : vector<2x8x1xf32> to vector<2x8x8xf32>
    %113 = arith.mulf %108, %112 : vector<2x8x8xf32>
    %114 = arith.truncf %113 : vector<2x8x8xf32> to vector<2x8x8xbf16>
    "tpu.trace_start"() <{level = 10 : i32, message = "bqk,bkd->bqd"}> : () -> ()
    %cst_51 = arith.constant dense<0.000000e+00> : vector<2x8x32xf32>
    %115 = tpu.matmul %114, %100, %cst_51 {dimension_numbers = #tpu.dot_dimension_numbers<[2], [1], [1], [2], [0, 0, 0, 1, 1, 2], [0], [0]>} : vector<2x8x8xbf16>, vector<2x8x32xbf16>, vector<2x8x32xf32> -> vector<2x8x32xf32>
    "tpu.trace_stop"() : () -> ()
    %116 = vector.shape_cast %115 : vector<2x8x32xf32> to vector<16x32xf32>
    %117 = vector.extract_strided_slice %46 {offsets = [0, 0, 96], sizes = [2, 8, 32], strides = [1, 1, 1]} : vector<2x8x128xf32> to vector<2x8x32xf32>
    %118 = arith.truncf %117 : vector<2x8x32xf32> to vector<2x8x32xbf16>
    %119 = vector.extract_strided_slice %48 {offsets = [0, 0, 96], sizes = [2, 8, 32], strides = [1, 1, 1]} : vector<2x8x128xf32> to vector<2x8x32xf32>
    %120 = arith.truncf %119 : vector<2x8x32xf32> to vector<2x8x32xbf16>
    %121 = vector.extract_strided_slice %50 {offsets = [0, 0, 96], sizes = [2, 8, 32], strides = [1, 1, 1]} : vector<2x8x128xf32> to vector<2x8x32xf32>
    %122 = arith.truncf %121 : vector<2x8x32xf32> to vector<2x8x32xbf16>
    "tpu.trace_start"() <{level = 10 : i32, message = "bqd,bkd->bqk"}> : () -> ()
    %cst_52 = arith.constant dense<0.000000e+00> : vector<2x8x8xf32>
    %123 = tpu.matmul %118, %120, %cst_52 {dimension_numbers = #tpu.dot_dimension_numbers<[2], [2], [1], [1], [0, 0, 0, 1, 1, 1], [0], [0]>} : vector<2x8x32xbf16>, vector<2x8x32xbf16>, vector<2x8x8xf32> -> vector<2x8x8xf32>
    "tpu.trace_stop"() : () -> ()
    %124 = vector.broadcast %2 : vector<2x1x8xf32> to vector<2x8x8xf32>
    %125 = arith.addf %123, %124 : vector<2x8x8xf32>
    %cst_53 = arith.constant dense<0xFF800000> : vector<2x8xf32>
    %126 = vector.multi_reduction <maximumf>, %125, %cst_53 [2] : vector<2x8x8xf32> to vector<2x8xf32>
    %127 = vector.shape_cast %126 : vector<2x8xf32> to vector<2x8x1xf32>
    %128 = vector.broadcast %127 : vector<2x8x1xf32> to vector<2x8x8xf32>
    %129 = arith.subf %125, %128 : vector<2x8x8xf32>
    %130 = math.exp %129 : vector<2x8x8xf32>
    %cst_54 = arith.constant dense<0.000000e+00> : vector<2x8xf32>
    %131 = vector.multi_reduction <add>, %130, %cst_54 [2] : vector<2x8x8xf32> to vector<2x8xf32>
    %132 = vector.shape_cast %131 : vector<2x8xf32> to vector<2x8x1xf32>
    %133 = tpu.reciprocal %132 {approx = true} : vector<2x8x1xf32> -> vector<2x8x1xf32>
    %134 = vector.broadcast %133 : vector<2x8x1xf32> to vector<2x8x8xf32>
    %135 = arith.mulf %130, %134 : vector<2x8x8xf32>
    %136 = arith.truncf %135 : vector<2x8x8xf32> to vector<2x8x8xbf16>
    "tpu.trace_start"() <{level = 10 : i32, message = "bqk,bkd->bqd"}> : () -> ()
    %cst_55 = arith.constant dense<0.000000e+00> : vector<2x8x32xf32>
    %137 = tpu.matmul %136, %122, %cst_55 {dimension_numbers = #tpu.dot_dimension_numbers<[2], [1], [1], [2], [0, 0, 0, 1, 1, 2], [0], [0]>} : vector<2x8x8xbf16>, vector<2x8x32xbf16>, vector<2x8x32xf32> -> vector<2x8x32xf32>
    "tpu.trace_stop"() : () -> ()
    %138 = vector.shape_cast %137 : vector<2x8x32xf32> to vector<16x32xf32>
    %139 = tpu.concatenate %72, %94, %116, %138 in 1 : vector<16x32xf32>, vector<16x32xf32>, vector<16x32xf32>, vector<16x32xf32> -> vector<16x128xf32>
    %140 = arith.truncf %139 : vector<16x128xf32> to vector<16x128xbf16>
    %cst_56 = arith.constant dense<0.000000e+00> : vector<16x128xf32>
    %141 = tpu.matmul %140, %10, %cst_56 {dimension_numbers = #tpu.dot_dimension_numbers<[1], [0], [0], [1], [0, 0, 1, 1], [], []>} : vector<16x128xbf16>, vector<128x128xbf16>, vector<16x128xf32> -> vector<16x128xf32>
    %142 = vector.broadcast %14 : vector<1x128xf32> to vector<16x128xf32>
    %143 = arith.addf %141, %142 : vector<16x128xf32>
    %144 = arith.addf %0, %143 : vector<16x128xf32>
    %cst_57 = arith.constant dense<0.000000e+00> : vector<16xf32>
    %145 = vector.multi_reduction <add>, %144, %cst_57 [1] : vector<16x128xf32> to vector<16xf32>
    %146 = vector.shape_cast %145 : vector<16xf32> to vector<16x1xf32>
    %cst_58 = arith.constant 1.280000e+02 : f32
    %147 = vector.broadcast %cst_58 : f32 to vector<16x1xf32>
    %148 = arith.divf %146, %147 : vector<16x1xf32>
    %149 = vector.broadcast %148 : vector<16x1xf32> to vector<16x128xf32>
    %150 = arith.subf %144, %149 : vector<16x128xf32>
    %151 = arith.mulf %150, %150 : vector<16x128xf32>
    %cst_59 = arith.constant dense<0.000000e+00> : vector<16xf32>
    %152 = vector.multi_reduction <add>, %151, %cst_59 [1] : vector<16x128xf32> to vector<16xf32>
    %153 = vector.shape_cast %152 : vector<16xf32> to vector<16x1xf32>
    %cst_60 = arith.constant 1.280000e+02 : f32
    %154 = vector.broadcast %cst_60 : f32 to vector<16x1xf32>
    %155 = arith.divf %153, %154 : vector<16x1xf32>
    %156 = vector.broadcast %148 : vector<16x1xf32> to vector<16x128xf32>
    %157 = arith.subf %144, %156 : vector<16x128xf32>
    %cst_61 = arith.constant 9.99999974E-6 : f32
    %158 = vector.broadcast %cst_61 : f32 to vector<16x1xf32>
    %159 = arith.addf %155, %158 : vector<16x1xf32>
    %160 = math.rsqrt %159 : vector<16x1xf32>
    %161 = vector.broadcast %160 : vector<16x1xf32> to vector<16x128xf32>
    %162 = arith.mulf %157, %161 : vector<16x128xf32>
    %163 = vector.broadcast %5 : vector<1x128xf32> to vector<16x128xf32>
    %164 = arith.mulf %162, %163 : vector<16x128xf32>
    %165 = vector.broadcast %6 : vector<1x128xf32> to vector<16x128xf32>
    %166 = arith.addf %164, %165 : vector<16x128xf32>
    %167 = arith.truncf %166 : vector<16x128xf32> to vector<16x128xbf16>
    %cst_62 = arith.constant dense<0.000000e+00> : vector<16x512xf32>
    %168 = tpu.matmul %167, %11, %cst_62 {dimension_numbers = #tpu.dot_dimension_numbers<[1], [0], [0], [1], [0, 0, 1, 1], [], []>} : vector<16x128xbf16>, vector<128x512xbf16>, vector<16x512xf32> -> vector<16x512xf32>
    %169 = vector.broadcast %15 : vector<1x512xf32> to vector<16x512xf32>
    %170 = arith.addf %168, %169 : vector<16x512xf32>
    %cst_63 = arith.constant -1.702000e+00 : f32
    %171 = vector.broadcast %cst_63 : f32 to vector<16x512xf32>
    %172 = arith.mulf %171, %170 : vector<16x512xf32>
    %173 = math.exp %172 : vector<16x512xf32>
    %cst_64 = arith.constant 1.000000e+00 : f32
    %174 = vector.broadcast %cst_64 : f32 to vector<16x512xf32>
    %175 = arith.addf %174, %173 : vector<16x512xf32>
    %176 = tpu.reciprocal %175 {approx = true} : vector<16x512xf32> -> vector<16x512xf32>
    %177 = arith.mulf %170, %176 : vector<16x512xf32>
    %178 = arith.truncf %177 : vector<16x512xf32> to vector<16x512xbf16>
    %cst_65 = arith.constant dense<0.000000e+00> : vector<16x128xf32>
    %179 = tpu.matmul %178, %12, %cst_65 {dimension_numbers = #tpu.dot_dimension_numbers<[1], [0], [0], [1], [0, 0, 1, 1], [], []>} : vector<16x512xbf16>, vector<512x128xbf16>, vector<16x128xf32> -> vector<16x128xf32>
    %180 = vector.broadcast %16 : vector<1x128xf32> to vector<16x128xf32>
    %181 = arith.addf %179, %180 : vector<16x128xf32>
    %182 = arith.addf %144, %181 : vector<16x128xf32>
    %c1_i32 = arith.constant 1 : i32
    %cst_66 = arith.constant dense<0.000000e+00> : vector<16xf32>
    %183 = vector.multi_reduction <add>, %182, %cst_66 [1] : vector<16x128xf32> to vector<16xf32>
    %184 = vector.shape_cast %183 : vector<16xf32> to vector<16x1xf32>
    %cst_67 = arith.constant 1.280000e+02 : f32
    %185 = vector.broadcast %cst_67 : f32 to vector<16x1xf32>
    %186 = arith.divf %184, %185 : vector<16x1xf32>
    %187 = vector.broadcast %186 : vector<16x1xf32> to vector<16x128xf32>
    %188 = arith.subf %182, %187 : vector<16x128xf32>
    %189 = arith.mulf %188, %188 : vector<16x128xf32>
    %cst_68 = arith.constant dense<0.000000e+00> : vector<16xf32>
    %190 = vector.multi_reduction <add>, %189, %cst_68 [1] : vector<16x128xf32> to vector<16xf32>
    %191 = vector.shape_cast %190 : vector<16xf32> to vector<16x1xf32>
    %cst_69 = arith.constant 1.280000e+02 : f32
    %192 = vector.broadcast %cst_69 : f32 to vector<16x1xf32>
    %193 = arith.divf %191, %192 : vector<16x1xf32>
    %194 = vector.broadcast %186 : vector<16x1xf32> to vector<16x128xf32>
    %195 = arith.subf %182, %194 : vector<16x128xf32>
    %cst_70 = arith.constant 9.99999974E-6 : f32
    %196 = vector.broadcast %cst_70 : f32 to vector<16x1xf32>
    %197 = arith.addf %193, %196 : vector<16x1xf32>
    %198 = math.rsqrt %197 : vector<16x1xf32>
    %199 = vector.broadcast %198 : vector<16x1xf32> to vector<16x128xf32>
    %200 = arith.mulf %195, %199 : vector<16x128xf32>
    %201 = vector.broadcast %3 : vector<1x128xf32> to vector<16x128xf32>
    %202 = arith.mulf %200, %201 : vector<16x128xf32>
    %203 = vector.broadcast %4 : vector<1x128xf32> to vector<16x128xf32>
    %204 = arith.addf %202, %203 : vector<16x128xf32>
    %205 = arith.truncf %204 : vector<16x128xf32> to vector<16x128xbf16>
    %cst_71 = arith.constant dense<0.000000e+00> : vector<16x384xf32>
    %206 = tpu.matmul %205, %9, %cst_71 {dimension_numbers = #tpu.dot_dimension_numbers<[1], [0], [0], [1], [0, 0, 1, 1], [], []>} : vector<16x128xbf16>, vector<128x384xbf16>, vector<16x384xf32> -> vector<16x384xf32>
    %207 = vector.broadcast %13 : vector<1x384xf32> to vector<16x384xf32>
    %208 = arith.addf %206, %207 : vector<16x384xf32>
    %209 = vector.extract_strided_slice %208 {offsets = [0, 0], sizes = [16, 128], strides = [1, 1]} : vector<16x384xf32> to vector<16x128xf32>
    %210 = vector.broadcast %cst : f32 to vector<16x128xf32>
    %211 = arith.mulf %209, %210 : vector<16x128xf32>
    %212 = vector.shape_cast %211 : vector<16x128xf32> to vector<2x8x128xf32>
    %213 = vector.extract_strided_slice %208 {offsets = [0, 128], sizes = [16, 128], strides = [1, 1]} : vector<16x384xf32> to vector<16x128xf32>
    %214 = vector.shape_cast %213 : vector<16x128xf32> to vector<2x8x128xf32>
    %215 = vector.extract_strided_slice %208 {offsets = [0, 256], sizes = [16, 128], strides = [1, 1]} : vector<16x384xf32> to vector<16x128xf32>
    %216 = vector.shape_cast %215 : vector<16x128xf32> to vector<2x8x128xf32>
    %217 = vector.extract_strided_slice %212 {offsets = [0, 0, 0], sizes = [2, 8, 32], strides = [1, 1, 1]} : vector<2x8x128xf32> to vector<2x8x32xf32>
    %218 = arith.truncf %217 : vector<2x8x32xf32> to vector<2x8x32xbf16>
    %219 = vector.extract_strided_slice %214 {offsets = [0, 0, 0], sizes = [2, 8, 32], strides = [1, 1, 1]} : vector<2x8x128xf32> to vector<2x8x32xf32>
    %220 = arith.truncf %219 : vector<2x8x32xf32> to vector<2x8x32xbf16>
    %221 = vector.extract_strided_slice %216 {offsets = [0, 0, 0], sizes = [2, 8, 32], strides = [1, 1, 1]} : vector<2x8x128xf32> to vector<2x8x32xf32>
    %222 = arith.truncf %221 : vector<2x8x32xf32> to vector<2x8x32xbf16>
    "tpu.trace_start"() <{level = 10 : i32, message = "bqd,bkd->bqk"}> : () -> ()
    %cst_72 = arith.constant dense<0.000000e+00> : vector<2x8x8xf32>
    %223 = tpu.matmul %218, %220, %cst_72 {dimension_numbers = #tpu.dot_dimension_numbers<[2], [2], [1], [1], [0, 0, 0, 1, 1, 1], [0], [0]>} : vector<2x8x32xbf16>, vector<2x8x32xbf16>, vector<2x8x8xf32> -> vector<2x8x8xf32>
    "tpu.trace_stop"() : () -> ()
    %224 = vector.broadcast %2 : vector<2x1x8xf32> to vector<2x8x8xf32>
    %225 = arith.addf %223, %224 : vector<2x8x8xf32>
    %cst_73 = arith.constant dense<0xFF800000> : vector<2x8xf32>
    %226 = vector.multi_reduction <maximumf>, %225, %cst_73 [2] : vector<2x8x8xf32> to vector<2x8xf32>
    %227 = vector.shape_cast %226 : vector<2x8xf32> to vector<2x8x1xf32>
    %228 = vector.broadcast %227 : vector<2x8x1xf32> to vector<2x8x8xf32>
    %229 = arith.subf %225, %228 : vector<2x8x8xf32>
    %230 = math.exp %229 : vector<2x8x8xf32>
    %cst_74 = arith.constant dense<0.000000e+00> : vector<2x8xf32>
    %231 = vector.multi_reduction <add>, %230, %cst_74 [2] : vector<2x8x8xf32> to vector<2x8xf32>
    %232 = vector.shape_cast %231 : vector<2x8xf32> to vector<2x8x1xf32>
    %233 = tpu.reciprocal %232 {approx = true} : vector<2x8x1xf32> -> vector<2x8x1xf32>
    %234 = vector.broadcast %233 : vector<2x8x1xf32> to vector<2x8x8xf32>
    %235 = arith.mulf %230, %234 : vector<2x8x8xf32>
    %236 = arith.truncf %235 : vector<2x8x8xf32> to vector<2x8x8xbf16>
    "tpu.trace_start"() <{level = 10 : i32, message = "bqk,bkd->bqd"}> : () -> ()
    %cst_75 = arith.constant dense<0.000000e+00> : vector<2x8x32xf32>
    %237 = tpu.matmul %236, %222, %cst_75 {dimension_numbers = #tpu.dot_dimension_numbers<[2], [1], [1], [2], [0, 0, 0, 1, 1, 2], [0], [0]>} : vector<2x8x8xbf16>, vector<2x8x32xbf16>, vector<2x8x32xf32> -> vector<2x8x32xf32>
    "tpu.trace_stop"() : () -> ()
    %238 = vector.shape_cast %237 : vector<2x8x32xf32> to vector<16x32xf32>
    %239 = vector.extract_strided_slice %212 {offsets = [0, 0, 32], sizes = [2, 8, 32], strides = [1, 1, 1]} : vector<2x8x128xf32> to vector<2x8x32xf32>
    %240 = arith.truncf %239 : vector<2x8x32xf32> to vector<2x8x32xbf16>
    %241 = vector.extract_strided_slice %214 {offsets = [0, 0, 32], sizes = [2, 8, 32], strides = [1, 1, 1]} : vector<2x8x128xf32> to vector<2x8x32xf32>
    %242 = arith.truncf %241 : vector<2x8x32xf32> to vector<2x8x32xbf16>
    %243 = vector.extract_strided_slice %216 {offsets = [0, 0, 32], sizes = [2, 8, 32], strides = [1, 1, 1]} : vector<2x8x128xf32> to vector<2x8x32xf32>
    %244 = arith.truncf %243 : vector<2x8x32xf32> to vector<2x8x32xbf16>
    "tpu.trace_start"() <{level = 10 : i32, message = "bqd,bkd->bqk"}> : () -> ()
    %cst_76 = arith.constant dense<0.000000e+00> : vector<2x8x8xf32>
    %245 = tpu.matmul %240, %242, %cst_76 {dimension_numbers = #tpu.dot_dimension_numbers<[2], [2], [1], [1], [0, 0, 0, 1, 1, 1], [0], [0]>} : vector<2x8x32xbf16>, vector<2x8x32xbf16>, vector<2x8x8xf32> -> vector<2x8x8xf32>
    "tpu.trace_stop"() : () -> ()
    %246 = vector.broadcast %2 : vector<2x1x8xf32> to vector<2x8x8xf32>
    %247 = arith.addf %245, %246 : vector<2x8x8xf32>
    %cst_77 = arith.constant dense<0xFF800000> : vector<2x8xf32>
    %248 = vector.multi_reduction <maximumf>, %247, %cst_77 [2] : vector<2x8x8xf32> to vector<2x8xf32>
    %249 = vector.shape_cast %248 : vector<2x8xf32> to vector<2x8x1xf32>
    %250 = vector.broadcast %249 : vector<2x8x1xf32> to vector<2x8x8xf32>
    %251 = arith.subf %247, %250 : vector<2x8x8xf32>
    %252 = math.exp %251 : vector<2x8x8xf32>
    %cst_78 = arith.constant dense<0.000000e+00> : vector<2x8xf32>
    %253 = vector.multi_reduction <add>, %252, %cst_78 [2] : vector<2x8x8xf32> to vector<2x8xf32>
    %254 = vector.shape_cast %253 : vector<2x8xf32> to vector<2x8x1xf32>
    %255 = tpu.reciprocal %254 {approx = true} : vector<2x8x1xf32> -> vector<2x8x1xf32>
    %256 = vector.broadcast %255 : vector<2x8x1xf32> to vector<2x8x8xf32>
    %257 = arith.mulf %252, %256 : vector<2x8x8xf32>
    %258 = arith.truncf %257 : vector<2x8x8xf32> to vector<2x8x8xbf16>
    "tpu.trace_start"() <{level = 10 : i32, message = "bqk,bkd->bqd"}> : () -> ()
    %cst_79 = arith.constant dense<0.000000e+00> : vector<2x8x32xf32>
    %259 = tpu.matmul %258, %244, %cst_79 {dimension_numbers = #tpu.dot_dimension_numbers<[2], [1], [1], [2], [0, 0, 0, 1, 1, 2], [0], [0]>} : vector<2x8x8xbf16>, vector<2x8x32xbf16>, vector<2x8x32xf32> -> vector<2x8x32xf32>
    "tpu.trace_stop"() : () -> ()
    %260 = vector.shape_cast %259 : vector<2x8x32xf32> to vector<16x32xf32>
    %261 = vector.extract_strided_slice %212 {offsets = [0, 0, 64], sizes = [2, 8, 32], strides = [1, 1, 1]} : vector<2x8x128xf32> to vector<2x8x32xf32>
    %262 = arith.truncf %261 : vector<2x8x32xf32> to vector<2x8x32xbf16>
    %263 = vector.extract_strided_slice %214 {offsets = [0, 0, 64], sizes = [2, 8, 32], strides = [1, 1, 1]} : vector<2x8x128xf32> to vector<2x8x32xf32>
    %264 = arith.truncf %263 : vector<2x8x32xf32> to vector<2x8x32xbf16>
    %265 = vector.extract_strided_slice %216 {offsets = [0, 0, 64], sizes = [2, 8, 32], strides = [1, 1, 1]} : vector<2x8x128xf32> to vector<2x8x32xf32>
    %266 = arith.truncf %265 : vector<2x8x32xf32> to vector<2x8x32xbf16>
    "tpu.trace_start"() <{level = 10 : i32, message = "bqd,bkd->bqk"}> : () -> ()
    %cst_80 = arith.constant dense<0.000000e+00> : vector<2x8x8xf32>
    %267 = tpu.matmul %262, %264, %cst_80 {dimension_numbers = #tpu.dot_dimension_numbers<[2], [2], [1], [1], [0, 0, 0, 1, 1, 1], [0], [0]>} : vector<2x8x32xbf16>, vector<2x8x32xbf16>, vector<2x8x8xf32> -> vector<2x8x8xf32>
    "tpu.trace_stop"() : () -> ()
    %268 = vector.broadcast %2 : vector<2x1x8xf32> to vector<2x8x8xf32>
    %269 = arith.addf %267, %268 : vector<2x8x8xf32>
    %cst_81 = arith.constant dense<0xFF800000> : vector<2x8xf32>
    %270 = vector.multi_reduction <maximumf>, %269, %cst_81 [2] : vector<2x8x8xf32> to vector<2x8xf32>
    %271 = vector.shape_cast %270 : vector<2x8xf32> to vector<2x8x1xf32>
    %272 = vector.broadcast %271 : vector<2x8x1xf32> to vector<2x8x8xf32>
    %273 = arith.subf %269, %272 : vector<2x8x8xf32>
    %274 = math.exp %273 : vector<2x8x8xf32>
    %cst_82 = arith.constant dense<0.000000e+00> : vector<2x8xf32>
    %275 = vector.multi_reduction <add>, %274, %cst_82 [2] : vector<2x8x8xf32> to vector<2x8xf32>
    %276 = vector.shape_cast %275 : vector<2x8xf32> to vector<2x8x1xf32>
    %277 = tpu.reciprocal %276 {approx = true} : vector<2x8x1xf32> -> vector<2x8x1xf32>
    %278 = vector.broadcast %277 : vector<2x8x1xf32> to vector<2x8x8xf32>
    %279 = arith.mulf %274, %278 : vector<2x8x8xf32>
    %280 = arith.truncf %279 : vector<2x8x8xf32> to vector<2x8x8xbf16>
    "tpu.trace_start"() <{level = 10 : i32, message = "bqk,bkd->bqd"}> : () -> ()
    %cst_83 = arith.constant dense<0.000000e+00> : vector<2x8x32xf32>
    %281 = tpu.matmul %280, %266, %cst_83 {dimension_numbers = #tpu.dot_dimension_numbers<[2], [1], [1], [2], [0, 0, 0, 1, 1, 2], [0], [0]>} : vector<2x8x8xbf16>, vector<2x8x32xbf16>, vector<2x8x32xf32> -> vector<2x8x32xf32>
    "tpu.trace_stop"() : () -> ()
    %282 = vector.shape_cast %281 : vector<2x8x32xf32> to vector<16x32xf32>
    %283 = vector.extract_strided_slice %212 {offsets = [0, 0, 96], sizes = [2, 8, 32], strides = [1, 1, 1]} : vector<2x8x128xf32> to vector<2x8x32xf32>
    %284 = arith.truncf %283 : vector<2x8x32xf32> to vector<2x8x32xbf16>
    %285 = vector.extract_strided_slice %214 {offsets = [0, 0, 96], sizes = [2, 8, 32], strides = [1, 1, 1]} : vector<2x8x128xf32> to vector<2x8x32xf32>
    %286 = arith.truncf %285 : vector<2x8x32xf32> to vector<2x8x32xbf16>
    %287 = vector.extract_strided_slice %216 {offsets = [0, 0, 96], sizes = [2, 8, 32], strides = [1, 1, 1]} : vector<2x8x128xf32> to vector<2x8x32xf32>
    %288 = arith.truncf %287 : vector<2x8x32xf32> to vector<2x8x32xbf16>
    "tpu.trace_start"() <{level = 10 : i32, message = "bqd,bkd->bqk"}> : () -> ()
    %cst_84 = arith.constant dense<0.000000e+00> : vector<2x8x8xf32>
    %289 = tpu.matmul %284, %286, %cst_84 {dimension_numbers = #tpu.dot_dimension_numbers<[2], [2], [1], [1], [0, 0, 0, 1, 1, 1], [0], [0]>} : vector<2x8x32xbf16>, vector<2x8x32xbf16>, vector<2x8x8xf32> -> vector<2x8x8xf32>
    "tpu.trace_stop"() : () -> ()
    %290 = vector.broadcast %2 : vector<2x1x8xf32> to vector<2x8x8xf32>
    %291 = arith.addf %289, %290 : vector<2x8x8xf32>
    %cst_85 = arith.constant dense<0xFF800000> : vector<2x8xf32>
    %292 = vector.multi_reduction <maximumf>, %291, %cst_85 [2] : vector<2x8x8xf32> to vector<2x8xf32>
    %293 = vector.shape_cast %292 : vector<2x8xf32> to vector<2x8x1xf32>
    %294 = vector.broadcast %293 : vector<2x8x1xf32> to vector<2x8x8xf32>
    %295 = arith.subf %291, %294 : vector<2x8x8xf32>
    %296 = math.exp %295 : vector<2x8x8xf32>
    %cst_86 = arith.constant dense<0.000000e+00> : vector<2x8xf32>
    %297 = vector.multi_reduction <add>, %296, %cst_86 [2] : vector<2x8x8xf32> to vector<2x8xf32>
    %298 = vector.shape_cast %297 : vector<2x8xf32> to vector<2x8x1xf32>
    %299 = tpu.reciprocal %298 {approx = true} : vector<2x8x1xf32> -> vector<2x8x1xf32>
    %300 = vector.broadcast %299 : vector<2x8x1xf32> to vector<2x8x8xf32>
    %301 = arith.mulf %296, %300 : vector<2x8x8xf32>
    %302 = arith.truncf %301 : vector<2x8x8xf32> to vector<2x8x8xbf16>
    "tpu.trace_start"() <{level = 10 : i32, message = "bqk,bkd->bqd"}> : () -> ()
    %cst_87 = arith.constant dense<0.000000e+00> : vector<2x8x32xf32>
    %303 = tpu.matmul %302, %288, %cst_87 {dimension_numbers = #tpu.dot_dimension_numbers<[2], [1], [1], [2], [0, 0, 0, 1, 1, 2], [0], [0]>} : vector<2x8x8xbf16>, vector<2x8x32xbf16>, vector<2x8x32xf32> -> vector<2x8x32xf32>
    "tpu.trace_stop"() : () -> ()
    %304 = vector.shape_cast %303 : vector<2x8x32xf32> to vector<16x32xf32>
    %305 = tpu.concatenate %238, %260, %282, %304 in 1 : vector<16x32xf32>, vector<16x32xf32>, vector<16x32xf32>, vector<16x32xf32> -> vector<16x128xf32>
    %306 = arith.truncf %305 : vector<16x128xf32> to vector<16x128xbf16>
    %cst_88 = arith.constant dense<0.000000e+00> : vector<16x128xf32>
    %307 = tpu.matmul %306, %10, %cst_88 {dimension_numbers = #tpu.dot_dimension_numbers<[1], [0], [0], [1], [0, 0, 1, 1], [], []>} : vector<16x128xbf16>, vector<128x128xbf16>, vector<16x128xf32> -> vector<16x128xf32>
    %308 = vector.broadcast %14 : vector<1x128xf32> to vector<16x128xf32>
    %309 = arith.addf %307, %308 : vector<16x128xf32>
    %310 = arith.addf %182, %309 : vector<16x128xf32>
    %cst_89 = arith.constant dense<0.000000e+00> : vector<16xf32>
    %311 = vector.multi_reduction <add>, %310, %cst_89 [1] : vector<16x128xf32> to vector<16xf32>
    %312 = vector.shape_cast %311 : vector<16xf32> to vector<16x1xf32>
    %cst_90 = arith.constant 1.280000e+02 : f32
    %313 = vector.broadcast %cst_90 : f32 to vector<16x1xf32>
    %314 = arith.divf %312, %313 : vector<16x1xf32>
    %315 = vector.broadcast %314 : vector<16x1xf32> to vector<16x128xf32>
    %316 = arith.subf %310, %315 : vector<16x128xf32>
    %317 = arith.mulf %316, %316 : vector<16x128xf32>
    %cst_91 = arith.constant dense<0.000000e+00> : vector<16xf32>
    %318 = vector.multi_reduction <add>, %317, %cst_91 [1] : vector<16x128xf32> to vector<16xf32>
    %319 = vector.shape_cast %318 : vector<16xf32> to vector<16x1xf32>
    %cst_92 = arith.constant 1.280000e+02 : f32
    %320 = vector.broadcast %cst_92 : f32 to vector<16x1xf32>
    %321 = arith.divf %319, %320 : vector<16x1xf32>
    %322 = vector.broadcast %314 : vector<16x1xf32> to vector<16x128xf32>
    %323 = arith.subf %310, %322 : vector<16x128xf32>
    %cst_93 = arith.constant 9.99999974E-6 : f32
    %324 = vector.broadcast %cst_93 : f32 to vector<16x1xf32>
    %325 = arith.addf %321, %324 : vector<16x1xf32>
    %326 = math.rsqrt %325 : vector<16x1xf32>
    %327 = vector.broadcast %326 : vector<16x1xf32> to vector<16x128xf32>
    %328 = arith.mulf %323, %327 : vector<16x128xf32>
    %329 = vector.broadcast %5 : vector<1x128xf32> to vector<16x128xf32>
    %330 = arith.mulf %328, %329 : vector<16x128xf32>
    %331 = vector.broadcast %6 : vector<1x128xf32> to vector<16x128xf32>
    %332 = arith.addf %330, %331 : vector<16x128xf32>
    %333 = arith.truncf %332 : vector<16x128xf32> to vector<16x128xbf16>
    %cst_94 = arith.constant dense<0.000000e+00> : vector<16x512xf32>
    %334 = tpu.matmul %333, %11, %cst_94 {dimension_numbers = #tpu.dot_dimension_numbers<[1], [0], [0], [1], [0, 0, 1, 1], [], []>} : vector<16x128xbf16>, vector<128x512xbf16>, vector<16x512xf32> -> vector<16x512xf32>
    %335 = vector.broadcast %15 : vector<1x512xf32> to vector<16x512xf32>
    %336 = arith.addf %334, %335 : vector<16x512xf32>
    %cst_95 = arith.constant -1.702000e+00 : f32
    %337 = vector.broadcast %cst_95 : f32 to vector<16x512xf32>
    %338 = arith.mulf %337, %336 : vector<16x512xf32>
    %339 = math.exp %338 : vector<16x512xf32>
    %cst_96 = arith.constant 1.000000e+00 : f32
    %340 = vector.broadcast %cst_96 : f32 to vector<16x512xf32>
    %341 = arith.addf %340, %339 : vector<16x512xf32>
    %342 = tpu.reciprocal %341 {approx = true} : vector<16x512xf32> -> vector<16x512xf32>
    %343 = arith.mulf %336, %342 : vector<16x512xf32>
    %344 = arith.truncf %343 : vector<16x512xf32> to vector<16x512xbf16>
    %cst_97 = arith.constant dense<0.000000e+00> : vector<16x128xf32>
    %345 = tpu.matmul %344, %12, %cst_97 {dimension_numbers = #tpu.dot_dimension_numbers<[1], [0], [0], [1], [0, 0, 1, 1], [], []>} : vector<16x512xbf16>, vector<512x128xbf16>, vector<16x128xf32> -> vector<16x128xf32>
    %346 = vector.broadcast %16 : vector<1x128xf32> to vector<16x128xf32>
    %347 = arith.addf %345, %346 : vector<16x128xf32>
    %348 = arith.addf %310, %347 : vector<16x128xf32>
    %349 = vector.broadcast %1 : vector<16x1xf32> to vector<16x128xf32>
    %350 = arith.mulf %348, %349 : vector<16x128xf32>
    %cst_98 = arith.constant dense<0.000000e+00> : vector<16xf32>
    %351 = vector.multi_reduction <add>, %350, %cst_98 [1] : vector<16x128xf32> to vector<16xf32>
    %352 = vector.shape_cast %351 : vector<16xf32> to vector<16x1xf32>
    %cst_99 = arith.constant 1.280000e+02 : f32
    %353 = vector.broadcast %cst_99 : f32 to vector<16x1xf32>
    %354 = arith.divf %352, %353 : vector<16x1xf32>
    %355 = vector.broadcast %354 : vector<16x1xf32> to vector<16x128xf32>
    %356 = arith.subf %350, %355 : vector<16x128xf32>
    %357 = arith.mulf %356, %356 : vector<16x128xf32>
    %cst_100 = arith.constant dense<0.000000e+00> : vector<16xf32>
    %358 = vector.multi_reduction <add>, %357, %cst_100 [1] : vector<16x128xf32> to vector<16xf32>
    %359 = vector.shape_cast %358 : vector<16xf32> to vector<16x1xf32>
    %cst_101 = arith.constant 1.280000e+02 : f32
    %360 = vector.broadcast %cst_101 : f32 to vector<16x1xf32>
    %361 = arith.divf %359, %360 : vector<16x1xf32>
    %362 = vector.broadcast %354 : vector<16x1xf32> to vector<16x128xf32>
    %363 = arith.subf %350, %362 : vector<16x128xf32>
    %cst_102 = arith.constant 9.99999974E-6 : f32
    %364 = vector.broadcast %cst_102 : f32 to vector<16x1xf32>
    %365 = arith.addf %361, %364 : vector<16x1xf32>
    %366 = math.rsqrt %365 : vector<16x1xf32>
    %367 = vector.broadcast %366 : vector<16x1xf32> to vector<16x128xf32>
    %368 = arith.mulf %363, %367 : vector<16x128xf32>
    %369 = vector.broadcast %7 : vector<1x128xf32> to vector<16x128xf32>
    %370 = arith.mulf %368, %369 : vector<16x128xf32>
    %371 = vector.broadcast %8 : vector<1x128xf32> to vector<16x128xf32>
    %372 = arith.addf %370, %371 : vector<16x128xf32>
    %c0_103 = arith.constant 0 : index
    %c0_104 = arith.constant 0 : index
    %373 = vector.load %arg18[%c0_103, %c0_104] : memref<16x128xf32, #tpu.memory_space<vmem>>, vector<16x128xf32>
    tpu.vector_store %arg18[%c0_103, %c0_104], %372 {strides = array<i32>} : memref<16x128xf32, #tpu.memory_space<vmem>>, vector<16x128xf32>,
    return
  }
  func.func @transform_0(%arg0: i32) -> (i32, i32) {
    %c0_i32 = arith.constant 0 : i32
    %c0_i32_0 = arith.constant 0 : i32
    return %arg0, %c0_i32 : i32, i32
  }
  func.func @transform_1(%arg0: i32) -> (i32, i32, i32) {
    %c0_i32 = arith.constant 0 : i32
    %c0_i32_0 = arith.constant 0 : i32
    %c0_i32_1 = arith.constant 0 : i32
    return %arg0, %c0_i32, %c0_i32_0 : i32, i32, i32
  }
  func.func @transform_2(%arg0: i32) -> (i32, i32) {
    %c0_i32 = arith.constant 0 : i32
    %c0_i32_0 = arith.constant 0 : i32
    return %arg0, %c0_i32 : i32, i32
  }
  func.func @transform_3(%arg0: i32) -> (i32, i32) {
    %c0_i32 = arith.constant 0 : i32
    %c0_i32_0 = arith.constant 0 : i32
    %c0_i32_1 = arith.constant 0 : i32
    return %c0_i32, %c0_i32_0 : i32, i32
  }
  func.func @transform_4(%arg0: i32) -> (i32, i32) {
    %c0_i32 = arith.constant 0 : i32
    %c0_i32_0 = arith.constant 0 : i32
    %c0_i32_1 = arith.constant 0 : i32
    return %c0_i32, %c0_i32_0 : i32, i32
  }
  func.func @transform_5(%arg0: i32) -> (i32, i32) {
    %c0_i32 = arith.constant 0 : i32
    %c0_i32_0 = arith.constant 0 : i32
    %c0_i32_1 = arith.constant 0 : i32
    return %c0_i32, %c0_i32_0 : i32, i32
  }
  func.func @transform_6(%arg0: i32) -> (i32, i32) {
    %c0_i32 = arith.constant 0 : i32
    %c0_i32_0 = arith.constant 0 : i32
    %c0_i32_1 = arith.constant 0 : i32
    return %c0_i32, %c0_i32_0 : i32, i32
  }
  func.func @transform_7(%arg0: i32) -> (i32, i32) {
    %c0_i32 = arith.constant 0 : i32
    %c0_i32_0 = arith.constant 0 : i32
    %c0_i32_1 = arith.constant 0 : i32
    return %c0_i32, %c0_i32_0 : i32, i32
  }
  func.func @transform_8(%arg0: i32) -> (i32, i32) {
    %c0_i32 = arith.constant 0 : i32
    %c0_i32_0 = arith.constant 0 : i32
    %c0_i32_1 = arith.constant 0 : i32
    return %c0_i32, %c0_i32_0 : i32, i32
  }
  func.func @transform_9(%arg0: i32) -> (i32, i32) {
    %c0_i32 = arith.constant 0 : i32
    %c0_i32_0 = arith.constant 0 : i32
    %c0_i32_1 = arith.constant 0 : i32
    return %c0_i32, %c0_i32_0 : i32, i32
  }
  func.func @transform_10(%arg0: i32) -> (i32, i32) {
    %c0_i32 = arith.constant 0 : i32
    %c0_i32_0 = arith.constant 0 : i32
    %c0_i32_1 = arith.constant 0 : i32
    return %c0_i32, %c0_i32_0 : i32, i32
  }
  func.func @transform_11(%arg0: i32) -> (i32, i32) {
    %c0_i32 = arith.constant 0 : i32
    %c0_i32_0 = arith.constant 0 : i32
    %c0_i32_1 = arith.constant 0 : i32
    return %c0_i32, %c0_i32_0 : i32, i32
  }
  func.func @transform_12(%arg0: i32) -> (i32, i32) {
    %c0_i32 = arith.constant 0 : i32
    %c0_i32_0 = arith.constant 0 : i32
    %c0_i32_1 = arith.constant 0 : i32
    return %c0_i32, %c0_i32_0 : i32, i32
  }
  func.func @transform_13(%arg0: i32) -> (i32, i32) {
    %c0_i32 = arith.constant 0 : i32
    %c0_i32_0 = arith.constant 0 : i32
    %c0_i32_1 = arith.constant 0 : i32
    return %c0_i32, %c0_i32_0 : i32, i32
  }
  func.func @transform_14(%arg0: i32) -> (i32, i32) {
    %c0_i32 = arith.constant 0 : i32
    %c0_i32_0 = arith.constant 0 : i32
    %c0_i32_1 = arith.constant 0 : i32
    return %c0_i32, %c0_i32_0 : i32, i32
  }
  func.func @transform_15(%arg0: i32) -> (i32, i32) {
    %c0_i32 = arith.constant 0 : i32
    %c0_i32_0 = arith.constant 0 : i32
    %c0_i32_1 = arith.constant 0 : i32
    return %c0_i32, %c0_i32_0 : i32, i32
  }
  func.func @transform_16(%arg0: i32) -> (i32, i32) {
    %c0_i32 = arith.constant 0 : i32
    %c0_i32_0 = arith.constant 0 : i32
    %c0_i32_1 = arith.constant 0 : i32
    return %c0_i32, %c0_i32_0 : i32, i32
  }
  func.func @transform_17(%arg0: i32) -> (i32, i32) {
    %c0_i32 = arith.constant 0 : i32
    %c0_i32_0 = arith.constant 0 : i32
    return %arg0, %c0_i32 : i32, i32
  }
}

</mosaic_0001>

<llo_original>
// kernel: cluster_transformer_forward.1
$region0: #{cluster_transformer_forward.1}
  #allocation0 [shape = 'u32[]', space=smem, size = 0x4, offset = 0x4, fixed_abs, tag = 'smem constant byte address 0x4 - core index']
  #allocation1 [shape = 'u32[144,128]{1,0:T(1,128)}', space=vmem, size = 0x12000, scoped, tag = 'internal scratch']
  %s0 = inlined_call_operand.vmem [shape: f32[32,1], index: 0, kind: input, shape index: {}]
  %s1 = inlined_call_operand.vmem [shape: f32[4,1,8], index: 1, kind: input, shape index: {}]
  %s2 = inlined_call_operand.vmem [shape: f32[32,128], index: 2, kind: input, shape index: {}]
  %s3 = inlined_call_operand.vmem [shape: f32[1,128], index: 3, kind: input, shape index: {}]
  %s4 = inlined_call_operand.vmem [shape: f32[1,128], index: 4, kind: input, shape index: {}]
  %s5 = inlined_call_operand.hbm [shape: bf16[128,384], index: 5, kind: input, shape index: {}]
  %s6 = inlined_call_operand.hbm [shape: f32[1,384], index: 6, kind: input, shape index: {}]
  %s7 = inlined_call_operand.vmem [shape: bf16[128,128], index: 7, kind: input, shape index: {}]
  %s8 = inlined_call_operand.hbm [shape: f32[1,128], index: 8, kind: input, shape index: {}]
  %s9 = inlined_call_operand.hbm [shape: f32[1,128], index: 9, kind: input, shape index: {}]
  %s10 = inlined_call_operand.hbm [shape: f32[1,128], index: 10, kind: input, shape index: {}]
  %s11 = inlined_call_operand.hbm [shape: bf16[128,512], index: 11, kind: input, shape index: {}]
  %s12 = inlined_call_operand.vmem [shape: f32[1,512], index: 12, kind: input, shape index: {}]
  %s13 = inlined_call_operand.hbm [shape: bf16[512,128], index: 13, kind: input, shape index: {}]
  %s14 = inlined_call_operand.hbm [shape: f32[1,128], index: 14, kind: input, shape index: {}]
  %s15 = inlined_call_operand.hbm [shape: f32[1,128], index: 15, kind: input, shape index: {}]
  %s16 = inlined_call_operand.hbm [shape: f32[1,128], index: 16, kind: input, shape index: {}]
  %s17 = inlined_call_operand.hbm [shape: f32[32,128], index: 17, kind: output, shape index: {}]
  %s18 = sld [smem:[#allocation0]]
  $region141: #{cluster_transformer_forward.1} parent=0
    _
  %s20 = ssub.s32 1, %s18
  %s21 = scalar_select 0, %s20, %s18
  $region1: #{cluster_transformer_forward.1} parent=0
    #allocation2 [shape = 'u8[98304]{0}', space=vmem, size = 0x18000, scoped, tag = 'input window, operand 5, single buffered']
    #allocation3 [shape = 's32[2]{0}', space=sflag, size = 0x8, scoped, tag = 'scoped memory for cluster_transformer_forward.1']
    #allocation4 [shape = 's32[2]{0}', space=sflag, size = 0x8, scoped, tag = 'scoped memory for cluster_transformer_forward.1']
    #allocation5 [shape = 'u8[1536]{0}', space=vmem, size = 0x800, scoped, tag = 'input window, operand 6, single buffered']
    #allocation6 [shape = 's32[1]{0}', space=sflag, size = 0x4, scoped, tag = 'scoped memory for cluster_transformer_forward.1']
    #allocation7 [shape = 'u8[512]{0}', space=vmem, size = 0x400, scoped, tag = 'input window, operand 8, single buffered']
    #allocation8 [shape = 'u8[512]{0}', space=vmem, size = 0x400, scoped, tag = 'input window, operand 9, single buffered']
    #allocation9 [shape = 's32[1]{0}', space=sflag, size = 0x4, scoped, tag = 'scoped memory for cluster_transformer_forward.1']
    #allocation10 [shape = 'u8[512]{0}', space=vmem, size = 0x400, scoped, tag = 'input window, operand 10, single buffered']
    #allocation11 [shape = 'u8[131072]{0}', space=vmem, size = 0x20000, scoped, tag = 'input window, operand 11, single buffered']
    #allocation12 [shape = 's32[1]{0}', space=sflag, size = 0x4, scoped, tag = 'scoped memory for cluster_transformer_forward.1']
    #allocation13 [shape = 'u8[131072]{0}', space=vmem, size = 0x20000, scoped, tag = 'input window, operand 13, single buffered']
    #allocation14 [shape = 'u8[512]{0}', space=vmem, size = 0x400, scoped, tag = 'input window, operand 14, single buffered']
    #allocation15 [shape = 's32[1]{0}', space=sflag, size = 0x4, scoped, tag = 'scoped memory for cluster_transformer_forward.1']
    #allocation16 [shape = 'u8[512]{0}', space=vmem, size = 0x400, scoped, tag = 'input window, operand 15, single buffered']
    #allocation17 [shape = 'u8[512]{0}', space=vmem, size = 0x400, scoped, tag = 'input window, operand 16, single buffered']
    #allocation18 [shape = 's32[1]{0}', space=sflag, size = 0x4, scoped, tag = 'scoped memory for cluster_transformer_forward.1']
    #allocation19 [shape = 'u8[16384]{0}', space=vmem, size = 0x4000, scoped, tag = 'output window, operand 0']
    %22 = vsyncpa [#allocation3], 0
    %23 = vsyncpa [#allocation6], 0
    %24 = vsyncpa [#allocation9], 0
    %25 = vsyncpa [#allocation12], 0
    %26 = vsyncpa [#allocation15], 0
    %27 = vsyncpa [#allocation18], 0
    %28 = vsyncpa [#allocation4], 0
    %s29 = scalar_lea.sflag [#allocation4], 1
    %30 = vsyncpa %s29, 0
    loop: start=0, step=1, limit=4
    $region2: #{cluster_transformer_forward.1} parent=1 // loop_pre_header
      _
    $region3: #{cluster_transformer_forward.1} parent=1 // loop_header
      %s32 = sphi 0, %s36
      %p33 = scmp.ge.s32.totalorder %s32, 4
      %s42 = sphi 0, %s44
      %s45 = sphi 0, %s42
      %s46 = sphi 0, %s45
      %s62 = sphi 0, %s46
      %s68 = sphi 0, %s70
      %s71 = sphi 0, %s68
      %s72 = sphi 0, %s71
      %s88 = sphi 0, %s72
      %s94 = sphi 0, %s96
      %s97 = sphi 0, %s94
      %s98 = sphi 0, %s97
      %s114 = sphi 0, %s98
      %s118 = sphi 0, %s118
      %s120 = sphi 0, %s118
      %s121 = sphi 0, %s120
      %s135 = sphi 0, %s121
      %s139 = sphi 0, %s139
      %s141 = sphi 0, %s139
      %s142 = sphi 0, %s141
      %s156 = sphi 0, %s142
      %s160 = sphi 0, %s160
      %s162 = sphi 0, %s160
      %s163 = sphi 0, %s162
      %s177 = sphi 0, %s163
      %s181 = sphi 0, %s181
      %s183 = sphi 0, %s181
      %s184 = sphi 0, %s183
      %s198 = sphi 0, %s184
      %s202 = sphi 0, %s202
      %s204 = sphi 0, %s202
      %s205 = sphi 0, %s204
      %s219 = sphi 0, %s205
      %s223 = sphi 0, %s223
      %s225 = sphi 0, %s223
      %s226 = sphi 0, %s225
      %s240 = sphi 0, %s226
      %s244 = sphi 0, %s244
      %s246 = sphi 0, %s244
      %s247 = sphi 0, %s246
      %s261 = sphi 0, %s247
      %s265 = sphi 0, %s265
      %s267 = sphi 0, %s265
      %s268 = sphi 0, %s267
      %s282 = sphi 0, %s268
      %s286 = sphi 0, %s286
      %s288 = sphi 0, %s286
      %s289 = sphi 0, %s288
      %s303 = sphi 0, %s289
      %s307 = sphi 0, %s307
      %s309 = sphi 0, %s307
      %s310 = sphi 0, %s309
      %s324 = sphi 0, %s310
      %s328 = sphi 0, %s328
      %s330 = sphi 0, %s328
      %s331 = sphi 0, %s330
      %s345 = sphi 0, %s331
      %s349 = sphi 0, %s349
      %s351 = sphi 0, %s349
      %s352 = sphi 0, %s351
      %s366 = sphi 0, %s352
      %s370 = sphi 0, %s370
      %s372 = sphi 0, %s370
      %s373 = sphi 0, %s372
      %s387 = sphi 0, %s373
      %s391 = sphi 0, %s391
      %s393 = sphi 0, %s391
      %s394 = sphi 0, %s393
      %s408 = sphi 0, %s394
      %s414 = sphi 0, %s416
      %s417 = sphi 0, %s414
      %s418 = sphi 0, %s417
      %s434 = sphi 0, %s418
    $region4: #{cluster_transformer_forward.1} parent=1 // loop_header_branch
      %35 = sbr.rel (%p33) target = $region8
    $region5: #{cluster_transformer_forward.1} parent=1 // loop_body
      %s37 = ssub.s32 %s32, 1
      %s38 = ssub.s32 %s32, 2
      %s39 = sadd.s32 %s32, 1
      %s40 = ssub.s32 %s32, %s39
      %p41 = scmp.eq.s32.totalorder %s40, 0
      %s43 = sadd.s32 %s42, 1
      %s44 = scalar_select %p41, %s42, %s43
      %p47 = pneg %p41
      %p48 = scmp.eq.s32.totalorder %s32, 1
      %p49 = por %p47, %p48
      %p50 = scmp.ne.s32.totalorder %s42, %s45
      %p51 = scmp.eq.s32.totalorder %s32, 0
      %p52 = por %p50, %p51
      %p53 = scmp.ne.s32.totalorder %s42, %s45
      %p54 = scmp.eq.s32.totalorder %s37, 1
      %p55 = por %p53, %p54
      %p56 = scmp.ne.s32.totalorder %s45, %s46
      %p57 = scmp.eq.s32.totalorder %s37, 0
      %p58 = por %p56, %p57
      %p59 = scmp.ne.s32.totalorder %s45, %s46
      %p60 = scmp.eq.s32.totalorder %s38, 1
      %p61 = por %p59, %p60
      %p63 = scmp.ne.s32.totalorder %s46, %s62
      %p64 = scmp.eq.s32.totalorder %s38, 0
      %p65 = por %p63, %p64
      %s66 = ssub.s32 %s32, %s39
      %p67 = scmp.eq.s32.totalorder %s66, 0
      %s69 = sadd.s32 %s68, 1
      %s70 = scalar_select %p67, %s68, %s69
      %p73 = pneg %p67
      %p74 = scmp.eq.s32.totalorder %s32, 1
      %p75 = por %p73, %p74
      %p76 = scmp.ne.s32.totalorder %s68, %s71
      %p77 = scmp.eq.s32.totalorder %s32, 0
      %p78 = por %p76, %p77
      %p79 = scmp.ne.s32.totalorder %s68, %s71
      %p80 = scmp.eq.s32.totalorder %s37, 1
      %p81 = por %p79, %p80
      %p82 = scmp.ne.s32.totalorder %s71, %s72
      %p83 = scmp.eq.s32.totalorder %s37, 0
      %p84 = por %p82, %p83
      %p85 = scmp.ne.s32.totalorder %s71, %s72
      %p86 = scmp.eq.s32.totalorder %s38, 1
      %p87 = por %p85, %p86
      %p89 = scmp.ne.s32.totalorder %s72, %s88
      %p90 = scmp.eq.s32.totalorder %s38, 0
      %p91 = por %p89, %p90
      %s92 = ssub.s32 %s32, %s39
      %p93 = scmp.eq.s32.totalorder %s92, 0
      %s95 = sadd.s32 %s94, 1
      %s96 = scalar_select %p93, %s94, %s95
      %p99 = pneg %p93
      %p100 = scmp.eq.s32.totalorder %s32, 1
      %p101 = por %p99, %p100
      %p102 = scmp.ne.s32.totalorder %s94, %s97
      %p103 = scmp.eq.s32.totalorder %s32, 0
      %p104 = por %p102, %p103
      %p105 = scmp.ne.s32.totalorder %s94, %s97
      %p106 = scmp.eq.s32.totalorder %s37, 1
      %p107 = por %p105, %p106
      %p108 = scmp.ne.s32.totalorder %s97, %s98
      %p109 = scmp.eq.s32.totalorder %s37, 0
      %p110 = por %p108, %p109
      %p111 = scmp.ne.s32.totalorder %s97, %s98
      %p112 = scmp.eq.s32.totalorder %s38, 1
      %p113 = por %p111, %p112
      %p115 = scmp.ne.s32.totalorder %s98, %s114
      %p116 = scmp.eq.s32.totalorder %s38, 0
      %p117 = por %p115, %p116
      %s119 = sadd.s32 %s118, 1
      %p122 = scmp.eq.s32.totalorder %s32, 1
      %p123 = scmp.ne.s32.totalorder %s118, %s120
      %p124 = scmp.eq.s32.totalorder %s32, 0
      %p125 = por %p123, %p124
      %p126 = scmp.ne.s32.totalorder %s118, %s120
      %p127 = scmp.eq.s32.totalorder %s37, 1
      %p128 = por %p126, %p127
      %p129 = scmp.ne.s32.totalorder %s120, %s121
      %p130 = scmp.eq.s32.totalorder %s37, 0
      %p131 = por %p129, %p130
      %p132 = scmp.ne.s32.totalorder %s120, %s121
      %p133 = scmp.eq.s32.totalorder %s38, 1
      %p134 = por %p132, %p133
      %p136 = scmp.ne.s32.totalorder %s121, %s135
      %p137 = scmp.eq.s32.totalorder %s38, 0
      %p138 = por %p136, %p137
      %s140 = sadd.s32 %s139, 1
      %p143 = scmp.eq.s32.totalorder %s32, 1
      %p144 = scmp.ne.s32.totalorder %s139, %s141
      %p145 = scmp.eq.s32.totalorder %s32, 0
      %p146 = por %p144, %p145
      %p147 = scmp.ne.s32.totalorder %s139, %s141
      %p148 = scmp.eq.s32.totalorder %s37, 1
      %p149 = por %p147, %p148
      %p150 = scmp.ne.s32.totalorder %s141, %s142
      %p151 = scmp.eq.s32.totalorder %s37, 0
      %p152 = por %p150, %p151
      %p153 = scmp.ne.s32.totalorder %s141, %s142
      %p154 = scmp.eq.s32.totalorder %s38, 1
      %p155 = por %p153, %p154
      %p157 = scmp.ne.s32.totalorder %s142, %s156
      %p158 = scmp.eq.s32.totalorder %s38, 0
      %p159 = por %p157, %p158
      %s161 = sadd.s32 %s160, 1
      %p164 = scmp.eq.s32.totalorder %s32, 1
      %p165 = scmp.ne.s32.totalorder %s160, %s162
      %p166 = scmp.eq.s32.totalorder %s32, 0
      %p167 = por %p165, %p166
      %p168 = scmp.ne.s32.totalorder %s160, %s162
      %p169 = scmp.eq.s32.totalorder %s37, 1
      %p170 = por %p168, %p169
      %p171 = scmp.ne.s32.totalorder %s162, %s163
      %p172 = scmp.eq.s32.totalorder %s37, 0
      %p173 = por %p171, %p172
      %p174 = scmp.ne.s32.totalorder %s162, %s163
      %p175 = scmp.eq.s32.totalorder %s38, 1
      %p176 = por %p174, %p175
      %p178 = scmp.ne.s32.totalorder %s163, %s177
      %p179 = scmp.eq.s32.totalorder %s38, 0
      %p180 = por %p178, %p179
      %s182 = sadd.s32 %s181, 1
      %p185 = scmp.eq.s32.totalorder %s32, 1
      %p186 = scmp.ne.s32.totalorder %s181, %s183
      %p187 = scmp.eq.s32.totalorder %s32, 0
      %p188 = por %p186, %p187
      %p189 = scmp.ne.s32.totalorder %s181, %s183
      %p190 = scmp.eq.s32.totalorder %s37, 1
      %p191 = por %p189, %p190
      %p192 = scmp.ne.s32.totalorder %s183, %s184
      %p193 = scmp.eq.s32.totalorder %s37, 0
      %p194 = por %p192, %p193
      %p195 = scmp.ne.s32.totalorder %s183, %s184
      %p196 = scmp.eq.s32.totalorder %s38, 1
      %p197 = por %p195, %p196
      %p199 = scmp.ne.s32.totalorder %s184, %s198
      %p200 = scmp.eq.s32.totalorder %s38, 0
      %p201 = por %p199, %p200
      %s203 = sadd.s32 %s202, 1
      %p206 = scmp.eq.s32.totalorder %s32, 1
      %p207 = scmp.ne.s32.totalorder %s202, %s204
      %p208 = scmp.eq.s32.totalorder %s32, 0
      %p209 = por %p207, %p208
      %p210 = scmp.ne.s32.totalorder %s202, %s204
      %p211 = scmp.eq.s32.totalorder %s37, 1
      %p212 = por %p210, %p211
      %p213 = scmp.ne.s32.totalorder %s204, %s205
      %p214 = scmp.eq.s32.totalorder %s37, 0
      %p215 = por %p213, %p214
      %p216 = scmp.ne.s32.totalorder %s204, %s205
      %p217 = scmp.eq.s32.totalorder %s38, 1
      %p218 = por %p216, %p217
      %p220 = scmp.ne.s32.totalorder %s205, %s219
      %p221 = scmp.eq.s32.totalorder %s38, 0
      %p222 = por %p220, %p221
      %s224 = sadd.s32 %s223, 1
      %p227 = scmp.eq.s32.totalorder %s32, 1
      %p228 = scmp.ne.s32.totalorder %s223, %s225
      %p229 = scmp.eq.s32.totalorder %s32, 0
      %p230 = por %p228, %p229
      %p231 = scmp.ne.s32.totalorder %s223, %s225
      %p232 = scmp.eq.s32.totalorder %s37, 1
      %p233 = por %p231, %p232
      %p234 = scmp.ne.s32.totalorder %s225, %s226
      %p235 = scmp.eq.s32.totalorder %s37, 0
      %p236 = por %p234, %p235
      %p237 = scmp.ne.s32.totalorder %s225, %s226
      %p238 = scmp.eq.s32.totalorder %s38, 1
      %p239 = por %p237, %p238
      %p241 = scmp.ne.s32.totalorder %s226, %s240
      %p242 = scmp.eq.s32.totalorder %s38, 0
      %p243 = por %p241, %p242
      %s245 = sadd.s32 %s244, 1
      %p248 = scmp.eq.s32.totalorder %s32, 1
      %p249 = scmp.ne.s32.totalorder %s244, %s246
      %p250 = scmp.eq.s32.totalorder %s32, 0
      %p251 = por %p249, %p250
      %p252 = scmp.ne.s32.totalorder %s244, %s246
      %p253 = scmp.eq.s32.totalorder %s37, 1
      %p254 = por %p252, %p253
      %p255 = scmp.ne.s32.totalorder %s246, %s247
      %p256 = scmp.eq.s32.totalorder %s37, 0
      %p257 = por %p255, %p256
      %p258 = scmp.ne.s32.totalorder %s246, %s247
      %p259 = scmp.eq.s32.totalorder %s38, 1
      %p260 = por %p258, %p259
      %p262 = scmp.ne.s32.totalorder %s247, %s261
      %p263 = scmp.eq.s32.totalorder %s38, 0
      %p264 = por %p262, %p263
      %s266 = sadd.s32 %s265, 1
      %p269 = scmp.eq.s32.totalorder %s32, 1
      %p270 = scmp.ne.s32.totalorder %s265, %s267
      %p271 = scmp.eq.s32.totalorder %s32, 0
      %p272 = por %p270, %p271
      %p273 = scmp.ne.s32.totalorder %s265, %s267
      %p274 = scmp.eq.s32.totalorder %s37, 1
      %p275 = por %p273, %p274
      %p276 = scmp.ne.s32.totalorder %s267, %s268
      %p277 = scmp.eq.s32.totalorder %s37, 0
      %p278 = por %p276, %p277
      %p279 = scmp.ne.s32.totalorder %s267, %s268
      %p280 = scmp.eq.s32.totalorder %s38, 1
      %p281 = por %p279, %p280
      %p283 = scmp.ne.s32.totalorder %s268, %s282
      %p284 = scmp.eq.s32.totalorder %s38, 0
      %p285 = por %p283, %p284
      %s287 = sadd.s32 %s286, 1
      %p290 = scmp.eq.s32.totalorder %s32, 1
      %p291 = scmp.ne.s32.totalorder %s286, %s288
      %p292 = scmp.eq.s32.totalorder %s32, 0
      %p293 = por %p291, %p292
      %p294 = scmp.ne.s32.totalorder %s286, %s288
      %p295 = scmp.eq.s32.totalorder %s37, 1
      %p296 = por %p294, %p295
      %p297 = scmp.ne.s32.totalorder %s288, %s289
      %p298 = scmp.eq.s32.totalorder %s37, 0
      %p299 = por %p297, %p298
      %p300 = scmp.ne.s32.totalorder %s288, %s289
      %p301 = scmp.eq.s32.totalorder %s38, 1
      %p302 = por %p300, %p301
      %p304 = scmp.ne.s32.totalorder %s289, %s303
      %p305 = scmp.eq.s32.totalorder %s38, 0
      %p306 = por %p304, %p305
      %s308 = sadd.s32 %s307, 1
      %p311 = scmp.eq.s32.totalorder %s32, 1
      %p312 = scmp.ne.s32.totalorder %s307, %s309
      %p313 = scmp.eq.s32.totalorder %s32, 0
      %p314 = por %p312, %p313
      %p315 = scmp.ne.s32.totalorder %s307, %s309
      %p316 = scmp.eq.s32.totalorder %s37, 1
      %p317 = por %p315, %p316
      %p318 = scmp.ne.s32.totalorder %s309, %s310
      %p319 = scmp.eq.s32.totalorder %s37, 0
      %p320 = por %p318, %p319
      %p321 = scmp.ne.s32.totalorder %s309, %s310
      %p322 = scmp.eq.s32.totalorder %s38, 1
      %p323 = por %p321, %p322
      %p325 = scmp.ne.s32.totalorder %s310, %s324
      %p326 = scmp.eq.s32.totalorder %s38, 0
      %p327 = por %p325, %p326
      %s329 = sadd.s32 %s328, 1
      %p332 = scmp.eq.s32.totalorder %s32, 1
      %p333 = scmp.ne.s32.totalorder %s328, %s330
      %p334 = scmp.eq.s32.totalorder %s32, 0
      %p335 = por %p333, %p334
      %p336 = scmp.ne.s32.totalorder %s328, %s330
      %p337 = scmp.eq.s32.totalorder %s37, 1
      %p338 = por %p336, %p337
      %p339 = scmp.ne.s32.totalorder %s330, %s331
      %p340 = scmp.eq.s32.totalorder %s37, 0
      %p341 = por %p339, %p340
      %p342 = scmp.ne.s32.totalorder %s330, %s331
      %p343 = scmp.eq.s32.totalorder %s38, 1
      %p344 = por %p342, %p343
      %p346 = scmp.ne.s32.totalorder %s331, %s345
      %p347 = scmp.eq.s32.totalorder %s38, 0
      %p348 = por %p346, %p347
      %s350 = sadd.s32 %s349, 1
      %p353 = scmp.eq.s32.totalorder %s32, 1
      %p354 = scmp.ne.s32.totalorder %s349, %s351
      %p355 = scmp.eq.s32.totalorder %s32, 0
      %p356 = por %p354, %p355
      %p357 = scmp.ne.s32.totalorder %s349, %s351
      %p358 = scmp.eq.s32.totalorder %s37, 1
      %p359 = por %p357, %p358
      %p360 = scmp.ne.s32.totalorder %s351, %s352
      %p361 = scmp.eq.s32.totalorder %s37, 0
      %p362 = por %p360, %p361
      %p363 = scmp.ne.s32.totalorder %s351, %s352
      %p364 = scmp.eq.s32.totalorder %s38, 1
      %p365 = por %p363, %p364
      %p367 = scmp.ne.s32.totalorder %s352, %s366
      %p368 = scmp.eq.s32.totalorder %s38, 0
      %p369 = por %p367, %p368
      %s371 = sadd.s32 %s370, 1
      %p374 = scmp.eq.s32.totalorder %s32, 1
      %p375 = scmp.ne.s32.totalorder %s370, %s372
      %p376 = scmp.eq.s32.totalorder %s32, 0
      %p377 = por %p375, %p376
      %p378 = scmp.ne.s32.totalorder %s370, %s372
      %p379 = scmp.eq.s32.totalorder %s37, 1
      %p380 = por %p378, %p379
      %p381 = scmp.ne.s32.totalorder %s372, %s373
      %p382 = scmp.eq.s32.totalorder %s37, 0
      %p383 = por %p381, %p382
      %p384 = scmp.ne.s32.totalorder %s372, %s373
      %p385 = scmp.eq.s32.totalorder %s38, 1
      %p386 = por %p384, %p385
      %p388 = scmp.ne.s32.totalorder %s373, %s387
      %p389 = scmp.eq.s32.totalorder %s38, 0
      %p390 = por %p388, %p389
      %s392 = sadd.s32 %s391, 1
      %p395 = scmp.eq.s32.totalorder %s32, 1
      %p396 = scmp.ne.s32.totalorder %s391, %s393
      %p397 = scmp.eq.s32.totalorder %s32, 0
      %p398 = por %p396, %p397
      %p399 = scmp.ne.s32.totalorder %s391, %s393
      %p400 = scmp.eq.s32.totalorder %s37, 1
      %p401 = por %p399, %p400
      %p402 = scmp.ne.s32.totalorder %s393, %s394
      %p403 = scmp.eq.s32.totalorder %s37, 0
      %p404 = por %p402, %p403
      %p405 = scmp.ne.s32.totalorder %s393, %s394
      %p406 = scmp.eq.s32.totalorder %s38, 1
      %p407 = por %p405, %p406
      %p409 = scmp.ne.s32.totalorder %s394, %s408
      %p410 = scmp.eq.s32.totalorder %s38, 0
      %p411 = por %p409, %p410
      %s412 = ssub.s32 %s32, %s39
      %p413 = scmp.eq.s32.totalorder %s412, 0
      %s415 = sadd.s32 %s414, 1
      %s416 = scalar_select %p413, %s414, %s415
      %p419 = pneg %p413
      %p420 = scmp.eq.s32.totalorder %s32, 1
      %p421 = por %p419, %p420
      %p422 = scmp.ne.s32.totalorder %s414, %s417
      %p423 = scmp.eq.s32.totalorder %s32, 0
      %p424 = por %p422, %p423
      %p425 = scmp.ne.s32.totalorder %s414, %s417
      %p426 = scmp.eq.s32.totalorder %s37, 1
      %p427 = por %p425, %p426
      %p428 = scmp.ne.s32.totalorder %s417, %s418
      %p429 = scmp.eq.s32.totalorder %s37, 0
      %p430 = por %p428, %p429
      %p431 = scmp.ne.s32.totalorder %s417, %s418
      %p432 = scmp.eq.s32.totalorder %s38, 1
      %p433 = por %p431, %p432
      %p435 = scmp.ne.s32.totalorder %s418, %s434
      %p436 = scmp.eq.s32.totalorder %s38, 0
      %p437 = por %p435, %p436
      %p438 = scmp.le.s32.totalorder 1, %s32
      %p439 = scmp.lt.s32.totalorder %s32, 3
      %p440 = pnand %p438, %p439
      %p441 = pneg %p440
      // Predicated region
      $region9: #{cluster_transformer_forward.1} parent=5 // pred_check
        _
      $region10: #{cluster_transformer_forward.1} parent=5 // pred_check_branch
        %443 = sbr.rel (%p440) target = $region12
      $region11: #{cluster_transformer_forward.1} parent=5 // pred_region
        %s444 = ssub.s32 %s32, 1
        // Predicated region
        $region13: #{cluster_transformer_forward.1} parent=11 // pred_check
          %p445 = pneg %p131
        $region14: #{cluster_transformer_forward.1} parent=11 // pred_check_branch
          %447 = sbr.rel (%p445) target = $region16
        $region15: #{cluster_transformer_forward.1} parent=11 // pred_region
          _
        $region16: #{cluster_transformer_forward.1} parent=11 // pred_fallthru
          _
        // Predicated region
        $region17: #{cluster_transformer_forward.1} parent=11 // pred_check
          %p448 = pneg %p152
        $region18: #{cluster_transformer_forward.1} parent=11 // pred_check_branch
          %450 = sbr.rel (%p448) target = $region20
        $region19: #{cluster_transformer_forward.1} parent=11 // pred_region
          _
        $region20: #{cluster_transformer_forward.1} parent=11 // pred_fallthru
          _
        // Predicated region
        $region21: #{cluster_transformer_forward.1} parent=11 // pred_check
          %p451 = pneg %p173
        $region22: #{cluster_transformer_forward.1} parent=11 // pred_check_branch
          %453 = sbr.rel (%p451) target = $region24
        $region23: #{cluster_transformer_forward.1} parent=11 // pred_region
          %s455 = ssub.s32 3072, 3072
          %456 = vsyncadd [#allocation3], %s455
          %s457 = sshll.u32 [#allocation2], 4
          %s458 = int_to_ptr.vmem [resolvable:$true] %s457
          %463 = dma.hbm_to_vmem [thread:$0]  %s5, 3072, %s458, [#allocation3], 192, 192, 12
        $region24: #{cluster_transformer_forward.1} parent=11 // pred_fallthru
          _
        // Predicated region
        $region25: #{cluster_transformer_forward.1} parent=11 // pred_check
          %p464 = pneg %p194
        $region26: #{cluster_transformer_forward.1} parent=11 // pred_check_branch
          %466 = sbr.rel (%p464) target = $region28
        $region27: #{cluster_transformer_forward.1} parent=11 // pred_region
          %s468 = ssub.s32 48, 48
          %469 = vsyncadd [#allocation6], %s468
          %s471 = sshll.u32 [#allocation5], 4
          %s472 = int_to_ptr.vmem [resolvable:$true] %s471
          %474 = dma.hbm_to_vmem [thread:$0]  %s6, 48, %s472, [#allocation6]
        $region28: #{cluster_transformer_forward.1} parent=11 // pred_fallthru
          _
        // Predicated region
        $region29: #{cluster_transformer_forward.1} parent=11 // pred_check
          %p475 = pneg %p215
        $region30: #{cluster_transformer_forward.1} parent=11 // pred_check_branch
          %477 = sbr.rel (%p475) target = $region32
        $region31: #{cluster_transformer_forward.1} parent=11 // pred_region
          _
        $region32: #{cluster_transformer_forward.1} parent=11 // pred_fallthru
          _
        // Predicated region
        $region33: #{cluster_transformer_forward.1} parent=11 // pred_check
          %p478 = pneg %p236
        $region34: #{cluster_transformer_forward.1} parent=11 // pred_check_branch
          %480 = sbr.rel (%p478) target = $region36
        $region35: #{cluster_transformer_forward.1} parent=11 // pred_region
          %s482 = ssub.s32 16, 16
          %483 = vsyncadd [#allocation6], %s482
          %s485 = sshll.u32 [#allocation7], 4
          %s486 = int_to_ptr.vmem [resolvable:$true] %s485
          %488 = dma.hbm_to_vmem [thread:$0]  %s8, 16, %s486, [#allocation6]
        $region36: #{cluster_transformer_forward.1} parent=11 // pred_fallthru
          _
        // Predicated region
        $region37: #{cluster_transformer_forward.1} parent=11 // pred_check
          %p489 = pneg %p257
        $region38: #{cluster_transformer_forward.1} parent=11 // pred_check_branch
          %491 = sbr.rel (%p489) target = $region40
        $region39: #{cluster_transformer_forward.1} parent=11 // pred_region
          %s493 = ssub.s32 16, 16
          %494 = vsyncadd [#allocation9], %s493
          %s496 = sshll.u32 [#allocation8], 4
          %s497 = int_to_ptr.vmem [resolvable:$true] %s496
          %499 = dma.hbm_to_vmem [thread:$0]  %s9, 16, %s497, [#allocation9]
        $region40: #{cluster_transformer_forward.1} parent=11 // pred_fallthru
          _
        // Predicated region
        $region41: #{cluster_transformer_forward.1} parent=11 // pred_check
          %p500 = pneg %p278
        $region42: #{cluster_transformer_forward.1} parent=11 // pred_check_branch
          %502 = sbr.rel (%p500) target = $region44
        $region43: #{cluster_transformer_forward.1} parent=11 // pred_region
          %s504 = ssub.s32 16, 16
          %505 = vsyncadd [#allocation9], %s504
          %s507 = sshll.u32 [#allocation10], 4
          %s508 = int_to_ptr.vmem [resolvable:$true] %s507
          %510 = dma.hbm_to_vmem [thread:$0]  %s10, 16, %s508, [#allocation9]
        $region44: #{cluster_transformer_forward.1} parent=11 // pred_fallthru
          _
        // Predicated region
        $region45: #{cluster_transformer_forward.1} parent=11 // pred_check
          %p511 = pneg %p299
        $region46: #{cluster_transformer_forward.1} parent=11 // pred_check_branch
          %513 = sbr.rel (%p511) target = $region48
        $region47: #{cluster_transformer_forward.1} parent=11 // pred_region
          %s515 = ssub.s32 4096, 4096
          %516 = vsyncadd [#allocation12], %s515
          %s517 = sshll.u32 [#allocation11], 4
          %s518 = int_to_ptr.vmem [resolvable:$true] %s517
          %523 = dma.hbm_to_vmem [thread:$0]  %s11, 4096, %s518, [#allocation12], 256, 256, 16
        $region48: #{cluster_transformer_forward.1} parent=11 // pred_fallthru
          _
        // Predicated region
        $region49: #{cluster_transformer_forward.1} parent=11 // pred_check
          %p524 = pneg %p320
        $region50: #{cluster_transformer_forward.1} parent=11 // pred_check_branch
          %526 = sbr.rel (%p524) target = $region52
        $region51: #{cluster_transformer_forward.1} parent=11 // pred_region
          _
        $region52: #{cluster_transformer_forward.1} parent=11 // pred_fallthru
          _
        // Predicated region
        $region53: #{cluster_transformer_forward.1} parent=11 // pred_check
          %p527 = pneg %p341
        $region54: #{cluster_transformer_forward.1} parent=11 // pred_check_branch
          %529 = sbr.rel (%p527) target = $region56
        $region55: #{cluster_transformer_forward.1} parent=11 // pred_region
          %s531 = ssub.s32 4096, 4096
          %532 = vsyncadd [#allocation12], %s531
          %s533 = sshll.u32 [#allocation13], 4
          %s534 = int_to_ptr.vmem [resolvable:$true] %s533
          %539 = dma.hbm_to_vmem [thread:$0]  %s13, 4096, %s534, [#allocation12], 64, 64, 4
        $region56: #{cluster_transformer_forward.1} parent=11 // pred_fallthru
          _
        // Predicated region
        $region57: #{cluster_transformer_forward.1} parent=11 // pred_check
          %p540 = pneg %p362
        $region58: #{cluster_transformer_forward.1} parent=11 // pred_check_branch
          %542 = sbr.rel (%p540) target = $region60
        $region59: #{cluster_transformer_forward.1} parent=11 // pred_region
          %s544 = ssub.s32 16, 16
          %545 = vsyncadd [#allocation15], %s544
          %s547 = sshll.u32 [#allocation14], 4
          %s548 = int_to_ptr.vmem [resolvable:$true] %s547
          %550 = dma.hbm_to_vmem [thread:$0]  %s14, 16, %s548, [#allocation15]
        $region60: #{cluster_transformer_forward.1} parent=11 // pred_fallthru
          _
        // Predicated region
        $region61: #{cluster_transformer_forward.1} parent=11 // pred_check
          %p551 = pneg %p383
        $region62: #{cluster_transformer_forward.1} parent=11 // pred_check_branch
          %553 = sbr.rel (%p551) target = $region64
        $region63: #{cluster_transformer_forward.1} parent=11 // pred_region
          %s555 = ssub.s32 16, 16
          %556 = vsyncadd [#allocation15], %s555
          %s558 = sshll.u32 [#allocation16], 4
          %s559 = int_to_ptr.vmem [resolvable:$true] %s558
          %561 = dma.hbm_to_vmem [thread:$0]  %s15, 16, %s559, [#allocation15]
        $region64: #{cluster_transformer_forward.1} parent=11 // pred_fallthru
          _
        // Predicated region
        $region65: #{cluster_transformer_forward.1} parent=11 // pred_check
          %p562 = pneg %p404
        $region66: #{cluster_transformer_forward.1} parent=11 // pred_check_branch
          %564 = sbr.rel (%p562) target = $region68
        $region67: #{cluster_transformer_forward.1} parent=11 // pred_region
          %s566 = ssub.s32 16, 16
          %567 = vsyncadd [#allocation18], %s566
          %s569 = sshll.u32 [#allocation17], 4
          %s570 = int_to_ptr.vmem [resolvable:$true] %s569
          %572 = dma.hbm_to_vmem [thread:$0]  %s16, 16, %s570, [#allocation18]
        $region68: #{cluster_transformer_forward.1} parent=11 // pred_fallthru
          _
      $region12: #{cluster_transformer_forward.1} parent=5 // pred_fallthru
        _
      %p573 = scmp.lt.s32.totalorder %s32, 2
      // Predicated region
      $region69: #{cluster_transformer_forward.1} parent=5 // pred_check
        %p574 = pneg %p573
      $region70: #{cluster_transformer_forward.1} parent=5 // pred_check_branch
        %576 = sbr.rel (%p574) target = $region72
      $region71: #{cluster_transformer_forward.1} parent=5 // pred_region
        // Predicated region
        $region73: #{cluster_transformer_forward.1} parent=71 // pred_check
          %p577 = pneg %p52
        $region74: #{cluster_transformer_forward.1} parent=71 // pred_check_branch
          %579 = sbr.rel (%p577) target = $region76
        $region75: #{cluster_transformer_forward.1} parent=71 // pred_region
          %s580 = smul.u32 2, %s32
          %p581 = scmp.lt.s32.totalorder %s580, 3
          %s582 = scalar_select %p581, %s580, 3
          %s583 = smul.addr %s582, 8
          %s584 = scalar_lea.vmem %s0, %s583
          %s585 = smul.u32 2, %s32
        $region76: #{cluster_transformer_forward.1} parent=71 // pred_fallthru
          _
        // Predicated region
        $region77: #{cluster_transformer_forward.1} parent=71 // pred_check
          %p586 = pneg %p78
        $region78: #{cluster_transformer_forward.1} parent=71 // pred_check_branch
          %588 = sbr.rel (%p586) target = $region80
        $region79: #{cluster_transformer_forward.1} parent=71 // pred_region
          %s589 = smul.u32 2, %s32
          %p590 = scmp.lt.s32.totalorder %s589, 3
          %s591 = scalar_select %p590, %s589, 3
          %s592 = scalar_lea.vmem %s1, %s591
          %s593 = smul.u32 2, %s32
        $region80: #{cluster_transformer_forward.1} parent=71 // pred_fallthru
          _
        // Predicated region
        $region81: #{cluster_transformer_forward.1} parent=71 // pred_check
          %p594 = pneg %p104
        $region82: #{cluster_transformer_forward.1} parent=71 // pred_check_branch
          %596 = sbr.rel (%p594) target = $region84
        $region83: #{cluster_transformer_forward.1} parent=71 // pred_region
          %s597 = smul.u32 2, %s32
          %p598 = scmp.lt.s32.totalorder %s597, 3
          %s599 = scalar_select %p598, %s597, 3
          %s600 = smul.addr %s599, 8
          %s601 = scalar_lea.vmem %s2, %s600
          %s602 = smul.u32 2, %s32
        $region84: #{cluster_transformer_forward.1} parent=71 // pred_fallthru
          _
      $region72: #{cluster_transformer_forward.1} parent=5 // pred_fallthru
        _
      %p603 = scmp.le.s32.totalorder 1, %s32
      %p604 = scmp.lt.s32.totalorder %s32, 3
      %p605 = pnand %p603, %p604
      %p606 = pneg %p605
      // Predicated region
      $region85: #{cluster_transformer_forward.1} parent=5 // pred_check
        _
      $region86: #{cluster_transformer_forward.1} parent=5 // pred_check_branch
        %608 = sbr.rel (%p605) target = $region88
      $region87: #{cluster_transformer_forward.1} parent=5 // pred_region
        %s609 = ssub.s32 %s32, 1
        // Predicated region
        $region89: #{cluster_transformer_forward.1} parent=87 // pred_check
          %p610 = pneg %p173
        $region90: #{cluster_transformer_forward.1} parent=87 // pred_check_branch
          %612 = sbr.rel (%p610) target = $region92
        $region91: #{cluster_transformer_forward.1} parent=87 // pred_region
          %613 = dma.done [#allocation3], 3072
        $region92: #{cluster_transformer_forward.1} parent=87 // pred_fallthru
          _
        // Predicated region
        $region93: #{cluster_transformer_forward.1} parent=87 // pred_check
          %p614 = pneg %p194
        $region94: #{cluster_transformer_forward.1} parent=87 // pred_check_branch
          %616 = sbr.rel (%p614) target = $region96
        $region95: #{cluster_transformer_forward.1} parent=87 // pred_region
          %617 = dma.done [#allocation6], 48
        $region96: #{cluster_transformer_forward.1} parent=87 // pred_fallthru
          _
        // Predicated region
        $region97: #{cluster_transformer_forward.1} parent=87 // pred_check
          %p618 = pneg %p236
        $region98: #{cluster_transformer_forward.1} parent=87 // pred_check_branch
          %620 = sbr.rel (%p618) target = $region100
        $region99: #{cluster_transformer_forward.1} parent=87 // pred_region
          %621 = dma.done [#allocation6], 16
        $region100: #{cluster_transformer_forward.1} parent=87 // pred_fallthru
          _
        // Predicated region
        $region101: #{cluster_transformer_forward.1} parent=87 // pred_check
          %p622 = pneg %p257
        $region102: #{cluster_transformer_forward.1} parent=87 // pred_check_branch
          %624 = sbr.rel (%p622) target = $region104
        $region103: #{cluster_transformer_forward.1} parent=87 // pred_region
          %625 = dma.done [#allocation9], 16
        $region104: #{cluster_transformer_forward.1} parent=87 // pred_fallthru
          _
        // Predicated region
        $region105: #{cluster_transformer_forward.1} parent=87 // pred_check
          %p626 = pneg %p278
        $region106: #{cluster_transformer_forward.1} parent=87 // pred_check_branch
          %628 = sbr.rel (%p626) target = $region108
        $region107: #{cluster_transformer_forward.1} parent=87 // pred_region
          %629 = dma.done [#allocation9], 16
        $region108: #{cluster_transformer_forward.1} parent=87 // pred_fallthru
          _
        // Predicated region
        $region109: #{cluster_transformer_forward.1} parent=87 // pred_check
          %p630 = pneg %p299
        $region110: #{cluster_transformer_forward.1} parent=87 // pred_check_branch
          %632 = sbr.rel (%p630) target = $region112
        $region111: #{cluster_transformer_forward.1} parent=87 // pred_region
          %633 = dma.done [#allocation12], 4096
        $region112: #{cluster_transformer_forward.1} parent=87 // pred_fallthru
          _
        // Predicated region
        $region113: #{cluster_transformer_forward.1} parent=87 // pred_check
          %p634 = pneg %p341
        $region114: #{cluster_transformer_forward.1} parent=87 // pred_check_branch
          %636 = sbr.rel (%p634) target = $region116
        $region115: #{cluster_transformer_forward.1} parent=87 // pred_region
          %637 = dma.done [#allocation12], 4096
        $region116: #{cluster_transformer_forward.1} parent=87 // pred_fallthru
          _
        // Predicated region
        $region117: #{cluster_transformer_forward.1} parent=87 // pred_check
          %p638 = pneg %p362
        $region118: #{cluster_transformer_forward.1} parent=87 // pred_check_branch
          %640 = sbr.rel (%p638) target = $region120
        $region119: #{cluster_transformer_forward.1} parent=87 // pred_region
          %641 = dma.done [#allocation15], 16
        $region120: #{cluster_transformer_forward.1} parent=87 // pred_fallthru
          _
        // Predicated region
        $region121: #{cluster_transformer_forward.1} parent=87 // pred_check
          %p642 = pneg %p383
        $region122: #{cluster_transformer_forward.1} parent=87 // pred_check_branch
          %644 = sbr.rel (%p642) target = $region124
        $region123: #{cluster_transformer_forward.1} parent=87 // pred_region
          %645 = dma.done [#allocation15], 16
        $region124: #{cluster_transformer_forward.1} parent=87 // pred_fallthru
          _
        // Predicated region
        $region125: #{cluster_transformer_forward.1} parent=87 // pred_check
          %p646 = pneg %p404
        $region126: #{cluster_transformer_forward.1} parent=87 // pred_check_branch
          %648 = sbr.rel (%p646) target = $region128
        $region127: #{cluster_transformer_forward.1} parent=87 // pred_region
          %649 = dma.done [#allocation18], 16
        $region128: #{cluster_transformer_forward.1} parent=87 // pred_fallthru
          _
        %s650 = smul.u32 2, %s37
        %p651 = scmp.lt.s32.totalorder %s650, 3
        %s652 = scalar_select %p651, %s650, 3
        %s653 = smul.addr %s652, 8
        %s654 = scalar_lea.vmem %s0, %s653
        %p655 = pneg %p58
        %p656 = pneg %p55
        %s657 = smul.u32 2, %s37
        %p658 = scmp.lt.s32.totalorder %s657, 3
        %s659 = scalar_select %p658, %s657, 3
        %s660 = scalar_lea.vmem %s1, %s659
        %p661 = pneg %p84
        %p662 = pneg %p81
        %s663 = smul.u32 2, %s37
        %p664 = scmp.lt.s32.totalorder %s663, 3
        %s665 = scalar_select %p664, %s663, 3
        %s666 = smul.addr %s665, 8
        %s667 = scalar_lea.vmem %s2, %s666
        %p668 = pneg %p110
        %p669 = pneg %p107
        %p670 = pneg %p131
        %p671 = pneg %p128
        %p672 = pneg %p152
        %p673 = pneg %p149
        %p674 = pneg %p173
        %p675 = pneg %p170
        %p676 = pneg %p194
        %p677 = pneg %p191
        %p678 = pneg %p215
        %p679 = pneg %p212
        %p680 = pneg %p236
        %p681 = pneg %p233
        %p682 = pneg %p257
        %p683 = pneg %p254
        %p684 = pneg %p278
        %p685 = pneg %p275
        %p686 = pneg %p299
        %p687 = pneg %p296
        %p688 = pneg %p320
        %p689 = pneg %p317
        %p690 = pneg %p341
        %p691 = pneg %p338
        %p692 = pneg %p362
        %p693 = pneg %p359
        %p694 = pneg %p383
        %p695 = pneg %p380
        %p696 = pneg %p404
        %p697 = pneg %p401
        %p698 = pneg %p430
        %p699 = pneg %p427
        %s700 = sand.u32 %s417, 1
        %s701 = scalar_lea.sflag [#allocation4], %s700
        %s702 = sand.u32 %s417, 1
        %s703 = smul.addr %s702, 16
        %s704 = scalar_lea.vmem [#allocation19], %s703
        %s705 = smul.u32 2, %s37
        %p706 = scmp.lt.s32.totalorder %s705, 3
        %s707 = scalar_select %p706, %s705, 3
        %s708 = smul.addr %s707, 8
        %s709 = scalar_lea.vmem %s0, %s708
        %s710 = smul.u32 2, %s37
        %s711 = smul.u32 2, %s37
        %p712 = scmp.lt.s32.totalorder %s711, 3
        %s713 = scalar_select %p712, %s711, 3
        %s714 = scalar_lea.vmem %s1, %s713
        %s715 = smul.u32 2, %s37
        %s716 = smul.u32 2, %s37
        %p717 = scmp.lt.s32.totalorder %s716, 3
        %s718 = scalar_select %p717, %s716, 3
        %s719 = smul.addr %s718, 8
        %s720 = scalar_lea.vmem %s2, %s719
        %s721 = smul.u32 2, %s37
        %s722 = smul.u32 2, %s37
        %v724 = vld [vmem:[%s720] sm:$0xff]
        %v725 = vld [vmem:[%s720 + $0x8] sm:$0xff]
        %v726 = vld [vmem:[%s709] sm:$0xff]
        %v727 = vld [vmem:[%s709 + $0x8] sm:$0xff]
        %v728 = vld [vmem:[%s714] sm:$0x1]
        %v729 = vld [vmem:[%s714 + $0x1] sm:$0x1]
        %v730 = vld [vmem:[%s3] sm:$0x1]
        %v731 = vld [vmem:[%s4] sm:$0x1]
        %v732 = vld [vmem:[#allocation8] sm:$0x1]
        %v733 = vld [vmem:[#allocation10] sm:$0x1]
        %v734 = vld [vmem:[#allocation16] sm:$0x1]
        %v735 = vld [vmem:[#allocation17] sm:$0x1]
        %v736 = vld [vmem:[#allocation2] sm:$0xff]
        %v737 = vld [vmem:[#allocation2 + $0x8] sm:$0xf]
        %v738 = vld [vmem:[#allocation2 + $0xc] sm:$0xff]
        %v739 = vld [vmem:[#allocation2 + $0x14] sm:$0xf]
        %v740 = vld [vmem:[#allocation2 + $0x18] sm:$0xff]
        %v741 = vld [vmem:[#allocation2 + $0x20] sm:$0xf]
        %v742 = vld [vmem:[#allocation2 + $0x24] sm:$0xff]
        %v743 = vld [vmem:[#allocation2 + $0x2c] sm:$0xf]
        %v744 = vld [vmem:[#allocation2 + $0x30] sm:$0xff]
        %v745 = vld [vmem:[#allocation2 + $0x38] sm:$0xf]
        %v746 = vld [vmem:[#allocation2 + $0x3c] sm:$0xff]
        %v747 = vld [vmem:[#allocation2 + $0x44] sm:$0xf]
        %v748 = vld [vmem:[#allocation2 + $0x48] sm:$0xff]
        %v749 = vld [vmem:[#allocation2 + $0x50] sm:$0xf]
        %v750 = vld [vmem:[#allocation2 + $0x54] sm:$0xff]
        %v751 = vld [vmem:[#allocation2 + $0x5c] sm:$0xf]
        %v752 = vld [vmem:[#allocation2 + $0x60] sm:$0xff]
        %v753 = vld [vmem:[#allocation2 + $0x68] sm:$0xf]
        %v754 = vld [vmem:[#allocation2 + $0x6c] sm:$0xff]
        %v755 = vld [vmem:[#allocation2 + $0x74] sm:$0xf]
        %v756 = vld [vmem:[#allocation2 + $0x78] sm:$0xff]
        %v757 = vld [vmem:[#allocation2 + $0x80] sm:$0xf]
        %v758 = vld [vmem:[#allocation2 + $0x84] sm:$0xff]
        %v759 = vld [vmem:[#allocation2 + $0x8c] sm:$0xf]
        %v760 = vld [vmem:[#allocation2 + $0x90] sm:$0xff]
        %v761 = vld [vmem:[#allocation2 + $0x98] sm:$0xf]
        %v762 = vld [vmem:[#allocation2 + $0x9c] sm:$0xff]
        %v763 = vld [vmem:[#allocation2 + $0xa4] sm:$0xf]
        %v764 = vld [vmem:[#allocation2 + $0xa8] sm:$0xff]
        %v765 = vld [vmem:[#allocation2 + $0xb0] sm:$0xf]
        %v766 = vld [vmem:[#allocation2 + $0xb4] sm:$0xff]
        %v767 = vld [vmem:[#allocation2 + $0xbc] sm:$0xf]
        %v768 = vld [vmem:[%s7] sm:$0xf]
        %v769 = vld [vmem:[%s7 + $0x4] sm:$0xf]
        %v770 = vld [vmem:[%s7 + $0x8] sm:$0xf]
        %v771 = vld [vmem:[%s7 + $0xc] sm:$0xf]
        %v772 = vld [vmem:[%s7 + $0x10] sm:$0xf]
        %v773 = vld [vmem:[%s7 + $0x14] sm:$0xf]
        %v774 = vld [vmem:[%s7 + $0x18] sm:$0xf]
        %v775 = vld [vmem:[%s7 + $0x1c] sm:$0xf]
        %v776 = vld [vmem:[%s7 + $0x20] sm:$0xf]
        %v777 = vld [vmem:[%s7 + $0x24] sm:$0xf]
        %v778 = vld [vmem:[%s7 + $0x28] sm:$0xf]
        %v779 = vld [vmem:[%s7 + $0x2c] sm:$0xf]
        %v780 = vld [vmem:[%s7 + $0x30] sm:$0xf]
        %v781 = vld [vmem:[%s7 + $0x34] sm:$0xf]
        %v782 = vld [vmem:[%s7 + $0x38] sm:$0xf]
        %v783 = vld [vmem:[%s7 + $0x3c] sm:$0xf]
        %v784 = vld [vmem:[#allocation11] sm:$0xff]
        %v785 = vld [vmem:[#allocation11 + $0x8] sm:$0xff]
        %v786 = vld [vmem:[#allocation11 + $0x10] sm:$0xff]
        %v787 = vld [vmem:[#allocation11 + $0x18] sm:$0xff]
        %v788 = vld [vmem:[#allocation11 + $0x20] sm:$0xff]
        %v789 = vld [vmem:[#allocation11 + $0x28] sm:$0xff]
        %v790 = vld [vmem:[#allocation11 + $0x30] sm:$0xff]
        %v791 = vld [vmem:[#allocation11 + $0x38] sm:$0xff]
        %v792 = vld [vmem:[#allocation11 + $0x40] sm:$0xff]
        %v793 = vld [vmem:[#allocation11 + $0x48] sm:$0xff]
        %v794 = vld [vmem:[#allocation11 + $0x50] sm:$0xff]
        %v795 = vld [vmem:[#allocation11 + $0x58] sm:$0xff]
        %v796 = vld [vmem:[#allocation11 + $0x60] sm:$0xff]
        %v797 = vld [vmem:[#allocation11 + $0x68] sm:$0xff]
        %v798 = vld [vmem:[#allocation11 + $0x70] sm:$0xff]
        %v799 = vld [vmem:[#allocation11 + $0x78] sm:$0xff]
        %v800 = vld [vmem:[#allocation11 + $0x80] sm:$0xff]
        %v801 = vld [vmem:[#allocation11 + $0x88] sm:$0xff]
        %v802 = vld [vmem:[#allocation11 + $0x90] sm:$0xff]
        %v803 = vld [vmem:[#allocation11 + $0x98] sm:$0xff]
        %v804 = vld [vmem:[#allocation11 + $0xa0] sm:$0xff]
        %v805 = vld [vmem:[#allocation11 + $0xa8] sm:$0xff]
        %v806 = vld [vmem:[#allocation11 + $0xb0] sm:$0xff]
        %v807 = vld [vmem:[#allocation11 + $0xb8] sm:$0xff]
        %v808 = vld [vmem:[#allocation11 + $0xc0] sm:$0xff]
        %v809 = vld [vmem:[#allocation11 + $0xc8] sm:$0xff]
        %v810 = vld [vmem:[#allocation11 + $0xd0] sm:$0xff]
        %v811 = vld [vmem:[#allocation11 + $0xd8] sm:$0xff]
        %v812 = vld [vmem:[#allocation11 + $0xe0] sm:$0xff]
        %v813 = vld [vmem:[#allocation11 + $0xe8] sm:$0xff]
        %v814 = vld [vmem:[#allocation11 + $0xf0] sm:$0xff]
        %v815 = vld [vmem:[#allocation11 + $0xf8] sm:$0xff]
        %v816 = vld [vmem:[#allocation13] sm:$0xf]
        %v817 = vld [vmem:[#allocation13 + $0x4] sm:$0xf]
        %v818 = vld [vmem:[#allocation13 + $0x8] sm:$0xf]
        %v819 = vld [vmem:[#allocation13 + $0xc] sm:$0xf]
        %v820 = vld [vmem:[#allocation13 + $0x10] sm:$0xf]
        %v821 = vld [vmem:[#allocation13 + $0x14] sm:$0xf]
        %v822 = vld [vmem:[#allocation13 + $0x18] sm:$0xf]
        %v823 = vld [vmem:[#allocation13 + $0x1c] sm:$0xf]
        %v824 = vld [vmem:[#allocation13 + $0x20] sm:$0xf]
        %v825 = vld [vmem:[#allocation13 + $0x24] sm:$0xf]
        %v826 = vld [vmem:[#allocation13 + $0x28] sm:$0xf]
        %v827 = vld [vmem:[#allocation13 + $0x2c] sm:$0xf]
        %v828 = vld [vmem:[#allocation13 + $0x30] sm:$0xf]
        %v829 = vld [vmem:[#allocation13 + $0x34] sm:$0xf]
        %v830 = vld [vmem:[#allocation13 + $0x38] sm:$0xf]
        %v831 = vld [vmem:[#allocation13 + $0x3c] sm:$0xf]
        %v832 = vld [vmem:[#allocation13 + $0x40] sm:$0xf]
        %v833 = vld [vmem:[#allocation13 + $0x44] sm:$0xf]
        %v834 = vld [vmem:[#allocation13 + $0x48] sm:$0xf]
        %v835 = vld [vmem:[#allocation13 + $0x4c] sm:$0xf]
        %v836 = vld [vmem:[#allocation13 + $0x50] sm:$0xf]
        %v837 = vld [vmem:[#allocation13 + $0x54] sm:$0xf]
        %v838 = vld [vmem:[#allocation13 + $0x58] sm:$0xf]
        %v839 = vld [vmem:[#allocation13 + $0x5c] sm:$0xf]
        %v840 = vld [vmem:[#allocation13 + $0x60] sm:$0xf]
        %v841 = vld [vmem:[#allocation13 + $0x64] sm:$0xf]
        %v842 = vld [vmem:[#allocation13 + $0x68] sm:$0xf]
        %v843 = vld [vmem:[#allocation13 + $0x6c] sm:$0xf]
        %v844 = vld [vmem:[#allocation13 + $0x70] sm:$0xf]
        %v845 = vld [vmem:[#allocation13 + $0x74] sm:$0xf]
        %v846 = vld [vmem:[#allocation13 + $0x78] sm:$0xf]
        %v847 = vld [vmem:[#allocation13 + $0x7c] sm:$0xf]
        %v848 = vld [vmem:[#allocation13 + $0x80] sm:$0xf]
        %v849 = vld [vmem:[#allocation13 + $0x84] sm:$0xf]
        %v850 = vld [vmem:[#allocation13 + $0x88] sm:$0xf]
        %v851 = vld [vmem:[#allocation13 + $0x8c] sm:$0xf]
        %v852 = vld [vmem:[#allocation13 + $0x90] sm:$0xf]
        %v853 = vld [vmem:[#allocation13 + $0x94] sm:$0xf]
        %v854 = vld [vmem:[#allocation13 + $0x98] sm:$0xf]
        %v855 = vld [vmem:[#allocation13 + $0x9c] sm:$0xf]
        %v856 = vld [vmem:[#allocation13 + $0xa0] sm:$0xf]
        %v857 = vld [vmem:[#allocation13 + $0xa4] sm:$0xf]
        %v858 = vld [vmem:[#allocation13 + $0xa8] sm:$0xf]
        %v859 = vld [vmem:[#allocation13 + $0xac] sm:$0xf]
        %v860 = vld [vmem:[#allocation13 + $0xb0] sm:$0xf]
        %v861 = vld [vmem:[#allocation13 + $0xb4] sm:$0xf]
        %v862 = vld [vmem:[#allocation13 + $0xb8] sm:$0xf]
        %v863 = vld [vmem:[#allocation13 + $0xbc] sm:$0xf]
        %v864 = vld [vmem:[#allocation13 + $0xc0] sm:$0xf]
        %v865 = vld [vmem:[#allocation13 + $0xc4] sm:$0xf]
        %v866 = vld [vmem:[#allocation13 + $0xc8] sm:$0xf]
        %v867 = vld [vmem:[#allocation13 + $0xcc] sm:$0xf]
        %v868 = vld [vmem:[#allocation13 + $0xd0] sm:$0xf]
        %v869 = vld [vmem:[#allocation13 + $0xd4] sm:$0xf]
        %v870 = vld [vmem:[#allocation13 + $0xd8] sm:$0xf]
        %v871 = vld [vmem:[#allocation13 + $0xdc] sm:$0xf]
        %v872 = vld [vmem:[#allocation13 + $0xe0] sm:$0xf]
        %v873 = vld [vmem:[#allocation13 + $0xe4] sm:$0xf]
        %v874 = vld [vmem:[#allocation13 + $0xe8] sm:$0xf]
        %v875 = vld [vmem:[#allocation13 + $0xec] sm:$0xf]
        %v876 = vld [vmem:[#allocation13 + $0xf0] sm:$0xf]
        %v877 = vld [vmem:[#allocation13 + $0xf4] sm:$0xf]
        %v878 = vld [vmem:[#allocation13 + $0xf8] sm:$0xf]
        %v879 = vld [vmem:[#allocation13 + $0xfc] sm:$0xf]
        %v880 = vld [vmem:[#allocation5] sm:$0x7]
        %v881 = vld [vmem:[#allocation7] sm:$0x1]
        %v882 = vld [vmem:[%s12] sm:$0xf]
        %v883 = vld [vmem:[#allocation14] sm:$0x1]
        %884 = vadd.xlane.f32.xlu0 %v724
        %v885 = vpop.xlane.xlu0 %884
        %886 = vadd.xlane.f32.xlu0 %v725
        %v887 = vpop.xlane.xlu0 %886
        %v888 = vrcp.pop 128.0
        %v889 = vmul.f32 %v885, %v888
        %v890 = vmul.f32 %v887, %v888
        %v891 = vsub.f32 %v724, %v889
        %v892 = vsub.f32 %v725, %v890
        %v893 = vmul.f32 %v891, %v891
        %v894 = vmul.f32 %v892, %v892
        %895 = vadd.xlane.f32.xlu0 %v893
        %v896 = vpop.xlane.xlu0 %895
        %897 = vadd.xlane.f32.xlu0 %v894
        %v898 = vpop.xlane.xlu0 %897
        %v899 = vmul.f32 %v896, %v888
        %v900 = vmul.f32 %v898, %v888
        %v901 = vadd.f32 %v899, 1e-05
        %v902 = vadd.f32 %v900, 1e-05
        %v903 = vrsqrt.pop %v901
        %v904 = vrsqrt.pop %v902
        %v905 = vmul.f32 %v891, %v903
        %v906 = vmul.f32 %v892, %v904
        %v908 = vlaneseq
        %v909 = vshrl.u32 %v908, 7
        %v910 = vsub.s32 0, %v909
        %v911 = vrot.slane %v730, %v910
        %v913 = vmul.f32 %v905, %v911
        %v914 = vmul.f32 %v906, %v911
        %v916 = vlaneseq
        %v917 = vshrl.u32 %v916, 7
        %v918 = vsub.s32 0, %v917
        %v919 = vrot.slane %v731, %v918
        %v921 = vadd.f32 %v913, %v919
        %v922 = vadd.f32 %v914, %v919
        %v923 = vpack.c.bf16 %v922, %v921
        %v925 = vlaneseq
        %v926 = vshrl.u32 %v925, 7
        %v927 = vsub.s32 0, %v926
        %v928 = vrot.slane %v880, %v927
        %v929 = vlaneseq
        %v930 = vshrl.u32 %v929, 7
        %v931 = vsub.s32 1, %v930
        %v932 = vrot.slane %v880, %v931
        %v933 = vlaneseq
        %v934 = vshrl.u32 %v933, 7
        %v935 = vsub.s32 2, %v934
        %v936 = vrot.slane %v880, %v935
        %v972 = vunpack.c.l.b16 %v736
        %v973 = vunpack.c.h.b16 %v736
        %v974 = vunpack.c.l.b16 %v737
        %v975 = vunpack.c.l.b16 %v738
        %v976 = vunpack.c.h.b16 %v738
        %v977 = vunpack.c.l.b16 %v739
        %v978 = vunpack.c.l.b16 %v740
        %v979 = vunpack.c.h.b16 %v740
        %v980 = vunpack.c.l.b16 %v741
        %v981 = vunpack.c.l.b16 %v742
        %v982 = vunpack.c.h.b16 %v742
        %v983 = vunpack.c.l.b16 %v743
        %v984 = vunpack.c.l.b16 %v744
        %v985 = vunpack.c.h.b16 %v744
        %v986 = vunpack.c.l.b16 %v745
        %v987 = vunpack.c.l.b16 %v746
        %v988 = vunpack.c.h.b16 %v746
        %v989 = vunpack.c.l.b16 %v747
        %v990 = vunpack.c.l.b16 %v748
        %v991 = vunpack.c.h.b16 %v748
        %v992 = vunpack.c.l.b16 %v749
        %v993 = vunpack.c.l.b16 %v750
        %v994 = vunpack.c.h.b16 %v750
        %v995 = vunpack.c.l.b16 %v751
        %v996 = vunpack.c.l.b16 %v752
        %v997 = vunpack.c.h.b16 %v752
        %v998 = vunpack.c.l.b16 %v753
        %v999 = vunpack.c.l.b16 %v754
        %v1000 = vunpack.c.h.b16 %v754
        %v1001 = vunpack.c.l.b16 %v755
        %v1002 = vunpack.c.l.b16 %v756
        %v1003 = vunpack.c.h.b16 %v756
        %v1004 = vunpack.c.l.b16 %v757
        %v1005 = vunpack.c.l.b16 %v758
        %v1006 = vunpack.c.h.b16 %v758
        %v1007 = vunpack.c.l.b16 %v759
        %v1008 = vunpack.c.l.b16 %v760
        %v1009 = vunpack.c.h.b16 %v760
        %v1010 = vunpack.c.l.b16 %v761
        %v1011 = vunpack.c.l.b16 %v762
        %v1012 = vunpack.c.h.b16 %v762
        %v1013 = vunpack.c.l.b16 %v763
        %v1014 = vunpack.c.l.b16 %v764
        %v1015 = vunpack.c.h.b16 %v764
        %v1016 = vunpack.c.l.b16 %v765
        %v1017 = vunpack.c.l.b16 %v766
        %v1018 = vunpack.c.h.b16 %v766
        %v1019 = vunpack.c.l.b16 %v767
        %v1020 = vpack.c.b16 %v975, %v972
        %v1021 = vpack.c.b16 %v976, %v973
        %v1022 = vpack.c.b16 %v977, %v974
        %v1023 = vpack.c.b16 %v981, %v978
        %v1024 = vpack.c.b16 %v982, %v979
        %v1025 = vpack.c.b16 %v983, %v980
        %v1026 = vpack.c.b16 %v987, %v984
        %v1027 = vpack.c.b16 %v988, %v985
        %v1028 = vpack.c.b16 %v989, %v986
        %v1029 = vpack.c.b16 %v993, %v990
        %v1030 = vpack.c.b16 %v994, %v991
        %v1031 = vpack.c.b16 %v995, %v992
        %v1032 = vpack.c.b16 %v999, %v996
        %v1033 = vpack.c.b16 %v1000, %v997
        %v1034 = vpack.c.b16 %v1001, %v998
        %v1035 = vpack.c.b16 %v1005, %v1002
        %v1036 = vpack.c.b16 %v1006, %v1003
        %v1037 = vpack.c.b16 %v1007, %v1004
        %v1038 = vpack.c.b16 %v1011, %v1008
        %v1039 = vpack.c.b16 %v1012, %v1009
        %v1040 = vpack.c.b16 %v1013, %v1010
        %v1041 = vpack.c.b16 %v1017, %v1014
        %v1042 = vpack.c.b16 %v1018, %v1015
        %v1043 = vpack.c.b16 %v1019, %v1016
        %1068 = vmatprep.subr.bf16.mxu0 %v1021
        %1069 = vmatpush1.bf16.msra.mxu0 %v1020
        %1070 = vmatprep.subr.bf16.mxu0 %v1024
        %1071 = vmatpush1.bf16.msra.mxu0 %v1023
        %1072 = vmatprep.subr.bf16.mxu0 %v1027
        %1073 = vmatpush1.bf16.msra.mxu0 %v1026
        %1074 = vmatprep.subr.bf16.mxu0 %v1030
        %1075 = vmatpush1.bf16.msra.mxu0 %v1029
        %1076 = vmatprep.subr.bf16.mxu0 %v1033
        %1077 = vmatpush1.bf16.msra.mxu0 %v1032
        %1078 = vmatprep.subr.bf16.mxu0 %v1036
        %1079 = vmatpush1.bf16.msra.mxu0 %v1035
        %1080 = vmatprep.subr.bf16.mxu0 %v1039
        %1081 = vmatpush1.bf16.msra.mxu0 %v1038
        %1082 = vmatprep.subr.bf16.mxu0 %v1042
        %1083 = vmatpush1.bf16.msra.mxu0 %v1041
        %1084 = vmatprep.subr.bf16.mxu0 0
        %1085 = vmatpush1.bf16.msra.mxu0 0
        %1086 = vmatprep.subr.bf16.mxu0 0
        %1087 = vmatpush1.bf16.msra.mxu0 0
        %1088 = vmatprep.subr.bf16.mxu0 0
        %1089 = vmatpush1.bf16.msra.mxu0 0
        %1090 = vmatprep.subr.bf16.mxu0 0
        %1091 = vmatpush1.bf16.msra.mxu0 0
        %1092 = vmatprep.subr.bf16.mxu0 0
        %1093 = vmatpush1.bf16.msra.mxu0 0
        %1094 = vmatprep.subr.bf16.mxu0 0
        %1095 = vmatpush1.bf16.msra.mxu0 0
        %1096 = vmatprep.subr.bf16.mxu0 0
        %1097 = vmatpush1.bf16.msra.mxu0 0
        %1098 = vmatprep.subr.bf16.mxu0 0
        %1099 = vmatpush1.bf16.msra.mxu0 0
        %1100 = vmatprep.mubr.bf16.mxu0 0
        %1101 = vmatmul.mubr.bf16.gmra.mrb[0].mxu0 %v923
        %v1102 = vpop.f32.mrb[0].mxu0
        %v1103 = vadd.f32 %v928, %v1102
        %v1104 = vpop.f32.mrb[0].mxu0
        %v1105 = vadd.f32 %v932, %v1104
        %v1106 = vpop.f32.mrb[0].mxu0
        %v1107 = vadd.f32 %v928, %v1106
        %v1108 = vpop.f32.mrb[0].mxu0
        %v1109 = vadd.f32 %v932, %v1108
        %1110 = vdwg.mxu0
        %1111 = vmatprep.subr.bf16.mxu0 0
        %1112 = vmatpush1.bf16.msra.mxu0 %v1022
        %1113 = vmatprep.subr.bf16.mxu0 0
        %1114 = vmatpush1.bf16.msra.mxu0 %v1025
        %1115 = vmatprep.subr.bf16.mxu0 0
        %1116 = vmatpush1.bf16.msra.mxu0 %v1028
        %1117 = vmatprep.subr.bf16.mxu0 0
        %1118 = vmatpush1.bf16.msra.mxu0 %v1031
        %1119 = vmatprep.subr.bf16.mxu0 0
        %1120 = vmatpush1.bf16.msra.mxu0 %v1034
        %1121 = vmatprep.subr.bf16.mxu0 0
        %1122 = vmatpush1.bf16.msra.mxu0 %v1037
        %1123 = vmatprep.subr.bf16.mxu0 0
        %1124 = vmatpush1.bf16.msra.mxu0 %v1040
        %1125 = vmatprep.subr.bf16.mxu0 0
        %1126 = vmatpush1.bf16.msra.mxu0 %v1043
        %1127 = vmatprep.subr.bf16.mxu0 0
        %1128 = vmatpush1.bf16.msra.mxu0 0
        %1129 = vmatprep.subr.bf16.mxu0 0
        %1130 = vmatpush1.bf16.msra.mxu0 0
        %1131 = vmatprep.subr.bf16.mxu0 0
        %1132 = vmatpush1.bf16.msra.mxu0 0
        %1133 = vmatprep.subr.bf16.mxu0 0
        %1134 = vmatpush1.bf16.msra.mxu0 0
        %1135 = vmatprep.subr.bf16.mxu0 0
        %1136 = vmatpush1.bf16.msra.mxu0 0
        %1137 = vmatprep.subr.bf16.mxu0 0
        %1138 = vmatpush1.bf16.msra.mxu0 0
        %1139 = vmatprep.subr.bf16.mxu0 0
        %1140 = vmatpush1.bf16.msra.mxu0 0
        %1141 = vmatprep.subr.bf16.mxu0 0
        %1142 = vmatpush1.bf16.msra.mxu0 0
        %1143 = vmatprep.mubr.bf16.mxu0 0
        %1144 = vmatmul.mubr.bf16.gmra.mrb[0].mxu0 %v923
        %v1145 = vpop.f32.mrb[0].mxu0
        %v1146 = vadd.f32 %v936, %v1145
        %v1147 = vpop.f32.mrb[0].mxu0
        %v1148 = vpop.f32.mrb[0].mxu0
        %v1149 = vadd.f32 %v936, %v1148
        %v1150 = vpop.f32.mrb[0].mxu0
        %1151 = vdwg.mxu0
        %v1152 = vmul.f32 %v1103, 0.17677669
        %v1153 = vmul.f32 %v1107, 0.17677669
        %v1154 = vpack.c.bf16 %v1152, %v1152
        %v1155 = vpack.c.bf16 %v1153, %v1153
        %v1156 = vpack.c.bf16 %v1105, %v1105
        %v1157 = vpack.c.bf16 %v1109, %v1109
        %v1158 = vpack.c.bf16 %v1146, %v1146
        %v1159 = vpack.c.bf16 %v1149, %v1149
        %v1162 = vlaneseq
        %v1163 = vshrl.u32 %v1162, 7
        %v1164 = vsub.s32 0, %v1163
        %v1165 = vrot.slane %v728, %v1164
        %v1166 = vlaneseq
        %v1167 = vshrl.u32 %v1166, 7
        %v1168 = vsub.s32 0, %v1167
        %v1169 = vrot.slane %v729, %v1168
        %vm1172 = vcmask 261120
        %v1174 = vsel %vm1172, %v1154, 0
        %v1177 = vsel %vm1172, %v1156, 0
        %1179 = vmatprep.subr.bf16.mxu0 0
        %1180 = vmatpush1.bf16.xpose.msra.mxu0 %v1177
        %1181 = vmatprep.subr.bf16.mxu0 0
        %1182 = vmatpush1.bf16.xpose.msra.mxu0 0
        %1183 = vmatprep.subr.bf16.mxu0 0
        %1184 = vmatpush1.bf16.xpose.msra.mxu0 0
        %1185 = vmatprep.subr.bf16.mxu0 0
        %1186 = vmatpush1.bf16.xpose.msra.mxu0 0
        %1187 = vmatprep.subr.bf16.mxu0 0
        %1188 = vmatpush1.bf16.xpose.msra.mxu0 0
        %1189 = vmatprep.subr.bf16.mxu0 0
        %1190 = vmatpush1.bf16.xpose.msra.mxu0 0
        %1191 = vmatprep.subr.bf16.mxu0 0
        %1192 = vmatpush1.bf16.xpose.msra.mxu0 0
        %1193 = vmatprep.subr.bf16.mxu0 0
        %1194 = vmatpush1.bf16.xpose.msra.mxu0 0
        %1195 = vmatprep.subr.bf16.mxu0 0
        %1196 = vmatpush1.bf16.xpose.msra.mxu0 0
        %1197 = vmatprep.subr.bf16.mxu0 0
        %1198 = vmatpush1.bf16.xpose.msra.mxu0 0
        %1199 = vmatprep.subr.bf16.mxu0 0
        %1200 = vmatpush1.bf16.xpose.msra.mxu0 0
        %1201 = vmatprep.subr.bf16.mxu0 0
        %1202 = vmatpush1.bf16.xpose.msra.mxu0 0
        %1203 = vmatprep.subr.bf16.mxu0 0
        %1204 = vmatpush1.bf16.xpose.msra.mxu0 0
        %1205 = vmatprep.subr.bf16.mxu0 0
        %1206 = vmatpush1.bf16.xpose.msra.mxu0 0
        %1207 = vmatprep.subr.bf16.mxu0 0
        %1208 = vmatpush1.bf16.xpose.msra.mxu0 0
        %1209 = vmatprep.subr.bf16.mxu0 0
        %1210 = vmatpush1.bf16.xpose.msra.mxu0 0
        %1211 = vmatprep.mubr.bf16.mxu0 0
        %1212 = vmatmul.mubr.bf16.gmra.mrb[0].mxu0 %v1174
        %v1213 = vpop.f32.mrb[0].mxu0
        %v1214 = vadd.f32 %v1165, %v1213
        %v1215 = vpop.f32.mrb[0].mxu0
        %v1216 = vpop.f32.mrb[0].mxu0
        %v1217 = vpop.f32.mrb[0].mxu0
        %1218 = vdwg.mxu0
        %v1220 = vsel %vm1172, %v1155, 0
        %v1223 = vsel %vm1172, %v1157, 0
        %1225 = vmatprep.subr.bf16.mxu0 0
        %1226 = vmatpush1.bf16.xpose.msra.mxu0 %v1223
        %1227 = vmatprep.subr.bf16.mxu0 0
        %1228 = vmatpush1.bf16.xpose.msra.mxu0 0
        %1229 = vmatprep.subr.bf16.mxu0 0
        %1230 = vmatpush1.bf16.xpose.msra.mxu0 0
        %1231 = vmatprep.subr.bf16.mxu0 0
        %1232 = vmatpush1.bf16.xpose.msra.mxu0 0
        %1233 = vmatprep.subr.bf16.mxu0 0
        %1234 = vmatpush1.bf16.xpose.msra.mxu0 0
        %1235 = vmatprep.subr.bf16.mxu0 0
        %1236 = vmatpush1.bf16.xpose.msra.mxu0 0
        %1237 = vmatprep.subr.bf16.mxu0 0
        %1238 = vmatpush1.bf16.xpose.msra.mxu0 0
        %1239 = vmatprep.subr.bf16.mxu0 0
        %1240 = vmatpush1.bf16.xpose.msra.mxu0 0
        %1241 = vmatprep.subr.bf16.mxu0 0
        %1242 = vmatpush1.bf16.xpose.msra.mxu0 0
        %1243 = vmatprep.subr.bf16.mxu0 0
        %1244 = vmatpush1.bf16.xpose.msra.mxu0 0
        %1245 = vmatprep.subr.bf16.mxu0 0
        %1246 = vmatpush1.bf16.xpose.msra.mxu0 0
        %1247 = vmatprep.subr.bf16.mxu0 0
        %1248 = vmatpush1.bf16.xpose.msra.mxu0 0
        %1249 = vmatprep.subr.bf16.mxu0 0
        %1250 = vmatpush1.bf16.xpose.msra.mxu0 0
        %1251 = vmatprep.subr.bf16.mxu0 0
        %1252 = vmatpush1.bf16.xpose.msra.mxu0 0
        %1253 = vmatprep.subr.bf16.mxu0 0
        %1254 = vmatpush1.bf16.xpose.msra.mxu0 0
        %1255 = vmatprep.subr.bf16.mxu0 0
        %1256 = vmatpush1.bf16.xpose.msra.mxu0 0
        %1257 = vmatprep.mubr.bf16.mxu0 0
        %1258 = vmatmul.mubr.bf16.gmra.mrb[0].mxu0 %v1220
        %v1259 = vpop.f32.mrb[0].mxu0
        %v1260 = vadd.f32 %v1169, %v1259
        %v1261 = vpop.f32.mrb[0].mxu0
        %v1262 = vpop.f32.mrb[0].mxu0
        %v1263 = vpop.f32.mrb[0].mxu0
        %1264 = vdwg.mxu0
        %vm1265 = vcmask 64512
        %v1266 = vsel %vm1265, %v1214, -inf
        %1267 = vmax.xlane.f32.xlu0 %v1266
        %v1268 = vpop.xlane.xlu0 %1267
        %v1269 = vsel %vm1265, %v1260, -inf
        %1270 = vmax.xlane.f32.xlu0 %v1269
        %v1271 = vpop.xlane.xlu0 %1270
        %v1272 = vsub.f32 %v1214, %v1268
        %v1273 = vsub.f32 %v1260, %v1271
        %v1274 = vmul.f32 %v1272, 1.442695
        %v1275 = vpow.pop %v1274
        %v1276 = vmul.f32 %v1273, 1.442695
        %v1277 = vpow.pop %v1276
        %v1278 = vsel %vm1265, %v1275, 0.0
        %1279 = vadd.xlane.f32.xlu0 %v1278
        %v1280 = vpop.xlane.xlu0 %1279
        %v1281 = vsel %vm1265, %v1277, 0.0
        %1282 = vadd.xlane.f32.xlu0 %v1281
        %v1283 = vpop.xlane.xlu0 %1282
        %v1284 = vrcp.pop %v1280
        %v1285 = vrcp.pop %v1283
        %v1286 = vmul.f32 %v1275, %v1284
        %v1287 = vmul.f32 %v1277, %v1285
        %v1288 = vpack.c.bf16 %v1286, %v1286
        %v1289 = vpack.c.bf16 %v1287, %v1287
        %v1291 = vsel %vm1265, %v1288, 0
        %vm1293 = vcmask 1043456
        %v1295 = vsel %vm1293, %v1158, 0
        %1297 = vmatprep.subr.bf16.mxu0 0
        %1298 = vmatpush1.bf16.msra.mxu0 %v1295
        %1299 = vmatprep.subr.bf16.mxu0 0
        %1300 = vmatpush1.bf16.msra.mxu0 0
        %1301 = vmatprep.subr.bf16.mxu0 0
        %1302 = vmatpush1.bf16.msra.mxu0 0
        %1303 = vmatprep.subr.bf16.mxu0 0
        %1304 = vmatpush1.bf16.msra.mxu0 0
        %1305 = vmatprep.subr.bf16.mxu0 0
        %1306 = vmatpush1.bf16.msra.mxu0 0
        %1307 = vmatprep.subr.bf16.mxu0 0
        %1308 = vmatpush1.bf16.msra.mxu0 0
        %1309 = vmatprep.subr.bf16.mxu0 0
        %1310 = vmatpush1.bf16.msra.mxu0 0
        %1311 = vmatprep.subr.bf16.mxu0 0
        %1312 = vmatpush1.bf16.msra.mxu0 0
        %1313 = vmatprep.subr.bf16.mxu0 0
        %1314 = vmatpush1.bf16.msra.mxu0 0
        %1315 = vmatprep.subr.bf16.mxu0 0
        %1316 = vmatpush1.bf16.msra.mxu0 0
        %1317 = vmatprep.subr.bf16.mxu0 0
        %1318 = vmatpush1.bf16.msra.mxu0 0
        %1319 = vmatprep.subr.bf16.mxu0 0
        %1320 = vmatpush1.bf16.msra.mxu0 0
        %1321 = vmatprep.subr.bf16.mxu0 0
        %1322 = vmatpush1.bf16.msra.mxu0 0
        %1323 = vmatprep.subr.bf16.mxu0 0
        %1324 = vmatpush1.bf16.msra.mxu0 0
        %1325 = vmatprep.subr.bf16.mxu0 0
        %1326 = vmatpush1.bf16.msra.mxu0 0
        %1327 = vmatprep.subr.bf16.mxu0 0
        %1328 = vmatpush1.bf16.msra.mxu0 0
        %1329 = vmatprep.mubr.bf16.mxu0 0
        %1330 = vmatmul.mubr.bf16.gmra.mrb[0].mxu0 %v1291
        %v1331 = vpop.f32.mrb[0].mxu0
        %v1332 = vadd.f32 0.0, %v1331
        %v1333 = vpop.f32.mrb[0].mxu0
        %v1334 = vpop.f32.mrb[0].mxu0
        %v1335 = vpop.f32.mrb[0].mxu0
        %1336 = vdwg.mxu0
        %v1338 = vsel %vm1265, %v1289, 0
        %v1341 = vsel %vm1293, %v1159, 0
        %1343 = vmatprep.subr.bf16.mxu0 0
        %1344 = vmatpush1.bf16.msra.mxu0 %v1341
        %1345 = vmatprep.subr.bf16.mxu0 0
        %1346 = vmatpush1.bf16.msra.mxu0 0
        %1347 = vmatprep.subr.bf16.mxu0 0
        %1348 = vmatpush1.bf16.msra.mxu0 0
        %1349 = vmatprep.subr.bf16.mxu0 0
        %1350 = vmatpush1.bf16.msra.mxu0 0
        %1351 = vmatprep.subr.bf16.mxu0 0
        %1352 = vmatpush1.bf16.msra.mxu0 0
        %1353 = vmatprep.subr.bf16.mxu0 0
        %1354 = vmatpush1.bf16.msra.mxu0 0
        %1355 = vmatprep.subr.bf16.mxu0 0
        %1356 = vmatpush1.bf16.msra.mxu0 0
        %1357 = vmatprep.subr.bf16.mxu0 0
        %1358 = vmatpush1.bf16.msra.mxu0 0
        %1359 = vmatprep.subr.bf16.mxu0 0
        %1360 = vmatpush1.bf16.msra.mxu0 0
        %1361 = vmatprep.subr.bf16.mxu0 0
        %1362 = vmatpush1.bf16.msra.mxu0 0
        %1363 = vmatprep.subr.bf16.mxu0 0
        %1364 = vmatpush1.bf16.msra.mxu0 0
        %1365 = vmatprep.subr.bf16.mxu0 0
        %1366 = vmatpush1.bf16.msra.mxu0 0
        %1367 = vmatprep.subr.bf16.mxu0 0
        %1368 = vmatpush1.bf16.msra.mxu0 0
        %1369 = vmatprep.subr.bf16.mxu0 0
        %1370 = vmatpush1.bf16.msra.mxu0 0
        %1371 = vmatprep.subr.bf16.mxu0 0
        %1372 = vmatpush1.bf16.msra.mxu0 0
        %1373 = vmatprep.subr.bf16.mxu0 0
        %1374 = vmatpush1.bf16.msra.mxu0 0
        %1375 = vmatprep.mubr.bf16.mxu0 0
        %1376 = vmatmul.mubr.bf16.gmra.mrb[0].mxu0 %v1338
        %v1377 = vpop.f32.mrb[0].mxu0
        %v1378 = vadd.f32 0.0, %v1377
        %v1379 = vpop.f32.mrb[0].mxu0
        %v1380 = vpop.f32.mrb[0].mxu0
        %v1381 = vpop.f32.mrb[0].mxu0
        %1382 = vdwg.mxu0
        %1384 = vrot.lane.b32.xlu0 %v1154, 96
        %v1385 = vpop.permute.xlu0 %1384
        %1387 = vrot.lane.b32.xlu0 %v1156, 96
        %v1388 = vpop.permute.xlu0 %1387
        %v1390 = vsel %vm1172, %v1385, 0
        %v1393 = vsel %vm1172, %v1388, 0
        %1395 = vmatprep.subr.bf16.mxu0 0
        %1396 = vmatpush1.bf16.xpose.msra.mxu0 %v1393
        %1397 = vmatprep.subr.bf16.mxu0 0
        %1398 = vmatpush1.bf16.xpose.msra.mxu0 0
        %1399 = vmatprep.subr.bf16.mxu0 0
        %1400 = vmatpush1.bf16.xpose.msra.mxu0 0
        %1401 = vmatprep.subr.bf16.mxu0 0
        %1402 = vmatpush1.bf16.xpose.msra.mxu0 0
        %1403 = vmatprep.subr.bf16.mxu0 0
        %1404 = vmatpush1.bf16.xpose.msra.mxu0 0
        %1405 = vmatprep.subr.bf16.mxu0 0
        %1406 = vmatpush1.bf16.xpose.msra.mxu0 0
        %1407 = vmatprep.subr.bf16.mxu0 0
        %1408 = vmatpush1.bf16.xpose.msra.mxu0 0
        %1409 = vmatprep.subr.bf16.mxu0 0
        %1410 = vmatpush1.bf16.xpose.msra.mxu0 0
        %1411 = vmatprep.subr.bf16.mxu0 0
        %1412 = vmatpush1.bf16.xpose.msra.mxu0 0
        %1413 = vmatprep.subr.bf16.mxu0 0
        %1414 = vmatpush1.bf16.xpose.msra.mxu0 0
        %1415 = vmatprep.subr.bf16.mxu0 0
        %1416 = vmatpush1.bf16.xpose.msra.mxu0 0
        %1417 = vmatprep.subr.bf16.mxu0 0
        %1418 = vmatpush1.bf16.xpose.msra.mxu0 0
        %1419 = vmatprep.subr.bf16.mxu0 0
        %1420 = vmatpush1.bf16.xpose.msra.mxu0 0
        %1421 = vmatprep.subr.bf16.mxu0 0
        %1422 = vmatpush1.bf16.xpose.msra.mxu0 0
        %1423 = vmatprep.subr.bf16.mxu0 0
        %1424 = vmatpush1.bf16.xpose.msra.mxu0 0
        %1425 = vmatprep.subr.bf16.mxu0 0
        %1426 = vmatpush1.bf16.xpose.msra.mxu0 0
        %1427 = vmatprep.mubr.bf16.mxu0 0
        %1428 = vmatmul.mubr.bf16.gmra.mrb[0].mxu0 %v1390
        %v1429 = vpop.f32.mrb[0].mxu0
        %v1430 = vadd.f32 %v1165, %v1429
        %v1431 = vpop.f32.mrb[0].mxu0
        %v1432 = vpop.f32.mrb[0].mxu0
        %v1433 = vpop.f32.mrb[0].mxu0
        %1434 = vdwg.mxu0
        %1436 = vrot.lane.b32.xlu0 %v1155, 96
        %v1437 = vpop.permute.xlu0 %1436
        %1439 = vrot.lane.b32.xlu0 %v1157, 96
        %v1440 = vpop.permute.xlu0 %1439
        %v1442 = vsel %vm1172, %v1437, 0
        %v1445 = vsel %vm1172, %v1440, 0
        %1447 = vmatprep.subr.bf16.mxu0 0
        %1448 = vmatpush1.bf16.xpose.msra.mxu0 %v1445
        %1449 = vmatprep.subr.bf16.mxu0 0
        %1450 = vmatpush1.bf16.xpose.msra.mxu0 0
        %1451 = vmatprep.subr.bf16.mxu0 0
        %1452 = vmatpush1.bf16.xpose.msra.mxu0 0
        %1453 = vmatprep.subr.bf16.mxu0 0
        %1454 = vmatpush1.bf16.xpose.msra.mxu0 0
        %1455 = vmatprep.subr.bf16.mxu0 0
        %1456 = vmatpush1.bf16.xpose.msra.mxu0 0
        %1457 = vmatprep.subr.bf16.mxu0 0
        %1458 = vmatpush1.bf16.xpose.msra.mxu0 0
        %1459 = vmatprep.subr.bf16.mxu0 0
        %1460 = vmatpush1.bf16.xpose.msra.mxu0 0
        %1461 = vmatprep.subr.bf16.mxu0 0
        %1462 = vmatpush1.bf16.xpose.msra.mxu0 0
        %1463 = vmatprep.subr.bf16.mxu0 0
        %1464 = vmatpush1.bf16.xpose.msra.mxu0 0
        %1465 = vmatprep.subr.bf16.mxu0 0
        %1466 = vmatpush1.bf16.xpose.msra.mxu0 0
        %1467 = vmatprep.subr.bf16.mxu0 0
        %1468 = vmatpush1.bf16.xpose.msra.mxu0 0
        %1469 = vmatprep.subr.bf16.mxu0 0
        %1470 = vmatpush1.bf16.xpose.msra.mxu0 0
        %1471 = vmatprep.subr.bf16.mxu0 0
        %1472 = vmatpush1.bf16.xpose.msra.mxu0 0
        %1473 = vmatprep.subr.bf16.mxu0 0
        %1474 = vmatpush1.bf16.xpose.msra.mxu0 0
        %1475 = vmatprep.subr.bf16.mxu0 0
        %1476 = vmatpush1.bf16.xpose.msra.mxu0 0
        %1477 = vmatprep.subr.bf16.mxu0 0
        %1478 = vmatpush1.bf16.xpose.msra.mxu0 0
        %1479 = vmatprep.mubr.bf16.mxu0 0
        %1480 = vmatmul.mubr.bf16.gmra.mrb[0].mxu0 %v1442
        %v1481 = vpop.f32.mrb[0].mxu0
        %v1482 = vadd.f32 %v1169, %v1481
        %v1483 = vpop.f32.mrb[0].mxu0
        %v1484 = vpop.f32.mrb[0].mxu0
        %v1485 = vpop.f32.mrb[0].mxu0
        %1486 = vdwg.mxu0
        %v1487 = vsel %vm1265, %v1430, -inf
        %1488 = vmax.xlane.f32.xlu0 %v1487
        %v1489 = vpop.xlane.xlu0 %1488
        %v1490 = vsel %vm1265, %v1482, -inf
        %1491 = vmax.xlane.f32.xlu0 %v1490
        %v1492 = vpop.xlane.xlu0 %1491
        %v1493 = vsub.f32 %v1430, %v1489
        %v1494 = vsub.f32 %v1482, %v1492
        %v1495 = vmul.f32 %v1493, 1.442695
        %v1496 = vpow.pop %v1495
        %v1497 = vmul.f32 %v1494, 1.442695
        %v1498 = vpow.pop %v1497
        %v1499 = vsel %vm1265, %v1496, 0.0
        %1500 = vadd.xlane.f32.xlu0 %v1499
        %v1501 = vpop.xlane.xlu0 %1500
        %v1502 = vsel %vm1265, %v1498, 0.0
        %1503 = vadd.xlane.f32.xlu0 %v1502
        %v1504 = vpop.xlane.xlu0 %1503
        %v1505 = vrcp.pop %v1501
        %v1506 = vrcp.pop %v1504
        %v1507 = vmul.f32 %v1496, %v1505
        %v1508 = vmul.f32 %v1498, %v1506
        %v1509 = vpack.c.bf16 %v1507, %v1507
        %v1510 = vpack.c.bf16 %v1508, %v1508
        %1512 = vrot.lane.b32.xlu0 %v1158, 96
        %v1513 = vpop.permute.xlu0 %1512
        %v1515 = vsel %vm1265, %v1509, 0
        %v1518 = vsel %vm1293, %v1513, 0
        %1520 = vmatprep.subr.bf16.mxu0 0
        %1521 = vmatpush1.bf16.msra.mxu0 %v1518
        %1522 = vmatprep.subr.bf16.mxu0 0
        %1523 = vmatpush1.bf16.msra.mxu0 0
        %1524 = vmatprep.subr.bf16.mxu0 0
        %1525 = vmatpush1.bf16.msra.mxu0 0
        %1526 = vmatprep.subr.bf16.mxu0 0
        %1527 = vmatpush1.bf16.msra.mxu0 0
        %1528 = vmatprep.subr.bf16.mxu0 0
        %1529 = vmatpush1.bf16.msra.mxu0 0
        %1530 = vmatprep.subr.bf16.mxu0 0
        %1531 = vmatpush1.bf16.msra.mxu0 0
        %1532 = vmatprep.subr.bf16.mxu0 0
        %1533 = vmatpush1.bf16.msra.mxu0 0
        %1534 = vmatprep.subr.bf16.mxu0 0
        %1535 = vmatpush1.bf16.msra.mxu0 0
        %1536 = vmatprep.subr.bf16.mxu0 0
        %1537 = vmatpush1.bf16.msra.mxu0 0
        %1538 = vmatprep.subr.bf16.mxu0 0
        %1539 = vmatpush1.bf16.msra.mxu0 0
        %1540 = vmatprep.subr.bf16.mxu0 0
        %1541 = vmatpush1.bf16.msra.mxu0 0
        %1542 = vmatprep.subr.bf16.mxu0 0
        %1543 = vmatpush1.bf16.msra.mxu0 0
        %1544 = vmatprep.subr.bf16.mxu0 0
        %1545 = vmatpush1.bf16.msra.mxu0 0
        %1546 = vmatprep.subr.bf16.mxu0 0
        %1547 = vmatpush1.bf16.msra.mxu0 0
        %1548 = vmatprep.subr.bf16.mxu0 0
        %1549 = vmatpush1.bf16.msra.mxu0 0
        %1550 = vmatprep.subr.bf16.mxu0 0
        %1551 = vmatpush1.bf16.msra.mxu0 0
        %1552 = vmatprep.mubr.bf16.mxu0 0
        %1553 = vmatmul.mubr.bf16.gmra.mrb[0].mxu0 %v1515
        %v1554 = vpop.f32.mrb[0].mxu0
        %v1555 = vadd.f32 0.0, %v1554
        %v1556 = vpop.f32.mrb[0].mxu0
        %v1557 = vpop.f32.mrb[0].mxu0
        %v1558 = vpop.f32.mrb[0].mxu0
        %1559 = vdwg.mxu0
        %1561 = vrot.lane.b32.xlu0 %v1159, 96
        %v1562 = vpop.permute.xlu0 %1561
        %v1564 = vsel %vm1265, %v1510, 0
        %v1567 = vsel %vm1293, %v1562, 0
        %1569 = vmatprep.subr.bf16.mxu0 0
        %1570 = vmatpush1.bf16.msra.mxu0 %v1567
        %1571 = vmatprep.subr.bf16.mxu0 0
        %1572 = vmatpush1.bf16.msra.mxu0 0
        %1573 = vmatprep.subr.bf16.mxu0 0
        %1574 = vmatpush1.bf16.msra.mxu0 0
        %1575 = vmatprep.subr.bf16.mxu0 0
        %1576 = vmatpush1.bf16.msra.mxu0 0
        %1577 = vmatprep.subr.bf16.mxu0 0
        %1578 = vmatpush1.bf16.msra.mxu0 0
        %1579 = vmatprep.subr.bf16.mxu0 0
        %1580 = vmatpush1.bf16.msra.mxu0 0
        %1581 = vmatprep.subr.bf16.mxu0 0
        %1582 = vmatpush1.bf16.msra.mxu0 0
        %1583 = vmatprep.subr.bf16.mxu0 0
        %1584 = vmatpush1.bf16.msra.mxu0 0
        %1585 = vmatprep.subr.bf16.mxu0 0
        %1586 = vmatpush1.bf16.msra.mxu0 0
        %1587 = vmatprep.subr.bf16.mxu0 0
        %1588 = vmatpush1.bf16.msra.mxu0 0
        %1589 = vmatprep.subr.bf16.mxu0 0
        %1590 = vmatpush1.bf16.msra.mxu0 0
        %1591 = vmatprep.subr.bf16.mxu0 0
        %1592 = vmatpush1.bf16.msra.mxu0 0
        %1593 = vmatprep.subr.bf16.mxu0 0
        %1594 = vmatpush1.bf16.msra.mxu0 0
        %1595 = vmatprep.subr.bf16.mxu0 0
        %1596 = vmatpush1.bf16.msra.mxu0 0
        %1597 = vmatprep.subr.bf16.mxu0 0
        %1598 = vmatpush1.bf16.msra.mxu0 0
        %1599 = vmatprep.subr.bf16.mxu0 0
        %1600 = vmatpush1.bf16.msra.mxu0 0
        %1601 = vmatprep.mubr.bf16.mxu0 0
        %1602 = vmatmul.mubr.bf16.gmra.mrb[0].mxu0 %v1564
        %v1603 = vpop.f32.mrb[0].mxu0
        %v1604 = vadd.f32 0.0, %v1603
        %v1605 = vpop.f32.mrb[0].mxu0
        %v1606 = vpop.f32.mrb[0].mxu0
        %v1607 = vpop.f32.mrb[0].mxu0
        %1608 = vdwg.mxu0
        %1609 = vrot.lane.b32.xlu0 %v1154, 64
        %v1610 = vpop.permute.xlu0 %1609
        %1611 = vrot.lane.b32.xlu0 %v1156, 64
        %v1612 = vpop.permute.xlu0 %1611
        %v1614 = vsel %vm1172, %v1610, 0
        %v1617 = vsel %vm1172, %v1612, 0
        %1619 = vmatprep.subr.bf16.mxu0 0
        %1620 = vmatpush1.bf16.xpose.msra.mxu0 %v1617
        %1621 = vmatprep.subr.bf16.mxu0 0
        %1622 = vmatpush1.bf16.xpose.msra.mxu0 0
        %1623 = vmatprep.subr.bf16.mxu0 0
        %1624 = vmatpush1.bf16.xpose.msra.mxu0 0
        %1625 = vmatprep.subr.bf16.mxu0 0
        %1626 = vmatpush1.bf16.xpose.msra.mxu0 0
        %1627 = vmatprep.subr.bf16.mxu0 0
        %1628 = vmatpush1.bf16.xpose.msra.mxu0 0
        %1629 = vmatprep.subr.bf16.mxu0 0
        %1630 = vmatpush1.bf16.xpose.msra.mxu0 0
        %1631 = vmatprep.subr.bf16.mxu0 0
        %1632 = vmatpush1.bf16.xpose.msra.mxu0 0
        %1633 = vmatprep.subr.bf16.mxu0 0
        %1634 = vmatpush1.bf16.xpose.msra.mxu0 0
        %1635 = vmatprep.subr.bf16.mxu0 0
        %1636 = vmatpush1.bf16.xpose.msra.mxu0 0
        %1637 = vmatprep.subr.bf16.mxu0 0
        %1638 = vmatpush1.bf16.xpose.msra.mxu0 0
        %1639 = vmatprep.subr.bf16.mxu0 0
        %1640 = vmatpush1.bf16.xpose.msra.mxu0 0
        %1641 = vmatprep.subr.bf16.mxu0 0
        %1642 = vmatpush1.bf16.xpose.msra.mxu0 0
        %1643 = vmatprep.subr.bf16.mxu0 0
        %1644 = vmatpush1.bf16.xpose.msra.mxu0 0
        %1645 = vmatprep.subr.bf16.mxu0 0
        %1646 = vmatpush1.bf16.xpose.msra.mxu0 0
        %1647 = vmatprep.subr.bf16.mxu0 0
        %1648 = vmatpush1.bf16.xpose.msra.mxu0 0
        %1649 = vmatprep.subr.bf16.mxu0 0
        %1650 = vmatpush1.bf16.xpose.msra.mxu0 0
        %1651 = vmatprep.mubr.bf16.mxu0 0
        %1652 = vmatmul.mubr.bf16.gmra.mrb[0].mxu0 %v1614
        %v1653 = vpop.f32.mrb[0].mxu0
        %v1654 = vadd.f32 %v1165, %v1653
        %v1655 = vpop.f32.mrb[0].mxu0
        %v1656 = vpop.f32.mrb[0].mxu0
        %v1657 = vpop.f32.mrb[0].mxu0
        %1658 = vdwg.mxu0
        %1659 = vrot.lane.b32.xlu0 %v1155, 64
        %v1660 = vpop.permute.xlu0 %1659
        %1661 = vrot.lane.b32.xlu0 %v1157, 64
        %v1662 = vpop.permute.xlu0 %1661
        %v1664 = vsel %vm1172, %v1660, 0
        %v1667 = vsel %vm1172, %v1662, 0
        %1669 = vmatprep.subr.bf16.mxu0 0
        %1670 = vmatpush1.bf16.xpose.msra.mxu0 %v1667
        %1671 = vmatprep.subr.bf16.mxu0 0
        %1672 = vmatpush1.bf16.xpose.msra.mxu0 0
        %1673 = vmatprep.subr.bf16.mxu0 0
        %1674 = vmatpush1.bf16.xpose.msra.mxu0 0
        %1675 = vmatprep.subr.bf16.mxu0 0
        %1676 = vmatpush1.bf16.xpose.msra.mxu0 0
        %1677 = vmatprep.subr.bf16.mxu0 0
        %1678 = vmatpush1.bf16.xpose.msra.mxu0 0
        %1679 = vmatprep.subr.bf16.mxu0 0
        %1680 = vmatpush1.bf16.xpose.msra.mxu0 0
        %1681 = vmatprep.subr.bf16.mxu0 0
        %1682 = vmatpush1.bf16.xpose.msra.mxu0 0
        %1683 = vmatprep.subr.bf16.mxu0 0
        %1684 = vmatpush1.bf16.xpose.msra.mxu0 0
        %1685 = vmatprep.subr.bf16.mxu0 0
        %1686 = vmatpush1.bf16.xpose.msra.mxu0 0
        %1687 = vmatprep.subr.bf16.mxu0 0
        %1688 = vmatpush1.bf16.xpose.msra.mxu0 0
        %1689 = vmatprep.subr.bf16.mxu0 0
        %1690 = vmatpush1.bf16.xpose.msra.mxu0 0
        %1691 = vmatprep.subr.bf16.mxu0 0
        %1692 = vmatpush1.bf16.xpose.msra.mxu0 0
        %1693 = vmatprep.subr.bf16.mxu0 0
        %1694 = vmatpush1.bf16.xpose.msra.mxu0 0
        %1695 = vmatprep.subr.bf16.mxu0 0
        %1696 = vmatpush1.bf16.xpose.msra.mxu0 0
        %1697 = vmatprep.subr.bf16.mxu0 0
        %1698 = vmatpush1.bf16.xpose.msra.mxu0 0
        %1699 = vmatprep.subr.bf16.mxu0 0
        %1700 = vmatpush1.bf16.xpose.msra.mxu0 0
        %1701 = vmatprep.mubr.bf16.mxu0 0
        %1702 = vmatmul.mubr.bf16.gmra.mrb[0].mxu0 %v1664
        %v1703 = vpop.f32.mrb[0].mxu0
        %v1704 = vadd.f32 %v1169, %v1703
        %v1705 = vpop.f32.mrb[0].mxu0
        %v1706 = vpop.f32.mrb[0].mxu0
        %v1707 = vpop.f32.mrb[0].mxu0
        %1708 = vdwg.mxu0
        %v1709 = vsel %vm1265, %v1654, -inf
        %1710 = vmax.xlane.f32.xlu0 %v1709
        %v1711 = vpop.xlane.xlu0 %1710
        %v1712 = vsel %vm1265, %v1704, -inf
        %1713 = vmax.xlane.f32.xlu0 %v1712
        %v1714 = vpop.xlane.xlu0 %1713
        %v1715 = vsub.f32 %v1654, %v1711
        %v1716 = vsub.f32 %v1704, %v1714
        %v1717 = vmul.f32 %v1715, 1.442695
        %v1718 = vpow.pop %v1717
        %v1719 = vmul.f32 %v1716, 1.442695
        %v1720 = vpow.pop %v1719
        %v1721 = vsel %vm1265, %v1718, 0.0
        %1722 = vadd.xlane.f32.xlu0 %v1721
        %v1723 = vpop.xlane.xlu0 %1722
        %v1724 = vsel %vm1265, %v1720, 0.0
        %1725 = vadd.xlane.f32.xlu0 %v1724
        %v1726 = vpop.xlane.xlu0 %1725
        %v1727 = vrcp.pop %v1723
        %v1728 = vrcp.pop %v1726
        %v1729 = vmul.f32 %v1718, %v1727
        %v1730 = vmul.f32 %v1720, %v1728
        %v1731 = vpack.c.bf16 %v1729, %v1729
        %v1732 = vpack.c.bf16 %v1730, %v1730
        %1733 = vrot.lane.b32.xlu0 %v1158, 64
        %v1734 = vpop.permute.xlu0 %1733
        %v1736 = vsel %vm1265, %v1731, 0
        %v1739 = vsel %vm1293, %v1734, 0
        %1741 = vmatprep.subr.bf16.mxu0 0
        %1742 = vmatpush1.bf16.msra.mxu0 %v1739
        %1743 = vmatprep.subr.bf16.mxu0 0
        %1744 = vmatpush1.bf16.msra.mxu0 0
        %1745 = vmatprep.subr.bf16.mxu0 0
        %1746 = vmatpush1.bf16.msra.mxu0 0
        %1747 = vmatprep.subr.bf16.mxu0 0
        %1748 = vmatpush1.bf16.msra.mxu0 0
        %1749 = vmatprep.subr.bf16.mxu0 0
        %1750 = vmatpush1.bf16.msra.mxu0 0
        %1751 = vmatprep.subr.bf16.mxu0 0
        %1752 = vmatpush1.bf16.msra.mxu0 0
        %1753 = vmatprep.subr.bf16.mxu0 0
        %1754 = vmatpush1.bf16.msra.mxu0 0
        %1755 = vmatprep.subr.bf16.mxu0 0
        %1756 = vmatpush1.bf16.msra.mxu0 0
        %1757 = vmatprep.subr.bf16.mxu0 0
        %1758 = vmatpush1.bf16.msra.mxu0 0
        %1759 = vmatprep.subr.bf16.mxu0 0
        %1760 = vmatpush1.bf16.msra.mxu0 0
        %1761 = vmatprep.subr.bf16.mxu0 0
        %1762 = vmatpush1.bf16.msra.mxu0 0
        %1763 = vmatprep.subr.bf16.mxu0 0
        %1764 = vmatpush1.bf16.msra.mxu0 0
        %1765 = vmatprep.subr.bf16.mxu0 0
        %1766 = vmatpush1.bf16.msra.mxu0 0
        %1767 = vmatprep.subr.bf16.mxu0 0
        %1768 = vmatpush1.bf16.msra.mxu0 0
        %1769 = vmatprep.subr.bf16.mxu0 0
        %1770 = vmatpush1.bf16.msra.mxu0 0
        %1771 = vmatprep.subr.bf16.mxu0 0
        %1772 = vmatpush1.bf16.msra.mxu0 0
        %1773 = vmatprep.mubr.bf16.mxu0 0
        %1774 = vmatmul.mubr.bf16.gmra.mrb[0].mxu0 %v1736
        %v1775 = vpop.f32.mrb[0].mxu0
        %v1776 = vadd.f32 0.0, %v1775
        %v1777 = vpop.f32.mrb[0].mxu0
        %v1778 = vpop.f32.mrb[0].mxu0
        %v1779 = vpop.f32.mrb[0].mxu0
        %1780 = vdwg.mxu0
        %1781 = vrot.lane.b32.xlu0 %v1159, 64
        %v1782 = vpop.permute.xlu0 %1781
        %v1784 = vsel %vm1265, %v1732, 0
        %v1787 = vsel %vm1293, %v1782, 0
        %1789 = vmatprep.subr.bf16.mxu0 0
        %1790 = vmatpush1.bf16.msra.mxu0 %v1787
        %1791 = vmatprep.subr.bf16.mxu0 0
        %1792 = vmatpush1.bf16.msra.mxu0 0
        %1793 = vmatprep.subr.bf16.mxu0 0
        %1794 = vmatpush1.bf16.msra.mxu0 0
        %1795 = vmatprep.subr.bf16.mxu0 0
        %1796 = vmatpush1.bf16.msra.mxu0 0
        %1797 = vmatprep.subr.bf16.mxu0 0
        %1798 = vmatpush1.bf16.msra.mxu0 0
        %1799 = vmatprep.subr.bf16.mxu0 0
        %1800 = vmatpush1.bf16.msra.mxu0 0
        %1801 = vmatprep.subr.bf16.mxu0 0
        %1802 = vmatpush1.bf16.msra.mxu0 0
        %1803 = vmatprep.subr.bf16.mxu0 0
        %1804 = vmatpush1.bf16.msra.mxu0 0
        %1805 = vmatprep.subr.bf16.mxu0 0
        %1806 = vmatpush1.bf16.msra.mxu0 0
        %1807 = vmatprep.subr.bf16.mxu0 0
        %1808 = vmatpush1.bf16.msra.mxu0 0
        %1809 = vmatprep.subr.bf16.mxu0 0
        %1810 = vmatpush1.bf16.msra.mxu0 0
        %1811 = vmatprep.subr.bf16.mxu0 0
        %1812 = vmatpush1.bf16.msra.mxu0 0
        %1813 = vmatprep.subr.bf16.mxu0 0
        %1814 = vmatpush1.bf16.msra.mxu0 0
        %1815 = vmatprep.subr.bf16.mxu0 0
        %1816 = vmatpush1.bf16.msra.mxu0 0
        %1817 = vmatprep.subr.bf16.mxu0 0
        %1818 = vmatpush1.bf16.msra.mxu0 0
        %1819 = vmatprep.subr.bf16.mxu0 0
        %1820 = vmatpush1.bf16.msra.mxu0 0
        %1821 = vmatprep.mubr.bf16.mxu0 0
        %1822 = vmatmul.mubr.bf16.gmra.mrb[0].mxu0 %v1784
        %v1823 = vpop.f32.mrb[0].mxu0
        %v1824 = vadd.f32 0.0, %v1823
        %v1825 = vpop.f32.mrb[0].mxu0
        %v1826 = vpop.f32.mrb[0].mxu0
        %v1827 = vpop.f32.mrb[0].mxu0
        %1828 = vdwg.mxu0
        %1829 = vrot.lane.b32.xlu0 %v1154, 32
        %v1830 = vpop.permute.xlu0 %1829
        %1831 = vrot.lane.b32.xlu0 %v1156, 32
        %v1832 = vpop.permute.xlu0 %1831
        %v1834 = vsel %vm1172, %v1830, 0
        %v1837 = vsel %vm1172, %v1832, 0
        %1839 = vmatprep.subr.bf16.mxu0 0
        %1840 = vmatpush1.bf16.xpose.msra.mxu0 %v1837
        %1841 = vmatprep.subr.bf16.mxu0 0
        %1842 = vmatpush1.bf16.xpose.msra.mxu0 0
        %1843 = vmatprep.subr.bf16.mxu0 0
        %1844 = vmatpush1.bf16.xpose.msra.mxu0 0
        %1845 = vmatprep.subr.bf16.mxu0 0
        %1846 = vmatpush1.bf16.xpose.msra.mxu0 0
        %1847 = vmatprep.subr.bf16.mxu0 0
        %1848 = vmatpush1.bf16.xpose.msra.mxu0 0
        %1849 = vmatprep.subr.bf16.mxu0 0
        %1850 = vmatpush1.bf16.xpose.msra.mxu0 0
        %1851 = vmatprep.subr.bf16.mxu0 0
        %1852 = vmatpush1.bf16.xpose.msra.mxu0 0
        %1853 = vmatprep.subr.bf16.mxu0 0
        %1854 = vmatpush1.bf16.xpose.msra.mxu0 0
        %1855 = vmatprep.subr.bf16.mxu0 0
        %1856 = vmatpush1.bf16.xpose.msra.mxu0 0
        %1857 = vmatprep.subr.bf16.mxu0 0
        %1858 = vmatpush1.bf16.xpose.msra.mxu0 0
        %1859 = vmatprep.subr.bf16.mxu0 0
        %1860 = vmatpush1.bf16.xpose.msra.mxu0 0
        %1861 = vmatprep.subr.bf16.mxu0 0
        %1862 = vmatpush1.bf16.xpose.msra.mxu0 0
        %1863 = vmatprep.subr.bf16.mxu0 0
        %1864 = vmatpush1.bf16.xpose.msra.mxu0 0
        %1865 = vmatprep.subr.bf16.mxu0 0
        %1866 = vmatpush1.bf16.xpose.msra.mxu0 0
        %1867 = vmatprep.subr.bf16.mxu0 0
        %1868 = vmatpush1.bf16.xpose.msra.mxu0 0
        %1869 = vmatprep.subr.bf16.mxu0 0
        %1870 = vmatpush1.bf16.xpose.msra.mxu0 0
        %1871 = vmatprep.mubr.bf16.mxu0 0
        %1872 = vmatmul.mubr.bf16.gmra.mrb[0].mxu0 %v1834
        %v1873 = vpop.f32.mrb[0].mxu0
        %v1874 = vadd.f32 %v1165, %v1873
        %v1875 = vpop.f32.mrb[0].mxu0
        %v1876 = vpop.f32.mrb[0].mxu0
        %v1877 = vpop.f32.mrb[0].mxu0
        %1878 = vdwg.mxu0
        %1879 = vrot.lane.b32.xlu0 %v1155, 32
        %v1880 = vpop.permute.xlu0 %1879
        %1881 = vrot.lane.b32.xlu0 %v1157, 32
        %v1882 = vpop.permute.xlu0 %1881
        %v1884 = vsel %vm1172, %v1880, 0
        %v1887 = vsel %vm1172, %v1882, 0
        %1889 = vmatprep.subr.bf16.mxu0 0
        %1890 = vmatpush1.bf16.xpose.msra.mxu0 %v1887
        %1891 = vmatprep.subr.bf16.mxu0 0
        %1892 = vmatpush1.bf16.xpose.msra.mxu0 0
        %1893 = vmatprep.subr.bf16.mxu0 0
        %1894 = vmatpush1.bf16.xpose.msra.mxu0 0
        %1895 = vmatprep.subr.bf16.mxu0 0
        %1896 = vmatpush1.bf16.xpose.msra.mxu0 0
        %1897 = vmatprep.subr.bf16.mxu0 0
        %1898 = vmatpush1.bf16.xpose.msra.mxu0 0
        %1899 = vmatprep.subr.bf16.mxu0 0
        %1900 = vmatpush1.bf16.xpose.msra.mxu0 0
        %1901 = vmatprep.subr.bf16.mxu0 0
        %1902 = vmatpush1.bf16.xpose.msra.mxu0 0
        %1903 = vmatprep.subr.bf16.mxu0 0
        %1904 = vmatpush1.bf16.xpose.msra.mxu0 0
        %1905 = vmatprep.subr.bf16.mxu0 0
        %1906 = vmatpush1.bf16.xpose.msra.mxu0 0
        %1907 = vmatprep.subr.bf16.mxu0 0
        %1908 = vmatpush1.bf16.xpose.msra.mxu0 0
        %1909 = vmatprep.subr.bf16.mxu0 0
        %1910 = vmatpush1.bf16.xpose.msra.mxu0 0
        %1911 = vmatprep.subr.bf16.mxu0 0
        %1912 = vmatpush1.bf16.xpose.msra.mxu0 0
        %1913 = vmatprep.subr.bf16.mxu0 0
        %1914 = vmatpush1.bf16.xpose.msra.mxu0 0
        %1915 = vmatprep.subr.bf16.mxu0 0
        %1916 = vmatpush1.bf16.xpose.msra.mxu0 0
        %1917 = vmatprep.subr.bf16.mxu0 0
        %1918 = vmatpush1.bf16.xpose.msra.mxu0 0
        %1919 = vmatprep.subr.bf16.mxu0 0
        %1920 = vmatpush1.bf16.xpose.msra.mxu0 0
        %1921 = vmatprep.mubr.bf16.mxu0 0
        %1922 = vmatmul.mubr.bf16.gmra.mrb[0].mxu0 %v1884
        %v1923 = vpop.f32.mrb[0].mxu0
        %v1924 = vadd.f32 %v1169, %v1923
        %v1925 = vpop.f32.mrb[0].mxu0
        %v1926 = vpop.f32.mrb[0].mxu0
        %v1927 = vpop.f32.mrb[0].mxu0
        %1928 = vdwg.mxu0
        %v1929 = vsel %vm1265, %v1874, -inf
        %1930 = vmax.xlane.f32.xlu0 %v1929
        %v1931 = vpop.xlane.xlu0 %1930
        %v1932 = vsel %vm1265, %v1924, -inf
        %1933 = vmax.xlane.f32.xlu0 %v1932
        %v1934 = vpop.xlane.xlu0 %1933
        %v1935 = vsub.f32 %v1874, %v1931
        %v1936 = vsub.f32 %v1924, %v1934
        %v1937 = vmul.f32 %v1935, 1.442695
        %v1938 = vpow.pop %v1937
        %v1939 = vmul.f32 %v1936, 1.442695
        %v1940 = vpow.pop %v1939
        %v1941 = vsel %vm1265, %v1938, 0.0
        %1942 = vadd.xlane.f32.xlu0 %v1941
        %v1943 = vpop.xlane.xlu0 %1942
        %v1944 = vsel %vm1265, %v1940, 0.0
        %1945 = vadd.xlane.f32.xlu0 %v1944
        %v1946 = vpop.xlane.xlu0 %1945
        %v1947 = vrcp.pop %v1943
        %v1948 = vrcp.pop %v1946
        %v1949 = vmul.f32 %v1938, %v1947
        %v1950 = vmul.f32 %v1940, %v1948
        %v1951 = vpack.c.bf16 %v1949, %v1949
        %v1952 = vpack.c.bf16 %v1950, %v1950
        %1953 = vrot.lane.b32.xlu0 %v1158, 32
        %v1954 = vpop.permute.xlu0 %1953
        %v1956 = vsel %vm1265, %v1951, 0
        %v1959 = vsel %vm1293, %v1954, 0
        %1961 = vmatprep.subr.bf16.mxu0 0
        %1962 = vmatpush1.bf16.msra.mxu0 %v1959
        %1963 = vmatprep.subr.bf16.mxu0 0
        %1964 = vmatpush1.bf16.msra.mxu0 0
        %1965 = vmatprep.subr.bf16.mxu0 0
        %1966 = vmatpush1.bf16.msra.mxu0 0
        %1967 = vmatprep.subr.bf16.mxu0 0
        %1968 = vmatpush1.bf16.msra.mxu0 0
        %1969 = vmatprep.subr.bf16.mxu0 0
        %1970 = vmatpush1.bf16.msra.mxu0 0
        %1971 = vmatprep.subr.bf16.mxu0 0
        %1972 = vmatpush1.bf16.msra.mxu0 0
        %1973 = vmatprep.subr.bf16.mxu0 0
        %1974 = vmatpush1.bf16.msra.mxu0 0
        %1975 = vmatprep.subr.bf16.mxu0 0
        %1976 = vmatpush1.bf16.msra.mxu0 0
        %1977 = vmatprep.subr.bf16.mxu0 0
        %1978 = vmatpush1.bf16.msra.mxu0 0
        %1979 = vmatprep.subr.bf16.mxu0 0
        %1980 = vmatpush1.bf16.msra.mxu0 0
        %1981 = vmatprep.subr.bf16.mxu0 0
        %1982 = vmatpush1.bf16.msra.mxu0 0
        %1983 = vmatprep.subr.bf16.mxu0 0
        %1984 = vmatpush1.bf16.msra.mxu0 0
        %1985 = vmatprep.subr.bf16.mxu0 0
        %1986 = vmatpush1.bf16.msra.mxu0 0
        %1987 = vmatprep.subr.bf16.mxu0 0
        %1988 = vmatpush1.bf16.msra.mxu0 0
        %1989 = vmatprep.subr.bf16.mxu0 0
        %1990 = vmatpush1.bf16.msra.mxu0 0
        %1991 = vmatprep.subr.bf16.mxu0 0
        %1992 = vmatpush1.bf16.msra.mxu0 0
        %1993 = vmatprep.mubr.bf16.mxu0 0
        %1994 = vmatmul.mubr.bf16.gmra.mrb[0].mxu0 %v1956
        %v1995 = vpop.f32.mrb[0].mxu0
        %v1996 = vadd.f32 0.0, %v1995
        %v1997 = vpop.f32.mrb[0].mxu0
        %v1998 = vpop.f32.mrb[0].mxu0
        %v1999 = vpop.f32.mrb[0].mxu0
        %2000 = vdwg.mxu0
        %2001 = vrot.lane.b32.xlu0 %v1159, 32
        %v2002 = vpop.permute.xlu0 %2001
        %v2004 = vsel %vm1265, %v1952, 0
        %v2007 = vsel %vm1293, %v2002, 0
        %2009 = vmatprep.subr.bf16.mxu0 0
        %2010 = vmatpush1.bf16.msra.mxu0 %v2007
        %2011 = vmatprep.subr.bf16.mxu0 0
        %2012 = vmatpush1.bf16.msra.mxu0 0
        %2013 = vmatprep.subr.bf16.mxu0 0
        %2014 = vmatpush1.bf16.msra.mxu0 0
        %2015 = vmatprep.subr.bf16.mxu0 0
        %2016 = vmatpush1.bf16.msra.mxu0 0
        %2017 = vmatprep.subr.bf16.mxu0 0
        %2018 = vmatpush1.bf16.msra.mxu0 0
        %2019 = vmatprep.subr.bf16.mxu0 0
        %2020 = vmatpush1.bf16.msra.mxu0 0
        %2021 = vmatprep.subr.bf16.mxu0 0
        %2022 = vmatpush1.bf16.msra.mxu0 0
        %2023 = vmatprep.subr.bf16.mxu0 0
        %2024 = vmatpush1.bf16.msra.mxu0 0
        %2025 = vmatprep.subr.bf16.mxu0 0
        %2026 = vmatpush1.bf16.msra.mxu0 0
        %2027 = vmatprep.subr.bf16.mxu0 0
        %2028 = vmatpush1.bf16.msra.mxu0 0
        %2029 = vmatprep.subr.bf16.mxu0 0
        %2030 = vmatpush1.bf16.msra.mxu0 0
        %2031 = vmatprep.subr.bf16.mxu0 0
        %2032 = vmatpush1.bf16.msra.mxu0 0
        %2033 = vmatprep.subr.bf16.mxu0 0
        %2034 = vmatpush1.bf16.msra.mxu0 0
        %2035 = vmatprep.subr.bf16.mxu0 0
        %2036 = vmatpush1.bf16.msra.mxu0 0
        %2037 = vmatprep.subr.bf16.mxu0 0
        %2038 = vmatpush1.bf16.msra.mxu0 0
        %2039 = vmatprep.subr.bf16.mxu0 0
        %2040 = vmatpush1.bf16.msra.mxu0 0
        %2041 = vmatprep.mubr.bf16.mxu0 0
        %2042 = vmatmul.mubr.bf16.gmra.mrb[0].mxu0 %v2004
        %v2043 = vpop.f32.mrb[0].mxu0
        %v2044 = vadd.f32 0.0, %v2043
        %v2045 = vpop.f32.mrb[0].mxu0
        %v2046 = vpop.f32.mrb[0].mxu0
        %v2047 = vpop.f32.mrb[0].mxu0
        %2048 = vdwg.mxu0
        %2051 = vrot.lane.b32.xlu0 %v1555, 32
        %v2052 = vpop.permute.xlu0 %2051
        %2053 = vrot.lane.b32.xlu0 %v1604, 32
        %v2054 = vpop.permute.xlu0 %2053
        %2059 = vrot.lane.b32.xlu0 %v1776, 64
        %v2060 = vpop.permute.xlu0 %2059
        %2061 = vrot.lane.b32.xlu0 %v1824, 64
        %v2062 = vpop.permute.xlu0 %2061
        %2067 = vrot.lane.b32.xlu0 %v1996, 96
        %v2068 = vpop.permute.xlu0 %2067
        %2069 = vrot.lane.b32.xlu0 %v2044, 96
        %v2070 = vpop.permute.xlu0 %2069
        %v2073 = vsel %vm1172, %v1332, %v2052
        %v2074 = vsel %vm1172, %v1378, %v2054
        %vm2075 = vcmask 523264
        %v2076 = vsel %vm2075, %v2073, %v2060
        %v2077 = vsel %vm2075, %v2074, %v2062
        %vm2078 = vcmask 785408
        %v2079 = vsel %vm2078, %v2076, %v2068
        %v2080 = vsel %vm2078, %v2077, %v2070
        %v2081 = vpack.c.bf16 %v2080, %v2079
        %v2083 = vlaneseq
        %v2084 = vshrl.u32 %v2083, 7
        %v2085 = vsub.s32 0, %v2084
        %v2086 = vrot.slane %v881, %v2085
        %v2104 = vunpack.c.l.b16 %v768
        %v2105 = vunpack.c.l.b16 %v769
        %v2106 = vunpack.c.l.b16 %v770
        %v2107 = vunpack.c.l.b16 %v771
        %v2108 = vunpack.c.l.b16 %v772
        %v2109 = vunpack.c.l.b16 %v773
        %v2110 = vunpack.c.l.b16 %v774
        %v2111 = vunpack.c.l.b16 %v775
        %v2112 = vunpack.c.l.b16 %v776
        %v2113 = vunpack.c.l.b16 %v777
        %v2114 = vunpack.c.l.b16 %v778
        %v2115 = vunpack.c.l.b16 %v779
        %v2116 = vunpack.c.l.b16 %v780
        %v2117 = vunpack.c.l.b16 %v781
        %v2118 = vunpack.c.l.b16 %v782
        %v2119 = vunpack.c.l.b16 %v783
        %v2120 = vpack.c.b16 %v2105, %v2104
        %v2121 = vpack.c.b16 %v2107, %v2106
        %v2122 = vpack.c.b16 %v2109, %v2108
        %v2123 = vpack.c.b16 %v2111, %v2110
        %v2124 = vpack.c.b16 %v2113, %v2112
        %v2125 = vpack.c.b16 %v2115, %v2114
        %v2126 = vpack.c.b16 %v2117, %v2116
        %v2127 = vpack.c.b16 %v2119, %v2118
        %2136 = vmatprep.subr.bf16.mxu0 0
        %2137 = vmatpush1.bf16.msra.mxu0 %v2120
        %2138 = vmatprep.subr.bf16.mxu0 0
        %2139 = vmatpush1.bf16.msra.mxu0 %v2121
        %2140 = vmatprep.subr.bf16.mxu0 0
        %2141 = vmatpush1.bf16.msra.mxu0 %v2122
        %2142 = vmatprep.subr.bf16.mxu0 0
        %2143 = vmatpush1.bf16.msra.mxu0 %v2123
        %2144 = vmatprep.subr.bf16.mxu0 0
        %2145 = vmatpush1.bf16.msra.mxu0 %v2124
        %2146 = vmatprep.subr.bf16.mxu0 0
        %2147 = vmatpush1.bf16.msra.mxu0 %v2125
        %2148 = vmatprep.subr.bf16.mxu0 0
        %2149 = vmatpush1.bf16.msra.mxu0 %v2126
        %2150 = vmatprep.subr.bf16.mxu0 0
        %2151 = vmatpush1.bf16.msra.mxu0 %v2127
        %2152 = vmatprep.subr.bf16.mxu0 0
        %2153 = vmatpush1.bf16.msra.mxu0 0
        %2154 = vmatprep.subr.bf16.mxu0 0
        %2155 = vmatpush1.bf16.msra.mxu0 0
        %2156 = vmatprep.subr.bf16.mxu0 0
        %2157 = vmatpush1.bf16.msra.mxu0 0
        %2158 = vmatprep.subr.bf16.mxu0 0
        %2159 = vmatpush1.bf16.msra.mxu0 0
        %2160 = vmatprep.subr.bf16.mxu0 0
        %2161 = vmatpush1.bf16.msra.mxu0 0
        %2162 = vmatprep.subr.bf16.mxu0 0
        %2163 = vmatpush1.bf16.msra.mxu0 0
        %2164 = vmatprep.subr.bf16.mxu0 0
        %2165 = vmatpush1.bf16.msra.mxu0 0
        %2166 = vmatprep.subr.bf16.mxu0 0
        %2167 = vmatpush1.bf16.msra.mxu0 0
        %2168 = vmatprep.mubr.bf16.mxu0 0
        %2169 = vmatmul.mubr.bf16.gmra.mrb[0].mxu0 %v2081
        %v2170 = vpop.f32.mrb[0].mxu0
        %v2171 = vadd.f32 %v2086, %v2170
        %v2172 = vpop.f32.mrb[0].mxu0
        %v2173 = vpop.f32.mrb[0].mxu0
        %v2174 = vadd.f32 %v2086, %v2173
        %v2175 = vpop.f32.mrb[0].mxu0
        %2176 = vdwg.mxu0
        %v2177 = vadd.f32 %v724, %v2171
        %v2178 = vadd.f32 %v725, %v2174
        %2179 = vadd.xlane.f32.xlu0 %v2177
        %v2180 = vpop.xlane.xlu0 %2179
        %2181 = vadd.xlane.f32.xlu0 %v2178
        %v2182 = vpop.xlane.xlu0 %2181
        %v2183 = vmul.f32 %v2180, %v888
        %v2184 = vmul.f32 %v2182, %v888
        %v2185 = vsub.f32 %v2177, %v2183
        %v2186 = vsub.f32 %v2178, %v2184
        %v2187 = vmul.f32 %v2185, %v2185
        %v2188 = vmul.f32 %v2186, %v2186
        %2189 = vadd.xlane.f32.xlu0 %v2187
        %v2190 = vpop.xlane.xlu0 %2189
        %2191 = vadd.xlane.f32.xlu0 %v2188
        %v2192 = vpop.xlane.xlu0 %2191
        %v2193 = vmul.f32 %v2190, %v888
        %v2194 = vmul.f32 %v2192, %v888
        %v2195 = vadd.f32 %v2193, 1e-05
        %v2196 = vadd.f32 %v2194, 1e-05
        %v2197 = vrsqrt.pop %v2195
        %v2198 = vrsqrt.pop %v2196
        %v2199 = vmul.f32 %v2185, %v2197
        %v2200 = vmul.f32 %v2186, %v2198
        %v2202 = vlaneseq
        %v2203 = vshrl.u32 %v2202, 7
        %v2204 = vsub.s32 0, %v2203
        %v2205 = vrot.slane %v732, %v2204
        %v2207 = vmul.f32 %v2199, %v2205
        %v2208 = vmul.f32 %v2200, %v2205
        %v2210 = vlaneseq
        %v2211 = vshrl.u32 %v2210, 7
        %v2212 = vsub.s32 0, %v2211
        %v2213 = vrot.slane %v733, %v2212
        %v2215 = vadd.f32 %v2207, %v2213
        %v2216 = vadd.f32 %v2208, %v2213
        %v2217 = vpack.c.bf16 %v2216, %v2215
        %v2219 = vlaneseq
        %v2220 = vshrl.u32 %v2219, 7
        %v2221 = vsub.s32 0, %v2220
        %v2222 = vrot.slane %v882, %v2221
        %v2223 = vlaneseq
        %v2224 = vshrl.u32 %v2223, 7
        %v2225 = vsub.s32 1, %v2224
        %v2226 = vrot.slane %v882, %v2225
        %v2227 = vlaneseq
        %v2228 = vshrl.u32 %v2227, 7
        %v2229 = vsub.s32 2, %v2228
        %v2230 = vrot.slane %v882, %v2229
        %v2231 = vlaneseq
        %v2232 = vshrl.u32 %v2231, 7
        %v2233 = vsub.s32 3, %v2232
        %v2234 = vrot.slane %v882, %v2233
        %v2271 = vunpack.c.l.b16 %v784
        %v2272 = vunpack.c.h.b16 %v784
        %v2273 = vunpack.c.l.b16 %v785
        %v2274 = vunpack.c.h.b16 %v785
        %v2275 = vunpack.c.l.b16 %v786
        %v2276 = vunpack.c.h.b16 %v786
        %v2277 = vunpack.c.l.b16 %v787
        %v2278 = vunpack.c.h.b16 %v787
        %v2279 = vunpack.c.l.b16 %v788
        %v2280 = vunpack.c.h.b16 %v788
        %v2281 = vunpack.c.l.b16 %v789
        %v2282 = vunpack.c.h.b16 %v789
        %v2283 = vunpack.c.l.b16 %v790
        %v2284 = vunpack.c.h.b16 %v790
        %v2285 = vunpack.c.l.b16 %v791
        %v2286 = vunpack.c.h.b16 %v791
        %v2287 = vunpack.c.l.b16 %v792
        %v2288 = vunpack.c.h.b16 %v792
        %v2289 = vunpack.c.l.b16 %v793
        %v2290 = vunpack.c.h.b16 %v793
        %v2291 = vunpack.c.l.b16 %v794
        %v2292 = vunpack.c.h.b16 %v794
        %v2293 = vunpack.c.l.b16 %v795
        %v2294 = vunpack.c.h.b16 %v795
        %v2295 = vunpack.c.l.b16 %v796
        %v2296 = vunpack.c.h.b16 %v796
        %v2297 = vunpack.c.l.b16 %v797
        %v2298 = vunpack.c.h.b16 %v797
        %v2299 = vunpack.c.l.b16 %v798
        %v2300 = vunpack.c.h.b16 %v798
        %v2301 = vunpack.c.l.b16 %v799
        %v2302 = vunpack.c.h.b16 %v799
        %v2303 = vunpack.c.l.b16 %v800
        %v2304 = vunpack.c.h.b16 %v800
        %v2305 = vunpack.c.l.b16 %v801
        %v2306 = vunpack.c.h.b16 %v801
        %v2307 = vunpack.c.l.b16 %v802
        %v2308 = vunpack.c.h.b16 %v802
        %v2309 = vunpack.c.l.b16 %v803
        %v2310 = vunpack.c.h.b16 %v803
        %v2311 = vunpack.c.l.b16 %v804
        %v2312 = vunpack.c.h.b16 %v804
        %v2313 = vunpack.c.l.b16 %v805
        %v2314 = vunpack.c.h.b16 %v805
        %v2315 = vunpack.c.l.b16 %v806
        %v2316 = vunpack.c.h.b16 %v806
        %v2317 = vunpack.c.l.b16 %v807
        %v2318 = vunpack.c.h.b16 %v807
        %v2319 = vunpack.c.l.b16 %v808
        %v2320 = vunpack.c.h.b16 %v808
        %v2321 = vunpack.c.l.b16 %v809
        %v2322 = vunpack.c.h.b16 %v809
        %v2323 = vunpack.c.l.b16 %v810
        %v2324 = vunpack.c.h.b16 %v810
        %v2325 = vunpack.c.l.b16 %v811
        %v2326 = vunpack.c.h.b16 %v811
        %v2327 = vunpack.c.l.b16 %v812
        %v2328 = vunpack.c.h.b16 %v812
        %v2329 = vunpack.c.l.b16 %v813
        %v2330 = vunpack.c.h.b16 %v813
        %v2331 = vunpack.c.l.b16 %v814
        %v2332 = vunpack.c.h.b16 %v814
        %v2333 = vunpack.c.l.b16 %v815
        %v2334 = vunpack.c.h.b16 %v815
        %v2335 = vpack.c.b16 %v2275, %v2271
        %v2336 = vpack.c.b16 %v2276, %v2272
        %v2337 = vpack.c.b16 %v2277, %v2273
        %v2338 = vpack.c.b16 %v2278, %v2274
        %v2339 = vpack.c.b16 %v2283, %v2279
        %v2340 = vpack.c.b16 %v2284, %v2280
        %v2341 = vpack.c.b16 %v2285, %v2281
        %v2342 = vpack.c.b16 %v2286, %v2282
        %v2343 = vpack.c.b16 %v2291, %v2287
        %v2344 = vpack.c.b16 %v2292, %v2288
        %v2345 = vpack.c.b16 %v2293, %v2289
        %v2346 = vpack.c.b16 %v2294, %v2290
        %v2347 = vpack.c.b16 %v2299, %v2295
        %v2348 = vpack.c.b16 %v2300, %v2296
        %v2349 = vpack.c.b16 %v2301, %v2297
        %v2350 = vpack.c.b16 %v2302, %v2298
        %v2351 = vpack.c.b16 %v2307, %v2303
        %v2352 = vpack.c.b16 %v2308, %v2304
        %v2353 = vpack.c.b16 %v2309, %v2305
        %v2354 = vpack.c.b16 %v2310, %v2306
        %v2355 = vpack.c.b16 %v2315, %v2311
        %v2356 = vpack.c.b16 %v2316, %v2312
        %v2357 = vpack.c.b16 %v2317, %v2313
        %v2358 = vpack.c.b16 %v2318, %v2314
        %v2359 = vpack.c.b16 %v2323, %v2319
        %v2360 = vpack.c.b16 %v2324, %v2320
        %v2361 = vpack.c.b16 %v2325, %v2321
        %v2362 = vpack.c.b16 %v2326, %v2322
        %v2363 = vpack.c.b16 %v2331, %v2327
        %v2364 = vpack.c.b16 %v2332, %v2328
        %v2365 = vpack.c.b16 %v2333, %v2329
        %v2366 = vpack.c.b16 %v2334, %v2330
        %2399 = vmatprep.subr.bf16.mxu0 %v2336
        %2400 = vmatpush1.bf16.msra.mxu0 %v2335
        %2401 = vmatprep.subr.bf16.mxu0 %v2340
        %2402 = vmatpush1.bf16.msra.mxu0 %v2339
        %2403 = vmatprep.subr.bf16.mxu0 %v2344
        %2404 = vmatpush1.bf16.msra.mxu0 %v2343
        %2405 = vmatprep.subr.bf16.mxu0 %v2348
        %2406 = vmatpush1.bf16.msra.mxu0 %v2347
        %2407 = vmatprep.subr.bf16.mxu0 %v2352
        %2408 = vmatpush1.bf16.msra.mxu0 %v2351
        %2409 = vmatprep.subr.bf16.mxu0 %v2356
        %2410 = vmatpush1.bf16.msra.mxu0 %v2355
        %2411 = vmatprep.subr.bf16.mxu0 %v2360
        %2412 = vmatpush1.bf16.msra.mxu0 %v2359
        %2413 = vmatprep.subr.bf16.mxu0 %v2364
        %2414 = vmatpush1.bf16.msra.mxu0 %v2363
        %2415 = vmatprep.subr.bf16.mxu0 0
        %2416 = vmatpush1.bf16.msra.mxu0 0
        %2417 = vmatprep.subr.bf16.mxu0 0
        %2418 = vmatpush1.bf16.msra.mxu0 0
        %2419 = vmatprep.subr.bf16.mxu0 0
        %2420 = vmatpush1.bf16.msra.mxu0 0
        %2421 = vmatprep.subr.bf16.mxu0 0
        %2422 = vmatpush1.bf16.msra.mxu0 0
        %2423 = vmatprep.subr.bf16.mxu0 0
        %2424 = vmatpush1.bf16.msra.mxu0 0
        %2425 = vmatprep.subr.bf16.mxu0 0
        %2426 = vmatpush1.bf16.msra.mxu0 0
        %2427 = vmatprep.subr.bf16.mxu0 0
        %2428 = vmatpush1.bf16.msra.mxu0 0
        %2429 = vmatprep.subr.bf16.mxu0 0
        %2430 = vmatpush1.bf16.msra.mxu0 0
        %2431 = vmatprep.mubr.bf16.mxu0 0
        %2432 = vmatmul.mubr.bf16.gmra.mrb[0].mxu0 %v2217
        %v2433 = vpop.f32.mrb[0].mxu0
        %v2434 = vadd.f32 %v2222, %v2433
        %v2435 = vpop.f32.mrb[0].mxu0
        %v2436 = vadd.f32 %v2226, %v2435
        %v2437 = vpop.f32.mrb[0].mxu0
        %v2438 = vadd.f32 %v2222, %v2437
        %v2439 = vpop.f32.mrb[0].mxu0
        %v2440 = vadd.f32 %v2226, %v2439
        %2441 = vdwg.mxu0
        %2442 = vmatprep.subr.bf16.mxu0 %v2338
        %2443 = vmatpush1.bf16.msra.mxu0 %v2337
        %2444 = vmatprep.subr.bf16.mxu0 %v2342
        %2445 = vmatpush1.bf16.msra.mxu0 %v2341
        %2446 = vmatprep.subr.bf16.mxu0 %v2346
        %2447 = vmatpush1.bf16.msra.mxu0 %v2345
        %2448 = vmatprep.subr.bf16.mxu0 %v2350
        %2449 = vmatpush1.bf16.msra.mxu0 %v2349
        %2450 = vmatprep.subr.bf16.mxu0 %v2354
        %2451 = vmatpush1.bf16.msra.mxu0 %v2353
        %2452 = vmatprep.subr.bf16.mxu0 %v2358
        %2453 = vmatpush1.bf16.msra.mxu0 %v2357
        %2454 = vmatprep.subr.bf16.mxu0 %v2362
        %2455 = vmatpush1.bf16.msra.mxu0 %v2361
        %2456 = vmatprep.subr.bf16.mxu0 %v2366
        %2457 = vmatpush1.bf16.msra.mxu0 %v2365
        %2458 = vmatprep.subr.bf16.mxu0 0
        %2459 = vmatpush1.bf16.msra.mxu0 0
        %2460 = vmatprep.subr.bf16.mxu0 0
        %2461 = vmatpush1.bf16.msra.mxu0 0
        %2462 = vmatprep.subr.bf16.mxu0 0
        %2463 = vmatpush1.bf16.msra.mxu0 0
        %2464 = vmatprep.subr.bf16.mxu0 0
        %2465 = vmatpush1.bf16.msra.mxu0 0
        %2466 = vmatprep.subr.bf16.mxu0 0
        %2467 = vmatpush1.bf16.msra.mxu0 0
        %2468 = vmatprep.subr.bf16.mxu0 0
        %2469 = vmatpush1.bf16.msra.mxu0 0
        %2470 = vmatprep.subr.bf16.mxu0 0
        %2471 = vmatpush1.bf16.msra.mxu0 0
        %2472 = vmatprep.subr.bf16.mxu0 0
        %2473 = vmatpush1.bf16.msra.mxu0 0
        %2474 = vmatprep.mubr.bf16.mxu0 0
        %2475 = vmatmul.mubr.bf16.gmra.mrb[0].mxu0 %v2217
        %v2476 = vpop.f32.mrb[0].mxu0
        %v2477 = vadd.f32 %v2230, %v2476
        %v2478 = vpop.f32.mrb[0].mxu0
        %v2479 = vadd.f32 %v2234, %v2478
        %v2480 = vpop.f32.mrb[0].mxu0
        %v2481 = vadd.f32 %v2230, %v2480
        %v2482 = vpop.f32.mrb[0].mxu0
        %v2483 = vadd.f32 %v2234, %v2482
        %2484 = vdwg.mxu0
        %v2485 = vmul.f32 %v2434, -1.702
        %v2486 = vmul.f32 %v2436, -1.702
        %v2487 = vmul.f32 %v2477, -1.702
        %v2488 = vmul.f32 %v2479, -1.702
        %v2489 = vmul.f32 %v2438, -1.702
        %v2490 = vmul.f32 %v2440, -1.702
        %v2491 = vmul.f32 %v2481, -1.702
        %v2492 = vmul.f32 %v2483, -1.702
        %v2493 = vmul.f32 %v2485, 1.442695
        %v2494 = vpow.pop %v2493
        %v2495 = vmul.f32 %v2486, 1.442695
        %v2496 = vpow.pop %v2495
        %v2497 = vmul.f32 %v2487, 1.442695
        %v2498 = vpow.pop %v2497
        %v2499 = vmul.f32 %v2488, 1.442695
        %v2500 = vpow.pop %v2499
        %v2501 = vmul.f32 %v2489, 1.442695
        %v2502 = vpow.pop %v2501
        %v2503 = vmul.f32 %v2490, 1.442695
        %v2504 = vpow.pop %v2503
        %v2505 = vmul.f32 %v2491, 1.442695
        %v2506 = vpow.pop %v2505
        %v2507 = vmul.f32 %v2492, 1.442695
        %v2508 = vpow.pop %v2507
        %v2509 = vadd.f32 %v2494, 1.0
        %v2510 = vadd.f32 %v2496, 1.0
        %v2511 = vadd.f32 %v2498, 1.0
        %v2512 = vadd.f32 %v2500, 1.0
        %v2513 = vadd.f32 %v2502, 1.0
        %v2514 = vadd.f32 %v2504, 1.0
        %v2515 = vadd.f32 %v2506, 1.0
        %v2516 = vadd.f32 %v2508, 1.0
        %v2517 = vrcp.pop %v2509
        %v2518 = vrcp.pop %v2510
        %v2519 = vrcp.pop %v2511
        %v2520 = vrcp.pop %v2512
        %v2521 = vrcp.pop %v2513
        %v2522 = vrcp.pop %v2514
        %v2523 = vrcp.pop %v2515
        %v2524 = vrcp.pop %v2516
        %v2525 = vmul.f32 %v2434, %v2517
        %v2526 = vmul.f32 %v2436, %v2518
        %v2527 = vmul.f32 %v2477, %v2519
        %v2528 = vmul.f32 %v2479, %v2520
        %v2529 = vmul.f32 %v2438, %v2521
        %v2530 = vmul.f32 %v2440, %v2522
        %v2531 = vmul.f32 %v2481, %v2523
        %v2532 = vmul.f32 %v2483, %v2524
        %v2533 = vpack.c.bf16 %v2529, %v2525
        %v2534 = vpack.c.bf16 %v2530, %v2526
        %v2535 = vpack.c.bf16 %v2531, %v2527
        %v2536 = vpack.c.bf16 %v2532, %v2528
        %v2538 = vlaneseq
        %v2539 = vshrl.u32 %v2538, 7
        %v2540 = vsub.s32 0, %v2539
        %v2541 = vrot.slane %v883, %v2540
        %v2607 = vunpack.c.l.b16 %v816
        %v2608 = vunpack.c.l.b16 %v817
        %v2609 = vunpack.c.l.b16 %v818
        %v2610 = vunpack.c.l.b16 %v819
        %v2611 = vunpack.c.l.b16 %v820
        %v2612 = vunpack.c.l.b16 %v821
        %v2613 = vunpack.c.l.b16 %v822
        %v2614 = vunpack.c.l.b16 %v823
        %v2615 = vunpack.c.l.b16 %v824
        %v2616 = vunpack.c.l.b16 %v825
        %v2617 = vunpack.c.l.b16 %v826
        %v2618 = vunpack.c.l.b16 %v827
        %v2619 = vunpack.c.l.b16 %v828
        %v2620 = vunpack.c.l.b16 %v829
        %v2621 = vunpack.c.l.b16 %v830
        %v2622 = vunpack.c.l.b16 %v831
        %v2623 = vunpack.c.l.b16 %v832
        %v2624 = vunpack.c.l.b16 %v833
        %v2625 = vunpack.c.l.b16 %v834
        %v2626 = vunpack.c.l.b16 %v835
        %v2627 = vunpack.c.l.b16 %v836
        %v2628 = vunpack.c.l.b16 %v837
        %v2629 = vunpack.c.l.b16 %v838
        %v2630 = vunpack.c.l.b16 %v839
        %v2631 = vunpack.c.l.b16 %v840
        %v2632 = vunpack.c.l.b16 %v841
        %v2633 = vunpack.c.l.b16 %v842
        %v2634 = vunpack.c.l.b16 %v843
        %v2635 = vunpack.c.l.b16 %v844
        %v2636 = vunpack.c.l.b16 %v845
        %v2637 = vunpack.c.l.b16 %v846
        %v2638 = vunpack.c.l.b16 %v847
        %v2639 = vunpack.c.l.b16 %v848
        %v2640 = vunpack.c.l.b16 %v849
        %v2641 = vunpack.c.l.b16 %v850
        %v2642 = vunpack.c.l.b16 %v851
        %v2643 = vunpack.c.l.b16 %v852
        %v2644 = vunpack.c.l.b16 %v853
        %v2645 = vunpack.c.l.b16 %v854
        %v2646 = vunpack.c.l.b16 %v855
        %v2647 = vunpack.c.l.b16 %v856
        %v2648 = vunpack.c.l.b16 %v857
        %v2649 = vunpack.c.l.b16 %v858
        %v2650 = vunpack.c.l.b16 %v859
        %v2651 = vunpack.c.l.b16 %v860
        %v2652 = vunpack.c.l.b16 %v861
        %v2653 = vunpack.c.l.b16 %v862
        %v2654 = vunpack.c.l.b16 %v863
        %v2655 = vunpack.c.l.b16 %v864
        %v2656 = vunpack.c.l.b16 %v865
        %v2657 = vunpack.c.l.b16 %v866
        %v2658 = vunpack.c.l.b16 %v867
        %v2659 = vunpack.c.l.b16 %v868
        %v2660 = vunpack.c.l.b16 %v869
        %v2661 = vunpack.c.l.b16 %v870
        %v2662 = vunpack.c.l.b16 %v871
        %v2663 = vunpack.c.l.b16 %v872
        %v2664 = vunpack.c.l.b16 %v873
        %v2665 = vunpack.c.l.b16 %v874
        %v2666 = vunpack.c.l.b16 %v875
        %v2667 = vunpack.c.l.b16 %v876
        %v2668 = vunpack.c.l.b16 %v877
        %v2669 = vunpack.c.l.b16 %v878
        %v2670 = vunpack.c.l.b16 %v879
        %v2671 = vpack.c.b16 %v2608, %v2607
        %v2672 = vpack.c.b16 %v2610, %v2609
        %v2673 = vpack.c.b16 %v2612, %v2611
        %v2674 = vpack.c.b16 %v2614, %v2613
        %v2675 = vpack.c.b16 %v2616, %v2615
        %v2676 = vpack.c.b16 %v2618, %v2617
        %v2677 = vpack.c.b16 %v2620, %v2619
        %v2678 = vpack.c.b16 %v2622, %v2621
        %v2679 = vpack.c.b16 %v2624, %v2623
        %v2680 = vpack.c.b16 %v2626, %v2625
        %v2681 = vpack.c.b16 %v2628, %v2627
        %v2682 = vpack.c.b16 %v2630, %v2629
        %v2683 = vpack.c.b16 %v2632, %v2631
        %v2684 = vpack.c.b16 %v2634, %v2633
        %v2685 = vpack.c.b16 %v2636, %v2635
        %v2686 = vpack.c.b16 %v2638, %v2637
        %v2687 = vpack.c.b16 %v2640, %v2639
        %v2688 = vpack.c.b16 %v2642, %v2641
        %v2689 = vpack.c.b16 %v2644, %v2643
        %v2690 = vpack.c.b16 %v2646, %v2645
        %v2691 = vpack.c.b16 %v2648, %v2647
        %v2692 = vpack.c.b16 %v2650, %v2649
        %v2693 = vpack.c.b16 %v2652, %v2651
        %v2694 = vpack.c.b16 %v2654, %v2653
        %v2695 = vpack.c.b16 %v2656, %v2655
        %v2696 = vpack.c.b16 %v2658, %v2657
        %v2697 = vpack.c.b16 %v2660, %v2659
        %v2698 = vpack.c.b16 %v2662, %v2661
        %v2699 = vpack.c.b16 %v2664, %v2663
        %v2700 = vpack.c.b16 %v2666, %v2665
        %v2701 = vpack.c.b16 %v2668, %v2667
        %v2702 = vpack.c.b16 %v2670, %v2669
        %2735 = vmatprep.subr.bf16.mxu0 0
        %2736 = vmatpush1.bf16.msra.mxu0 %v2671
        %2737 = vmatprep.subr.bf16.mxu0 0
        %2738 = vmatpush1.bf16.msra.mxu0 %v2672
        %2739 = vmatprep.subr.bf16.mxu0 0
        %2740 = vmatpush1.bf16.msra.mxu0 %v2673
        %2741 = vmatprep.subr.bf16.mxu0 0
        %2742 = vmatpush1.bf16.msra.mxu0 %v2674
        %2743 = vmatprep.subr.bf16.mxu0 0
        %2744 = vmatpush1.bf16.msra.mxu0 %v2675
        %2745 = vmatprep.subr.bf16.mxu0 0
        %2746 = vmatpush1.bf16.msra.mxu0 %v2676
        %2747 = vmatprep.subr.bf16.mxu0 0
        %2748 = vmatpush1.bf16.msra.mxu0 %v2677
        %2749 = vmatprep.subr.bf16.mxu0 0
        %2750 = vmatpush1.bf16.msra.mxu0 %v2678
        %2751 = vmatprep.subr.bf16.mxu0 0
        %2752 = vmatpush1.bf16.msra.mxu0 %v2679
        %2753 = vmatprep.subr.bf16.mxu0 0
        %2754 = vmatpush1.bf16.msra.mxu0 %v2680
        %2755 = vmatprep.subr.bf16.mxu0 0
        %2756 = vmatpush1.bf16.msra.mxu0 %v2681
        %2757 = vmatprep.subr.bf16.mxu0 0
        %2758 = vmatpush1.bf16.msra.mxu0 %v2682
        %2759 = vmatprep.subr.bf16.mxu0 0
        %2760 = vmatpush1.bf16.msra.mxu0 %v2683
        %2761 = vmatprep.subr.bf16.mxu0 0
        %2762 = vmatpush1.bf16.msra.mxu0 %v2684
        %2763 = vmatprep.subr.bf16.mxu0 0
        %2764 = vmatpush1.bf16.msra.mxu0 %v2685
        %2765 = vmatprep.subr.bf16.mxu0 0
        %2766 = vmatpush1.bf16.msra.mxu0 %v2686
        %2767 = vmatprep.mubr.bf16.mxu0 %v2534
        %2768 = vmatmul.mubr.bf16.gmra.mrb[0].mxu0 %v2533
        %v2769 = vpop.f32.mrb[0].mxu0
        %v2770 = vadd.f32 %v2541, %v2769
        %v2771 = vpop.f32.mrb[0].mxu0
        %v2772 = vpop.f32.mrb[0].mxu0
        %v2773 = vadd.f32 %v2541, %v2772
        %v2774 = vpop.f32.mrb[0].mxu0
        %2775 = vdwg.mxu0
        %2776 = vmatprep.subr.bf16.mxu0 0
        %2777 = vmatpush1.bf16.msra.mxu0 %v2687
        %2778 = vmatprep.subr.bf16.mxu0 0
        %2779 = vmatpush1.bf16.msra.mxu0 %v2688
        %2780 = vmatprep.subr.bf16.mxu0 0
        %2781 = vmatpush1.bf16.msra.mxu0 %v2689
        %2782 = vmatprep.subr.bf16.mxu0 0
        %2783 = vmatpush1.bf16.msra.mxu0 %v2690
        %2784 = vmatprep.subr.bf16.mxu0 0
        %2785 = vmatpush1.bf16.msra.mxu0 %v2691
        %2786 = vmatprep.subr.bf16.mxu0 0
        %2787 = vmatpush1.bf16.msra.mxu0 %v2692
        %2788 = vmatprep.subr.bf16.mxu0 0
        %2789 = vmatpush1.bf16.msra.mxu0 %v2693
        %2790 = vmatprep.subr.bf16.mxu0 0
        %2791 = vmatpush1.bf16.msra.mxu0 %v2694
        %2792 = vmatprep.subr.bf16.mxu0 0
        %2793 = vmatpush1.bf16.msra.mxu0 %v2695
        %2794 = vmatprep.subr.bf16.mxu0 0
        %2795 = vmatpush1.bf16.msra.mxu0 %v2696
        %2796 = vmatprep.subr.bf16.mxu0 0
        %2797 = vmatpush1.bf16.msra.mxu0 %v2697
        %2798 = vmatprep.subr.bf16.mxu0 0
        %2799 = vmatpush1.bf16.msra.mxu0 %v2698
        %2800 = vmatprep.subr.bf16.mxu0 0
        %2801 = vmatpush1.bf16.msra.mxu0 %v2699
        %2802 = vmatprep.subr.bf16.mxu0 0
        %2803 = vmatpush1.bf16.msra.mxu0 %v2700
        %2804 = vmatprep.subr.bf16.mxu0 0
        %2805 = vmatpush1.bf16.msra.mxu0 %v2701
        %2806 = vmatprep.subr.bf16.mxu0 0
        %2807 = vmatpush1.bf16.msra.mxu0 %v2702
        %2808 = vmatprep.mubr.bf16.mxu0 %v2536
        %2809 = vmatmul.mubr.bf16.gmra.mrb[0].mxu0 %v2535
        %v2810 = vpop.f32.mrb[0].mxu0
        %v2811 = vadd.f32 %v2770, %v2810
        %v2812 = vpop.f32.mrb[0].mxu0
        %v2813 = vpop.f32.mrb[0].mxu0
        %v2814 = vadd.f32 %v2773, %v2813
        %v2815 = vpop.f32.mrb[0].mxu0
        %2816 = vdwg.mxu0
        %v2817 = vadd.f32 %v2177, %v2811
        %v2818 = vadd.f32 %v2178, %v2814
        %2819 = vadd.xlane.f32.xlu0 %v2817
        %v2820 = vpop.xlane.xlu0 %2819
        %2821 = vadd.xlane.f32.xlu0 %v2818
        %v2822 = vpop.xlane.xlu0 %2821
        %v2823 = vmul.f32 %v2820, %v888
        %v2824 = vmul.f32 %v2822, %v888
        %v2825 = vsub.f32 %v2817, %v2823
        %v2826 = vsub.f32 %v2818, %v2824
        %v2827 = vmul.f32 %v2825, %v2825
        %v2828 = vmul.f32 %v2826, %v2826
        %2829 = vadd.xlane.f32.xlu0 %v2827
        %v2830 = vpop.xlane.xlu0 %2829
        %2831 = vadd.xlane.f32.xlu0 %v2828
        %v2832 = vpop.xlane.xlu0 %2831
        %v2833 = vmul.f32 %v2830, %v888
        %v2834 = vmul.f32 %v2832, %v888
        %v2835 = vadd.f32 %v2833, 1e-05
        %v2836 = vadd.f32 %v2834, 1e-05
        %v2837 = vrsqrt.pop %v2835
        %v2838 = vrsqrt.pop %v2836
        %v2839 = vmul.f32 %v2825, %v2837
        %v2840 = vmul.f32 %v2826, %v2838
        %v2841 = vmul.f32 %v2839, %v911
        %v2842 = vmul.f32 %v2840, %v911
        %v2843 = vadd.f32 %v2841, %v919
        %v2844 = vadd.f32 %v2842, %v919
        %v2845 = vpack.c.bf16 %v2844, %v2843
        %2846 = vmatprep.subr.bf16.mxu0 %v1021
        %2847 = vmatpush1.bf16.msra.mxu0 %v1020
        %2848 = vmatprep.subr.bf16.mxu0 %v1024
        %2849 = vmatpush1.bf16.msra.mxu0 %v1023
        %2850 = vmatprep.subr.bf16.mxu0 %v1027
        %2851 = vmatpush1.bf16.msra.mxu0 %v1026
        %2852 = vmatprep.subr.bf16.mxu0 %v1030
        %2853 = vmatpush1.bf16.msra.mxu0 %v1029
        %2854 = vmatprep.subr.bf16.mxu0 %v1033
        %2855 = vmatpush1.bf16.msra.mxu0 %v1032
        %2856 = vmatprep.subr.bf16.mxu0 %v1036
        %2857 = vmatpush1.bf16.msra.mxu0 %v1035
        %2858 = vmatprep.subr.bf16.mxu0 %v1039
        %2859 = vmatpush1.bf16.msra.mxu0 %v1038
        %2860 = vmatprep.subr.bf16.mxu0 %v1042
        %2861 = vmatpush1.bf16.msra.mxu0 %v1041
        %2862 = vmatprep.subr.bf16.mxu0 0
        %2863 = vmatpush1.bf16.msra.mxu0 0
        %2864 = vmatprep.subr.bf16.mxu0 0
        %2865 = vmatpush1.bf16.msra.mxu0 0
        %2866 = vmatprep.subr.bf16.mxu0 0
        %2867 = vmatpush1.bf16.msra.mxu0 0
        %2868 = vmatprep.subr.bf16.mxu0 0
        %2869 = vmatpush1.bf16.msra.mxu0 0
        %2870 = vmatprep.subr.bf16.mxu0 0
        %2871 = vmatpush1.bf16.msra.mxu0 0
        %2872 = vmatprep.subr.bf16.mxu0 0
        %2873 = vmatpush1.bf16.msra.mxu0 0
        %2874 = vmatprep.subr.bf16.mxu0 0
        %2875 = vmatpush1.bf16.msra.mxu0 0
        %2876 = vmatprep.subr.bf16.mxu0 0
        %2877 = vmatpush1.bf16.msra.mxu0 0
        %2878 = vmatprep.mubr.bf16.mxu0 0
        %2879 = vmatmul.mubr.bf16.gmra.mrb[0].mxu0 %v2845
        %v2880 = vpop.f32.mrb[0].mxu0
        %v2881 = vadd.f32 %v928, %v2880
        %v2882 = vpop.f32.mrb[0].mxu0
        %v2883 = vadd.f32 %v932, %v2882
        %v2884 = vpop.f32.mrb[0].mxu0
        %v2885 = vadd.f32 %v928, %v2884
        %v2886 = vpop.f32.mrb[0].mxu0
        %v2887 = vadd.f32 %v932, %v2886
        %2888 = vdwg.mxu0
        %2889 = vmatprep.subr.bf16.mxu0 0
        %2890 = vmatpush1.bf16.msra.mxu0 %v1022
        %2891 = vmatprep.subr.bf16.mxu0 0
        %2892 = vmatpush1.bf16.msra.mxu0 %v1025
        %2893 = vmatprep.subr.bf16.mxu0 0
        %2894 = vmatpush1.bf16.msra.mxu0 %v1028
        %2895 = vmatprep.subr.bf16.mxu0 0
        %2896 = vmatpush1.bf16.msra.mxu0 %v1031
        %2897 = vmatprep.subr.bf16.mxu0 0
        %2898 = vmatpush1.bf16.msra.mxu0 %v1034
        %2899 = vmatprep.subr.bf16.mxu0 0
        %2900 = vmatpush1.bf16.msra.mxu0 %v1037
        %2901 = vmatprep.subr.bf16.mxu0 0
        %2902 = vmatpush1.bf16.msra.mxu0 %v1040
        %2903 = vmatprep.subr.bf16.mxu0 0
        %2904 = vmatpush1.bf16.msra.mxu0 %v1043
        %2905 = vmatprep.subr.bf16.mxu0 0
        %2906 = vmatpush1.bf16.msra.mxu0 0
        %2907 = vmatprep.subr.bf16.mxu0 0
        %2908 = vmatpush1.bf16.msra.mxu0 0
        %2909 = vmatprep.subr.bf16.mxu0 0
        %2910 = vmatpush1.bf16.msra.mxu0 0
        %2911 = vmatprep.subr.bf16.mxu0 0
        %2912 = vmatpush1.bf16.msra.mxu0 0
        %2913 = vmatprep.subr.bf16.mxu0 0
        %2914 = vmatpush1.bf16.msra.mxu0 0
        %2915 = vmatprep.subr.bf16.mxu0 0
        %2916 = vmatpush1.bf16.msra.mxu0 0
        %2917 = vmatprep.subr.bf16.mxu0 0
        %2918 = vmatpush1.bf16.msra.mxu0 0
        %2919 = vmatprep.subr.bf16.mxu0 0
        %2920 = vmatpush1.bf16.msra.mxu0 0
        %2921 = vmatprep.mubr.bf16.mxu0 0
        %2922 = vmatmul.mubr.bf16.gmra.mrb[0].mxu0 %v2845
        %v2923 = vpop.f32.mrb[0].mxu0
        %v2924 = vadd.f32 %v936, %v2923
        %v2925 = vpop.f32.mrb[0].mxu0
        %v2926 = vpop.f32.mrb[0].mxu0
        %v2927 = vadd.f32 %v936, %v2926
        %v2928 = vpop.f32.mrb[0].mxu0
        %2929 = vdwg.mxu0
        %v2930 = vmul.f32 %v2881, 0.17677669
        %v2931 = vmul.f32 %v2885, 0.17677669
        %v2932 = vpack.c.bf16 %v2930, %v2930
        %v2933 = vpack.c.bf16 %v2931, %v2931
        %v2934 = vpack.c.bf16 %v2883, %v2883
        %v2935 = vpack.c.bf16 %v2887, %v2887
        %v2936 = vpack.c.bf16 %v2924, %v2924
        %v2937 = vpack.c.bf16 %v2927, %v2927
        %v2939 = vsel %vm1172, %v2932, 0
        %v2942 = vsel %vm1172, %v2934, 0
        %2944 = vmatprep.subr.bf16.mxu0 0
        %2945 = vmatpush1.bf16.xpose.msra.mxu0 %v2942
        %2946 = vmatprep.subr.bf16.mxu0 0
        %2947 = vmatpush1.bf16.xpose.msra.mxu0 0
        %2948 = vmatprep.subr.bf16.mxu0 0
        %2949 = vmatpush1.bf16.xpose.msra.mxu0 0
        %2950 = vmatprep.subr.bf16.mxu0 0
        %2951 = vmatpush1.bf16.xpose.msra.mxu0 0
        %2952 = vmatprep.subr.bf16.mxu0 0
        %2953 = vmatpush1.bf16.xpose.msra.mxu0 0
        %2954 = vmatprep.subr.bf16.mxu0 0
        %2955 = vmatpush1.bf16.xpose.msra.mxu0 0
        %2956 = vmatprep.subr.bf16.mxu0 0
        %2957 = vmatpush1.bf16.xpose.msra.mxu0 0
        %2958 = vmatprep.subr.bf16.mxu0 0
        %2959 = vmatpush1.bf16.xpose.msra.mxu0 0
        %2960 = vmatprep.subr.bf16.mxu0 0
        %2961 = vmatpush1.bf16.xpose.msra.mxu0 0
        %2962 = vmatprep.subr.bf16.mxu0 0
        %2963 = vmatpush1.bf16.xpose.msra.mxu0 0
        %2964 = vmatprep.subr.bf16.mxu0 0
        %2965 = vmatpush1.bf16.xpose.msra.mxu0 0
        %2966 = vmatprep.subr.bf16.mxu0 0
        %2967 = vmatpush1.bf16.xpose.msra.mxu0 0
        %2968 = vmatprep.subr.bf16.mxu0 0
        %2969 = vmatpush1.bf16.xpose.msra.mxu0 0
        %2970 = vmatprep.subr.bf16.mxu0 0
        %2971 = vmatpush1.bf16.xpose.msra.mxu0 0
        %2972 = vmatprep.subr.bf16.mxu0 0
        %2973 = vmatpush1.bf16.xpose.msra.mxu0 0
        %2974 = vmatprep.subr.bf16.mxu0 0
        %2975 = vmatpush1.bf16.xpose.msra.mxu0 0
        %2976 = vmatprep.mubr.bf16.mxu0 0
        %2977 = vmatmul.mubr.bf16.gmra.mrb[0].mxu0 %v2939
        %v2978 = vpop.f32.mrb[0].mxu0
        %v2979 = vadd.f32 %v1165, %v2978
        %v2980 = vpop.f32.mrb[0].mxu0
        %v2981 = vpop.f32.mrb[0].mxu0
        %v2982 = vpop.f32.mrb[0].mxu0
        %2983 = vdwg.mxu0
        %v2985 = vsel %vm1172, %v2933, 0
        %v2988 = vsel %vm1172, %v2935, 0
        %2990 = vmatprep.subr.bf16.mxu0 0
        %2991 = vmatpush1.bf16.xpose.msra.mxu0 %v2988
        %2992 = vmatprep.subr.bf16.mxu0 0
        %2993 = vmatpush1.bf16.xpose.msra.mxu0 0
        %2994 = vmatprep.subr.bf16.mxu0 0
        %2995 = vmatpush1.bf16.xpose.msra.mxu0 0
        %2996 = vmatprep.subr.bf16.mxu0 0
        %2997 = vmatpush1.bf16.xpose.msra.mxu0 0
        %2998 = vmatprep.subr.bf16.mxu0 0
        %2999 = vmatpush1.bf16.xpose.msra.mxu0 0
        %3000 = vmatprep.subr.bf16.mxu0 0
        %3001 = vmatpush1.bf16.xpose.msra.mxu0 0
        %3002 = vmatprep.subr.bf16.mxu0 0
        %3003 = vmatpush1.bf16.xpose.msra.mxu0 0
        %3004 = vmatprep.subr.bf16.mxu0 0
        %3005 = vmatpush1.bf16.xpose.msra.mxu0 0
        %3006 = vmatprep.subr.bf16.mxu0 0
        %3007 = vmatpush1.bf16.xpose.msra.mxu0 0
        %3008 = vmatprep.subr.bf16.mxu0 0
        %3009 = vmatpush1.bf16.xpose.msra.mxu0 0
        %3010 = vmatprep.subr.bf16.mxu0 0
        %3011 = vmatpush1.bf16.xpose.msra.mxu0 0
        %3012 = vmatprep.subr.bf16.mxu0 0
        %3013 = vmatpush1.bf16.xpose.msra.mxu0 0
        %3014 = vmatprep.subr.bf16.mxu0 0
        %3015 = vmatpush1.bf16.xpose.msra.mxu0 0
        %3016 = vmatprep.subr.bf16.mxu0 0
        %3017 = vmatpush1.bf16.xpose.msra.mxu0 0
        %3018 = vmatprep.subr.bf16.mxu0 0
        %3019 = vmatpush1.bf16.xpose.msra.mxu0 0
        %3020 = vmatprep.subr.bf16.mxu0 0
        %3021 = vmatpush1.bf16.xpose.msra.mxu0 0
        %3022 = vmatprep.mubr.bf16.mxu0 0
        %3023 = vmatmul.mubr.bf16.gmra.mrb[0].mxu0 %v2985
        %v3024 = vpop.f32.mrb[0].mxu0
        %v3025 = vadd.f32 %v1169, %v3024
        %v3026 = vpop.f32.mrb[0].mxu0
        %v3027 = vpop.f32.mrb[0].mxu0
        %v3028 = vpop.f32.mrb[0].mxu0
        %3029 = vdwg.mxu0
        %v3030 = vsel %vm1265, %v2979, -inf
        %3031 = vmax.xlane.f32.xlu0 %v3030
        %v3032 = vpop.xlane.xlu0 %3031
        %v3033 = vsel %vm1265, %v3025, -inf
        %3034 = vmax.xlane.f32.xlu0 %v3033
        %v3035 = vpop.xlane.xlu0 %3034
        %v3036 = vsub.f32 %v2979, %v3032
        %v3037 = vsub.f32 %v3025, %v3035
        %v3038 = vmul.f32 %v3036, 1.442695
        %v3039 = vpow.pop %v3038
        %v3040 = vmul.f32 %v3037, 1.442695
        %v3041 = vpow.pop %v3040
        %v3042 = vsel %vm1265, %v3039, 0.0
        %3043 = vadd.xlane.f32.xlu0 %v3042
        %v3044 = vpop.xlane.xlu0 %3043
        %v3045 = vsel %vm1265, %v3041, 0.0
        %3046 = vadd.xlane.f32.xlu0 %v3045
        %v3047 = vpop.xlane.xlu0 %3046
        %v3048 = vrcp.pop %v3044
        %v3049 = vrcp.pop %v3047
        %v3050 = vmul.f32 %v3039, %v3048
        %v3051 = vmul.f32 %v3041, %v3049
        %v3052 = vpack.c.bf16 %v3050, %v3050
        %v3053 = vpack.c.bf16 %v3051, %v3051
        %v3055 = vsel %vm1265, %v3052, 0
        %v3058 = vsel %vm1293, %v2936, 0
        %3060 = vmatprep.subr.bf16.mxu0 0
        %3061 = vmatpush1.bf16.msra.mxu0 %v3058
        %3062 = vmatprep.subr.bf16.mxu0 0
        %3063 = vmatpush1.bf16.msra.mxu0 0
        %3064 = vmatprep.subr.bf16.mxu0 0
        %3065 = vmatpush1.bf16.msra.mxu0 0
        %3066 = vmatprep.subr.bf16.mxu0 0
        %3067 = vmatpush1.bf16.msra.mxu0 0
        %3068 = vmatprep.subr.bf16.mxu0 0
        %3069 = vmatpush1.bf16.msra.mxu0 0
        %3070 = vmatprep.subr.bf16.mxu0 0
        %3071 = vmatpush1.bf16.msra.mxu0 0
        %3072 = vmatprep.subr.bf16.mxu0 0
        %3073 = vmatpush1.bf16.msra.mxu0 0
        %3074 = vmatprep.subr.bf16.mxu0 0
        %3075 = vmatpush1.bf16.msra.mxu0 0
        %3076 = vmatprep.subr.bf16.mxu0 0
        %3077 = vmatpush1.bf16.msra.mxu0 0
        %3078 = vmatprep.subr.bf16.mxu0 0
        %3079 = vmatpush1.bf16.msra.mxu0 0
        %3080 = vmatprep.subr.bf16.mxu0 0
        %3081 = vmatpush1.bf16.msra.mxu0 0
        %3082 = vmatprep.subr.bf16.mxu0 0
        %3083 = vmatpush1.bf16.msra.mxu0 0
        %3084 = vmatprep.subr.bf16.mxu0 0
        %3085 = vmatpush1.bf16.msra.mxu0 0
        %3086 = vmatprep.subr.bf16.mxu0 0
        %3087 = vmatpush1.bf16.msra.mxu0 0
        %3088 = vmatprep.subr.bf16.mxu0 0
        %3089 = vmatpush1.bf16.msra.mxu0 0
        %3090 = vmatprep.subr.bf16.mxu0 0
        %3091 = vmatpush1.bf16.msra.mxu0 0
        %3092 = vmatprep.mubr.bf16.mxu0 0
        %3093 = vmatmul.mubr.bf16.gmra.mrb[0].mxu0 %v3055
        %v3094 = vpop.f32.mrb[0].mxu0
        %v3095 = vadd.f32 0.0, %v3094
        %v3096 = vpop.f32.mrb[0].mxu0
        %v3097 = vpop.f32.mrb[0].mxu0
        %v3098 = vpop.f32.mrb[0].mxu0
        %3099 = vdwg.mxu0
        %v3101 = vsel %vm1265, %v3053, 0
        %v3104 = vsel %vm1293, %v2937, 0
        %3106 = vmatprep.subr.bf16.mxu0 0
        %3107 = vmatpush1.bf16.msra.mxu0 %v3104
        %3108 = vmatprep.subr.bf16.mxu0 0
        %3109 = vmatpush1.bf16.msra.mxu0 0
        %3110 = vmatprep.subr.bf16.mxu0 0
        %3111 = vmatpush1.bf16.msra.mxu0 0
        %3112 = vmatprep.subr.bf16.mxu0 0
        %3113 = vmatpush1.bf16.msra.mxu0 0
        %3114 = vmatprep.subr.bf16.mxu0 0
        %3115 = vmatpush1.bf16.msra.mxu0 0
        %3116 = vmatprep.subr.bf16.mxu0 0
        %3117 = vmatpush1.bf16.msra.mxu0 0
        %3118 = vmatprep.subr.bf16.mxu0 0
        %3119 = vmatpush1.bf16.msra.mxu0 0
        %3120 = vmatprep.subr.bf16.mxu0 0
        %3121 = vmatpush1.bf16.msra.mxu0 0
        %3122 = vmatprep.subr.bf16.mxu0 0
        %3123 = vmatpush1.bf16.msra.mxu0 0
        %3124 = vmatprep.subr.bf16.mxu0 0
        %3125 = vmatpush1.bf16.msra.mxu0 0
        %3126 = vmatprep.subr.bf16.mxu0 0
        %3127 = vmatpush1.bf16.msra.mxu0 0
        %3128 = vmatprep.subr.bf16.mxu0 0
        %3129 = vmatpush1.bf16.msra.mxu0 0
        %3130 = vmatprep.subr.bf16.mxu0 0
        %3131 = vmatpush1.bf16.msra.mxu0 0
        %3132 = vmatprep.subr.bf16.mxu0 0
        %3133 = vmatpush1.bf16.msra.mxu0 0
        %3134 = vmatprep.subr.bf16.mxu0 0
        %3135 = vmatpush1.bf16.msra.mxu0 0
        %3136 = vmatprep.subr.bf16.mxu0 0
        %3137 = vmatpush1.bf16.msra.mxu0 0
        %3138 = vmatprep.mubr.bf16.mxu0 0
        %3139 = vmatmul.mubr.bf16.gmra.mrb[0].mxu0 %v3101
        %v3140 = vpop.f32.mrb[0].mxu0
        %v3141 = vadd.f32 0.0, %v3140
        %v3142 = vpop.f32.mrb[0].mxu0
        %v3143 = vpop.f32.mrb[0].mxu0
        %v3144 = vpop.f32.mrb[0].mxu0
        %3145 = vdwg.mxu0
        %3147 = vrot.lane.b32.xlu0 %v2932, 96
        %v3148 = vpop.permute.xlu0 %3147
        %3150 = vrot.lane.b32.xlu0 %v2934, 96
        %v3151 = vpop.permute.xlu0 %3150
        %v3153 = vsel %vm1172, %v3148, 0
        %v3156 = vsel %vm1172, %v3151, 0
        %3158 = vmatprep.subr.bf16.mxu0 0
        %3159 = vmatpush1.bf16.xpose.msra.mxu0 %v3156
        %3160 = vmatprep.subr.bf16.mxu0 0
        %3161 = vmatpush1.bf16.xpose.msra.mxu0 0
        %3162 = vmatprep.subr.bf16.mxu0 0
        %3163 = vmatpush1.bf16.xpose.msra.mxu0 0
        %3164 = vmatprep.subr.bf16.mxu0 0
        %3165 = vmatpush1.bf16.xpose.msra.mxu0 0
        %3166 = vmatprep.subr.bf16.mxu0 0
        %3167 = vmatpush1.bf16.xpose.msra.mxu0 0
        %3168 = vmatprep.subr.bf16.mxu0 0
        %3169 = vmatpush1.bf16.xpose.msra.mxu0 0
        %3170 = vmatprep.subr.bf16.mxu0 0
        %3171 = vmatpush1.bf16.xpose.msra.mxu0 0
        %3172 = vmatprep.subr.bf16.mxu0 0
        %3173 = vmatpush1.bf16.xpose.msra.mxu0 0
        %3174 = vmatprep.subr.bf16.mxu0 0
        %3175 = vmatpush1.bf16.xpose.msra.mxu0 0
        %3176 = vmatprep.subr.bf16.mxu0 0
        %3177 = vmatpush1.bf16.xpose.msra.mxu0 0
        %3178 = vmatprep.subr.bf16.mxu0 0
        %3179 = vmatpush1.bf16.xpose.msra.mxu0 0
        %3180 = vmatprep.subr.bf16.mxu0 0
        %3181 = vmatpush1.bf16.xpose.msra.mxu0 0
        %3182 = vmatprep.subr.bf16.mxu0 0
        %3183 = vmatpush1.bf16.xpose.msra.mxu0 0
        %3184 = vmatprep.subr.bf16.mxu0 0
        %3185 = vmatpush1.bf16.xpose.msra.mxu0 0
        %3186 = vmatprep.subr.bf16.mxu0 0
        %3187 = vmatpush1.bf16.xpose.msra.mxu0 0
        %3188 = vmatprep.subr.bf16.mxu0 0
        %3189 = vmatpush1.bf16.xpose.msra.mxu0 0
        %3190 = vmatprep.mubr.bf16.mxu0 0
        %3191 = vmatmul.mubr.bf16.gmra.mrb[0].mxu0 %v3153
        %v3192 = vpop.f32.mrb[0].mxu0
        %v3193 = vadd.f32 %v1165, %v3192
        %v3194 = vpop.f32.mrb[0].mxu0
        %v3195 = vpop.f32.mrb[0].mxu0
        %v3196 = vpop.f32.mrb[0].mxu0
        %3197 = vdwg.mxu0
        %3199 = vrot.lane.b32.xlu0 %v2933, 96
        %v3200 = vpop.permute.xlu0 %3199
        %3202 = vrot.lane.b32.xlu0 %v2935, 96
        %v3203 = vpop.permute.xlu0 %3202
        %v3205 = vsel %vm1172, %v3200, 0
        %v3208 = vsel %vm1172, %v3203, 0
        %3210 = vmatprep.subr.bf16.mxu0 0
        %3211 = vmatpush1.bf16.xpose.msra.mxu0 %v3208
        %3212 = vmatprep.subr.bf16.mxu0 0
        %3213 = vmatpush1.bf16.xpose.msra.mxu0 0
        %3214 = vmatprep.subr.bf16.mxu0 0
        %3215 = vmatpush1.bf16.xpose.msra.mxu0 0
        %3216 = vmatprep.subr.bf16.mxu0 0
        %3217 = vmatpush1.bf16.xpose.msra.mxu0 0
        %3218 = vmatprep.subr.bf16.mxu0 0
        %3219 = vmatpush1.bf16.xpose.msra.mxu0 0
        %3220 = vmatprep.subr.bf16.mxu0 0
        %3221 = vmatpush1.bf16.xpose.msra.mxu0 0
        %3222 = vmatprep.subr.bf16.mxu0 0
        %3223 = vmatpush1.bf16.xpose.msra.mxu0 0
        %3224 = vmatprep.subr.bf16.mxu0 0
        %3225 = vmatpush1.bf16.xpose.msra.mxu0 0
        %3226 = vmatprep.subr.bf16.mxu0 0
        %3227 = vmatpush1.bf16.xpose.msra.mxu0 0
        %3228 = vmatprep.subr.bf16.mxu0 0
        %3229 = vmatpush1.bf16.xpose.msra.mxu0 0
        %3230 = vmatprep.subr.bf16.mxu0 0
        %3231 = vmatpush1.bf16.xpose.msra.mxu0 0
        %3232 = vmatprep.subr.bf16.mxu0 0
        %3233 = vmatpush1.bf16.xpose.msra.mxu0 0
        %3234 = vmatprep.subr.bf16.mxu0 0
        %3235 = vmatpush1.bf16.xpose.msra.mxu0 0
        %3236 = vmatprep.subr.bf16.mxu0 0
        %3237 = vmatpush1.bf16.xpose.msra.mxu0 0
        %3238 = vmatprep.subr.bf16.mxu0 0
        %3239 = vmatpush1.bf16.xpose.msra.mxu0 0
        %3240 = vmatprep.subr.bf16.mxu0 0
        %3241 = vmatpush1.bf16.xpose.msra.mxu0 0
        %3242 = vmatprep.mubr.bf16.mxu0 0
        %3243 = vmatmul.mubr.bf16.gmra.mrb[0].mxu0 %v3205
        %v3244 = vpop.f32.mrb[0].mxu0
        %v3245 = vadd.f32 %v1169, %v3244
        %v3246 = vpop.f32.mrb[0].mxu0
        %v3247 = vpop.f32.mrb[0].mxu0
        %v3248 = vpop.f32.mrb[0].mxu0
        %3249 = vdwg.mxu0
        %v3250 = vsel %vm1265, %v3193, -inf
        %3251 = vmax.xlane.f32.xlu0 %v3250
        %v3252 = vpop.xlane.xlu0 %3251
        %v3253 = vsel %vm1265, %v3245, -inf
        %3254 = vmax.xlane.f32.xlu0 %v3253
        %v3255 = vpop.xlane.xlu0 %3254
        %v3256 = vsub.f32 %v3193, %v3252
        %v3257 = vsub.f32 %v3245, %v3255
        %v3258 = vmul.f32 %v3256, 1.442695
        %v3259 = vpow.pop %v3258
        %v3260 = vmul.f32 %v3257, 1.442695
        %v3261 = vpow.pop %v3260
        %v3262 = vsel %vm1265, %v3259, 0.0
        %3263 = vadd.xlane.f32.xlu0 %v3262
        %v3264 = vpop.xlane.xlu0 %3263
        %v3265 = vsel %vm1265, %v3261, 0.0
        %3266 = vadd.xlane.f32.xlu0 %v3265
        %v3267 = vpop.xlane.xlu0 %3266
        %v3268 = vrcp.pop %v3264
        %v3269 = vrcp.pop %v3267
        %v3270 = vmul.f32 %v3259, %v3268
        %v3271 = vmul.f32 %v3261, %v3269
        %v3272 = vpack.c.bf16 %v3270, %v3270
        %v3273 = vpack.c.bf16 %v3271, %v3271
        %3275 = vrot.lane.b32.xlu0 %v2936, 96
        %v3276 = vpop.permute.xlu0 %3275
        %v3278 = vsel %vm1265, %v3272, 0
        %v3281 = vsel %vm1293, %v3276, 0
        %3283 = vmatprep.subr.bf16.mxu0 0
        %3284 = vmatpush1.bf16.msra.mxu0 %v3281
        %3285 = vmatprep.subr.bf16.mxu0 0
        %3286 = vmatpush1.bf16.msra.mxu0 0
        %3287 = vmatprep.subr.bf16.mxu0 0
        %3288 = vmatpush1.bf16.msra.mxu0 0
        %3289 = vmatprep.subr.bf16.mxu0 0
        %3290 = vmatpush1.bf16.msra.mxu0 0
        %3291 = vmatprep.subr.bf16.mxu0 0
        %3292 = vmatpush1.bf16.msra.mxu0 0
        %3293 = vmatprep.subr.bf16.mxu0 0
        %3294 = vmatpush1.bf16.msra.mxu0 0
        %3295 = vmatprep.subr.bf16.mxu0 0
        %3296 = vmatpush1.bf16.msra.mxu0 0
        %3297 = vmatprep.subr.bf16.mxu0 0
        %3298 = vmatpush1.bf16.msra.mxu0 0
        %3299 = vmatprep.subr.bf16.mxu0 0
        %3300 = vmatpush1.bf16.msra.mxu0 0
        %3301 = vmatprep.subr.bf16.mxu0 0
        %3302 = vmatpush1.bf16.msra.mxu0 0
        %3303 = vmatprep.subr.bf16.mxu0 0
        %3304 = vmatpush1.bf16.msra.mxu0 0
        %3305 = vmatprep.subr.bf16.mxu0 0
        %3306 = vmatpush1.bf16.msra.mxu0 0
        %3307 = vmatprep.subr.bf16.mxu0 0
        %3308 = vmatpush1.bf16.msra.mxu0 0
        %3309 = vmatprep.subr.bf16.mxu0 0
        %3310 = vmatpush1.bf16.msra.mxu0 0
        %3311 = vmatprep.subr.bf16.mxu0 0
        %3312 = vmatpush1.bf16.msra.mxu0 0
        %3313 = vmatprep.subr.bf16.mxu0 0
        %3314 = vmatpush1.bf16.msra.mxu0 0
        %3315 = vmatprep.mubr.bf16.mxu0 0
        %3316 = vmatmul.mubr.bf16.gmra.mrb[0].mxu0 %v3278
        %v3317 = vpop.f32.mrb[0].mxu0
        %v3318 = vadd.f32 0.0, %v3317
        %v3319 = vpop.f32.mrb[0].mxu0
        %v3320 = vpop.f32.mrb[0].mxu0
        %v3321 = vpop.f32.mrb[0].mxu0
        %3322 = vdwg.mxu0
        %3324 = vrot.lane.b32.xlu0 %v2937, 96
        %v3325 = vpop.permute.xlu0 %3324
        %v3327 = vsel %vm1265, %v3273, 0
        %v3330 = vsel %vm1293, %v3325, 0
        %3332 = vmatprep.subr.bf16.mxu0 0
        %3333 = vmatpush1.bf16.msra.mxu0 %v3330
        %3334 = vmatprep.subr.bf16.mxu0 0
        %3335 = vmatpush1.bf16.msra.mxu0 0
        %3336 = vmatprep.subr.bf16.mxu0 0
        %3337 = vmatpush1.bf16.msra.mxu0 0
        %3338 = vmatprep.subr.bf16.mxu0 0
        %3339 = vmatpush1.bf16.msra.mxu0 0
        %3340 = vmatprep.subr.bf16.mxu0 0
        %3341 = vmatpush1.bf16.msra.mxu0 0
        %3342 = vmatprep.subr.bf16.mxu0 0
        %3343 = vmatpush1.bf16.msra.mxu0 0
        %3344 = vmatprep.subr.bf16.mxu0 0
        %3345 = vmatpush1.bf16.msra.mxu0 0
        %3346 = vmatprep.subr.bf16.mxu0 0
        %3347 = vmatpush1.bf16.msra.mxu0 0
        %3348 = vmatprep.subr.bf16.mxu0 0
        %3349 = vmatpush1.bf16.msra.mxu0 0
        %3350 = vmatprep.subr.bf16.mxu0 0
        %3351 = vmatpush1.bf16.msra.mxu0 0
        %3352 = vmatprep.subr.bf16.mxu0 0
        %3353 = vmatpush1.bf16.msra.mxu0 0
        %3354 = vmatprep.subr.bf16.mxu0 0
        %3355 = vmatpush1.bf16.msra.mxu0 0
        %3356 = vmatprep.subr.bf16.mxu0 0
        %3357 = vmatpush1.bf16.msra.mxu0 0
        %3358 = vmatprep.subr.bf16.mxu0 0
        %3359 = vmatpush1.bf16.msra.mxu0 0
        %3360 = vmatprep.subr.bf16.mxu0 0
        %3361 = vmatpush1.bf16.msra.mxu0 0
        %3362 = vmatprep.subr.bf16.mxu0 0
        %3363 = vmatpush1.bf16.msra.mxu0 0
        %3364 = vmatprep.mubr.bf16.mxu0 0
        %3365 = vmatmul.mubr.bf16.gmra.mrb[0].mxu0 %v3327
        %v3366 = vpop.f32.mrb[0].mxu0
        %v3367 = vadd.f32 0.0, %v3366
        %v3368 = vpop.f32.mrb[0].mxu0
        %v3369 = vpop.f32.mrb[0].mxu0
        %v3370 = vpop.f32.mrb[0].mxu0
        %3371 = vdwg.mxu0
        %3372 = vrot.lane.b32.xlu0 %v2932, 64
        %v3373 = vpop.permute.xlu0 %3372
        %3374 = vrot.lane.b32.xlu0 %v2934, 64
        %v3375 = vpop.permute.xlu0 %3374
        %v3377 = vsel %vm1172, %v3373, 0
        %v3380 = vsel %vm1172, %v3375, 0
        %3382 = vmatprep.subr.bf16.mxu0 0
        %3383 = vmatpush1.bf16.xpose.msra.mxu0 %v3380
        %3384 = vmatprep.subr.bf16.mxu0 0
        %3385 = vmatpush1.bf16.xpose.msra.mxu0 0
        %3386 = vmatprep.subr.bf16.mxu0 0
        %3387 = vmatpush1.bf16.xpose.msra.mxu0 0
        %3388 = vmatprep.subr.bf16.mxu0 0
        %3389 = vmatpush1.bf16.xpose.msra.mxu0 0
        %3390 = vmatprep.subr.bf16.mxu0 0
        %3391 = vmatpush1.bf16.xpose.msra.mxu0 0
        %3392 = vmatprep.subr.bf16.mxu0 0
        %3393 = vmatpush1.bf16.xpose.msra.mxu0 0
        %3394 = vmatprep.subr.bf16.mxu0 0
        %3395 = vmatpush1.bf16.xpose.msra.mxu0 0
        %3396 = vmatprep.subr.bf16.mxu0 0
        %3397 = vmatpush1.bf16.xpose.msra.mxu0 0
        %3398 = vmatprep.subr.bf16.mxu0 0
        %3399 = vmatpush1.bf16.xpose.msra.mxu0 0
        %3400 = vmatprep.subr.bf16.mxu0 0
        %3401 = vmatpush1.bf16.xpose.msra.mxu0 0
        %3402 = vmatprep.subr.bf16.mxu0 0
        %3403 = vmatpush1.bf16.xpose.msra.mxu0 0
        %3404 = vmatprep.subr.bf16.mxu0 0
        %3405 = vmatpush1.bf16.xpose.msra.mxu0 0
        %3406 = vmatprep.subr.bf16.mxu0 0
        %3407 = vmatpush1.bf16.xpose.msra.mxu0 0
        %3408 = vmatprep.subr.bf16.mxu0 0
        %3409 = vmatpush1.bf16.xpose.msra.mxu0 0
        %3410 = vmatprep.subr.bf16.mxu0 0
        %3411 = vmatpush1.bf16.xpose.msra.mxu0 0
        %3412 = vmatprep.subr.bf16.mxu0 0
        %3413 = vmatpush1.bf16.xpose.msra.mxu0 0
        %3414 = vmatprep.mubr.bf16.mxu0 0
        %3415 = vmatmul.mubr.bf16.gmra.mrb[0].mxu0 %v3377
        %v3416 = vpop.f32.mrb[0].mxu0
        %v3417 = vadd.f32 %v1165, %v3416
        %v3418 = vpop.f32.mrb[0].mxu0
        %v3419 = vpop.f32.mrb[0].mxu0
        %v3420 = vpop.f32.mrb[0].mxu0
        %3421 = vdwg.mxu0
        %3422 = vrot.lane.b32.xlu0 %v2933, 64
        %v3423 = vpop.permute.xlu0 %3422
        %3424 = vrot.lane.b32.xlu0 %v2935, 64
        %v3425 = vpop.permute.xlu0 %3424
        %v3427 = vsel %vm1172, %v3423, 0
        %v3430 = vsel %vm1172, %v3425, 0
        %3432 = vmatprep.subr.bf16.mxu0 0
        %3433 = vmatpush1.bf16.xpose.msra.mxu0 %v3430
        %3434 = vmatprep.subr.bf16.mxu0 0
        %3435 = vmatpush1.bf16.xpose.msra.mxu0 0
        %3436 = vmatprep.subr.bf16.mxu0 0
        %3437 = vmatpush1.bf16.xpose.msra.mxu0 0
        %3438 = vmatprep.subr.bf16.mxu0 0
        %3439 = vmatpush1.bf16.xpose.msra.mxu0 0
        %3440 = vmatprep.subr.bf16.mxu0 0
        %3441 = vmatpush1.bf16.xpose.msra.mxu0 0
        %3442 = vmatprep.subr.bf16.mxu0 0
        %3443 = vmatpush1.bf16.xpose.msra.mxu0 0
        %3444 = vmatprep.subr.bf16.mxu0 0
        %3445 = vmatpush1.bf16.xpose.msra.mxu0 0
        %3446 = vmatprep.subr.bf16.mxu0 0
        %3447 = vmatpush1.bf16.xpose.msra.mxu0 0
        %3448 = vmatprep.subr.bf16.mxu0 0
        %3449 = vmatpush1.bf16.xpose.msra.mxu0 0
        %3450 = vmatprep.subr.bf16.mxu0 0
        %3451 = vmatpush1.bf16.xpose.msra.mxu0 0
        %3452 = vmatprep.subr.bf16.mxu0 0
        %3453 = vmatpush1.bf16.xpose.msra.mxu0 0
        %3454 = vmatprep.subr.bf16.mxu0 0
        %3455 = vmatpush1.bf16.xpose.msra.mxu0 0
        %3456 = vmatprep.subr.bf16.mxu0 0
        %3457 = vmatpush1.bf16.xpose.msra.mxu0 0
        %3458 = vmatprep.subr.bf16.mxu0 0
        %3459 = vmatpush1.bf16.xpose.msra.mxu0 0
        %3460 = vmatprep.subr.bf16.mxu0 0
        %3461 = vmatpush1.bf16.xpose.msra.mxu0 0
        %3462 = vmatprep.subr.bf16.mxu0 0
        %3463 = vmatpush1.bf16.xpose.msra.mxu0 0
        %3464 = vmatprep.mubr.bf16.mxu0 0
        %3465 = vmatmul.mubr.bf16.gmra.mrb[0].mxu0 %v3427
        %v3466 = vpop.f32.mrb[0].mxu0
        %v3467 = vadd.f32 %v1169, %v3466
        %v3468 = vpop.f32.mrb[0].mxu0
        %v3469 = vpop.f32.mrb[0].mxu0
        %v3470 = vpop.f32.mrb[0].mxu0
        %3471 = vdwg.mxu0
        %v3472 = vsel %vm1265, %v3417, -inf
        %3473 = vmax.xlane.f32.xlu0 %v3472
        %v3474 = vpop.xlane.xlu0 %3473
        %v3475 = vsel %vm1265, %v3467, -inf
        %3476 = vmax.xlane.f32.xlu0 %v3475
        %v3477 = vpop.xlane.xlu0 %3476
        %v3478 = vsub.f32 %v3417, %v3474
        %v3479 = vsub.f32 %v3467, %v3477
        %v3480 = vmul.f32 %v3478, 1.442695
        %v3481 = vpow.pop %v3480
        %v3482 = vmul.f32 %v3479, 1.442695
        %v3483 = vpow.pop %v3482
        %v3484 = vsel %vm1265, %v3481, 0.0
        %3485 = vadd.xlane.f32.xlu0 %v3484
        %v3486 = vpop.xlane.xlu0 %3485
        %v3487 = vsel %vm1265, %v3483, 0.0
        %3488 = vadd.xlane.f32.xlu0 %v3487
        %v3489 = vpop.xlane.xlu0 %3488
        %v3490 = vrcp.pop %v3486
        %v3491 = vrcp.pop %v3489
        %v3492 = vmul.f32 %v3481, %v3490
        %v3493 = vmul.f32 %v3483, %v3491
        %v3494 = vpack.c.bf16 %v3492, %v3492
        %v3495 = vpack.c.bf16 %v3493, %v3493
        %3496 = vrot.lane.b32.xlu0 %v2936, 64
        %v3497 = vpop.permute.xlu0 %3496
        %v3499 = vsel %vm1265, %v3494, 0
        %v3502 = vsel %vm1293, %v3497, 0
        %3504 = vmatprep.subr.bf16.mxu0 0
        %3505 = vmatpush1.bf16.msra.mxu0 %v3502
        %3506 = vmatprep.subr.bf16.mxu0 0
        %3507 = vmatpush1.bf16.msra.mxu0 0
        %3508 = vmatprep.subr.bf16.mxu0 0
        %3509 = vmatpush1.bf16.msra.mxu0 0
        %3510 = vmatprep.subr.bf16.mxu0 0
        %3511 = vmatpush1.bf16.msra.mxu0 0
        %3512 = vmatprep.subr.bf16.mxu0 0
        %3513 = vmatpush1.bf16.msra.mxu0 0
        %3514 = vmatprep.subr.bf16.mxu0 0
        %3515 = vmatpush1.bf16.msra.mxu0 0
        %3516 = vmatprep.subr.bf16.mxu0 0
        %3517 = vmatpush1.bf16.msra.mxu0 0
        %3518 = vmatprep.subr.bf16.mxu0 0
        %3519 = vmatpush1.bf16.msra.mxu0 0
        %3520 = vmatprep.subr.bf16.mxu0 0
        %3521 = vmatpush1.bf16.msra.mxu0 0
        %3522 = vmatprep.subr.bf16.mxu0 0
        %3523 = vmatpush1.bf16.msra.mxu0 0
        %3524 = vmatprep.subr.bf16.mxu0 0
        %3525 = vmatpush1.bf16.msra.mxu0 0
        %3526 = vmatprep.subr.bf16.mxu0 0
        %3527 = vmatpush1.bf16.msra.mxu0 0
        %3528 = vmatprep.subr.bf16.mxu0 0
        %3529 = vmatpush1.bf16.msra.mxu0 0
        %3530 = vmatprep.subr.bf16.mxu0 0
        %3531 = vmatpush1.bf16.msra.mxu0 0
        %3532 = vmatprep.subr.bf16.mxu0 0
        %3533 = vmatpush1.bf16.msra.mxu0 0
        %3534 = vmatprep.subr.bf16.mxu0 0
        %3535 = vmatpush1.bf16.msra.mxu0 0
        %3536 = vmatprep.mubr.bf16.mxu0 0
        %3537 = vmatmul.mubr.bf16.gmra.mrb[0].mxu0 %v3499
        %v3538 = vpop.f32.mrb[0].mxu0
        %v3539 = vadd.f32 0.0, %v3538
        %v3540 = vpop.f32.mrb[0].mxu0
        %v3541 = vpop.f32.mrb[0].mxu0
        %v3542 = vpop.f32.mrb[0].mxu0
        %3543 = vdwg.mxu0
        %3544 = vrot.lane.b32.xlu0 %v2937, 64
        %v3545 = vpop.permute.xlu0 %3544
        %v3547 = vsel %vm1265, %v3495, 0
        %v3550 = vsel %vm1293, %v3545, 0
        %3552 = vmatprep.subr.bf16.mxu0 0
        %3553 = vmatpush1.bf16.msra.mxu0 %v3550
        %3554 = vmatprep.subr.bf16.mxu0 0
        %3555 = vmatpush1.bf16.msra.mxu0 0
        %3556 = vmatprep.subr.bf16.mxu0 0
        %3557 = vmatpush1.bf16.msra.mxu0 0
        %3558 = vmatprep.subr.bf16.mxu0 0
        %3559 = vmatpush1.bf16.msra.mxu0 0
        %3560 = vmatprep.subr.bf16.mxu0 0
        %3561 = vmatpush1.bf16.msra.mxu0 0
        %3562 = vmatprep.subr.bf16.mxu0 0
        %3563 = vmatpush1.bf16.msra.mxu0 0
        %3564 = vmatprep.subr.bf16.mxu0 0
        %3565 = vmatpush1.bf16.msra.mxu0 0
        %3566 = vmatprep.subr.bf16.mxu0 0
        %3567 = vmatpush1.bf16.msra.mxu0 0
        %3568 = vmatprep.subr.bf16.mxu0 0
        %3569 = vmatpush1.bf16.msra.mxu0 0
        %3570 = vmatprep.subr.bf16.mxu0 0
        %3571 = vmatpush1.bf16.msra.mxu0 0
        %3572 = vmatprep.subr.bf16.mxu0 0
        %3573 = vmatpush1.bf16.msra.mxu0 0
        %3574 = vmatprep.subr.bf16.mxu0 0
        %3575 = vmatpush1.bf16.msra.mxu0 0
        %3576 = vmatprep.subr.bf16.mxu0 0
        %3577 = vmatpush1.bf16.msra.mxu0 0
        %3578 = vmatprep.subr.bf16.mxu0 0
        %3579 = vmatpush1.bf16.msra.mxu0 0
        %3580 = vmatprep.subr.bf16.mxu0 0
        %3581 = vmatpush1.bf16.msra.mxu0 0
        %3582 = vmatprep.subr.bf16.mxu0 0
        %3583 = vmatpush1.bf16.msra.mxu0 0
        %3584 = vmatprep.mubr.bf16.mxu0 0
        %3585 = vmatmul.mubr.bf16.gmra.mrb[0].mxu0 %v3547
        %v3586 = vpop.f32.mrb[0].mxu0
        %v3587 = vadd.f32 0.0, %v3586
        %v3588 = vpop.f32.mrb[0].mxu0
        %v3589 = vpop.f32.mrb[0].mxu0
        %v3590 = vpop.f32.mrb[0].mxu0
        %3591 = vdwg.mxu0
        %3592 = vrot.lane.b32.xlu0 %v2932, 32
        %v3593 = vpop.permute.xlu0 %3592
        %3594 = vrot.lane.b32.xlu0 %v2934, 32
        %v3595 = vpop.permute.xlu0 %3594
        %v3597 = vsel %vm1172, %v3593, 0
        %v3600 = vsel %vm1172, %v3595, 0
        %3602 = vmatprep.subr.bf16.mxu0 0
        %3603 = vmatpush1.bf16.xpose.msra.mxu0 %v3600
        %3604 = vmatprep.subr.bf16.mxu0 0
        %3605 = vmatpush1.bf16.xpose.msra.mxu0 0
        %3606 = vmatprep.subr.bf16.mxu0 0
        %3607 = vmatpush1.bf16.xpose.msra.mxu0 0
        %3608 = vmatprep.subr.bf16.mxu0 0
        %3609 = vmatpush1.bf16.xpose.msra.mxu0 0
        %3610 = vmatprep.subr.bf16.mxu0 0
        %3611 = vmatpush1.bf16.xpose.msra.mxu0 0
        %3612 = vmatprep.subr.bf16.mxu0 0
        %3613 = vmatpush1.bf16.xpose.msra.mxu0 0
        %3614 = vmatprep.subr.bf16.mxu0 0
        %3615 = vmatpush1.bf16.xpose.msra.mxu0 0
        %3616 = vmatprep.subr.bf16.mxu0 0
        %3617 = vmatpush1.bf16.xpose.msra.mxu0 0
        %3618 = vmatprep.subr.bf16.mxu0 0
        %3619 = vmatpush1.bf16.xpose.msra.mxu0 0
        %3620 = vmatprep.subr.bf16.mxu0 0
        %3621 = vmatpush1.bf16.xpose.msra.mxu0 0
        %3622 = vmatprep.subr.bf16.mxu0 0
        %3623 = vmatpush1.bf16.xpose.msra.mxu0 0
        %3624 = vmatprep.subr.bf16.mxu0 0
        %3625 = vmatpush1.bf16.xpose.msra.mxu0 0
        %3626 = vmatprep.subr.bf16.mxu0 0
        %3627 = vmatpush1.bf16.xpose.msra.mxu0 0
        %3628 = vmatprep.subr.bf16.mxu0 0
        %3629 = vmatpush1.bf16.xpose.msra.mxu0 0
        %3630 = vmatprep.subr.bf16.mxu0 0
        %3631 = vmatpush1.bf16.xpose.msra.mxu0 0
        %3632 = vmatprep.subr.bf16.mxu0 0
        %3633 = vmatpush1.bf16.xpose.msra.mxu0 0
        %3634 = vmatprep.mubr.bf16.mxu0 0
        %3635 = vmatmul.mubr.bf16.gmra.mrb[0].mxu0 %v3597
        %v3636 = vpop.f32.mrb[0].mxu0
        %v3637 = vadd.f32 %v1165, %v3636
        %v3638 = vpop.f32.mrb[0].mxu0
        %v3639 = vpop.f32.mrb[0].mxu0
        %v3640 = vpop.f32.mrb[0].mxu0
        %3641 = vdwg.mxu0
        %3642 = vrot.lane.b32.xlu0 %v2933, 32
        %v3643 = vpop.permute.xlu0 %3642
        %3644 = vrot.lane.b32.xlu0 %v2935, 32
        %v3645 = vpop.permute.xlu0 %3644
        %v3647 = vsel %vm1172, %v3643, 0
        %v3650 = vsel %vm1172, %v3645, 0
        %3652 = vmatprep.subr.bf16.mxu0 0
        %3653 = vmatpush1.bf16.xpose.msra.mxu0 %v3650
        %3654 = vmatprep.subr.bf16.mxu0 0
        %3655 = vmatpush1.bf16.xpose.msra.mxu0 0
        %3656 = vmatprep.subr.bf16.mxu0 0
        %3657 = vmatpush1.bf16.xpose.msra.mxu0 0
        %3658 = vmatprep.subr.bf16.mxu0 0
        %3659 = vmatpush1.bf16.xpose.msra.mxu0 0
        %3660 = vmatprep.subr.bf16.mxu0 0
        %3661 = vmatpush1.bf16.xpose.msra.mxu0 0
        %3662 = vmatprep.subr.bf16.mxu0 0
        %3663 = vmatpush1.bf16.xpose.msra.mxu0 0
        %3664 = vmatprep.subr.bf16.mxu0 0
        %3665 = vmatpush1.bf16.xpose.msra.mxu0 0
        %3666 = vmatprep.subr.bf16.mxu0 0
        %3667 = vmatpush1.bf16.xpose.msra.mxu0 0
        %3668 = vmatprep.subr.bf16.mxu0 0
        %3669 = vmatpush1.bf16.xpose.msra.mxu0 0
        %3670 = vmatprep.subr.bf16.mxu0 0
        %3671 = vmatpush1.bf16.xpose.msra.mxu0 0
        %3672 = vmatprep.subr.bf16.mxu0 0
        %3673 = vmatpush1.bf16.xpose.msra.mxu0 0
        %3674 = vmatprep.subr.bf16.mxu0 0
        %3675 = vmatpush1.bf16.xpose.msra.mxu0 0
        %3676 = vmatprep.subr.bf16.mxu0 0
        %3677 = vmatpush1.bf16.xpose.msra.mxu0 0
        %3678 = vmatprep.subr.bf16.mxu0 0
        %3679 = vmatpush1.bf16.xpose.msra.mxu0 0
        %3680 = vmatprep.subr.bf16.mxu0 0
        %3681 = vmatpush1.bf16.xpose.msra.mxu0 0
        %3682 = vmatprep.subr.bf16.mxu0 0
        %3683 = vmatpush1.bf16.xpose.msra.mxu0 0
        %3684 = vmatprep.mubr.bf16.mxu0 0
        %3685 = vmatmul.mubr.bf16.gmra.mrb[0].mxu0 %v3647
        %v3686 = vpop.f32.mrb[0].mxu0
        %v3687 = vadd.f32 %v1169, %v3686
        %v3688 = vpop.f32.mrb[0].mxu0
        %v3689 = vpop.f32.mrb[0].mxu0
        %v3690 = vpop.f32.mrb[0].mxu0
        %3691 = vdwg.mxu0
        %v3692 = vsel %vm1265, %v3637, -inf
        %3693 = vmax.xlane.f32.xlu0 %v3692
        %v3694 = vpop.xlane.xlu0 %3693
        %v3695 = vsel %vm1265, %v3687, -inf
        %3696 = vmax.xlane.f32.xlu0 %v3695
        %v3697 = vpop.xlane.xlu0 %3696
        %v3698 = vsub.f32 %v3637, %v3694
        %v3699 = vsub.f32 %v3687, %v3697
        %v3700 = vmul.f32 %v3698, 1.442695
        %v3701 = vpow.pop %v3700
        %v3702 = vmul.f32 %v3699, 1.442695
        %v3703 = vpow.pop %v3702
        %v3704 = vsel %vm1265, %v3701, 0.0
        %3705 = vadd.xlane.f32.xlu0 %v3704
        %v3706 = vpop.xlane.xlu0 %3705
        %v3707 = vsel %vm1265, %v3703, 0.0
        %3708 = vadd.xlane.f32.xlu0 %v3707
        %v3709 = vpop.xlane.xlu0 %3708
        %v3710 = vrcp.pop %v3706
        %v3711 = vrcp.pop %v3709
        %v3712 = vmul.f32 %v3701, %v3710
        %v3713 = vmul.f32 %v3703, %v3711
        %v3714 = vpack.c.bf16 %v3712, %v3712
        %v3715 = vpack.c.bf16 %v3713, %v3713
        %3716 = vrot.lane.b32.xlu0 %v2936, 32
        %v3717 = vpop.permute.xlu0 %3716
        %v3719 = vsel %vm1265, %v3714, 0
        %v3722 = vsel %vm1293, %v3717, 0
        %3724 = vmatprep.subr.bf16.mxu0 0
        %3725 = vmatpush1.bf16.msra.mxu0 %v3722
        %3726 = vmatprep.subr.bf16.mxu0 0
        %3727 = vmatpush1.bf16.msra.mxu0 0
        %3728 = vmatprep.subr.bf16.mxu0 0
        %3729 = vmatpush1.bf16.msra.mxu0 0
        %3730 = vmatprep.subr.bf16.mxu0 0
        %3731 = vmatpush1.bf16.msra.mxu0 0
        %3732 = vmatprep.subr.bf16.mxu0 0
        %3733 = vmatpush1.bf16.msra.mxu0 0
        %3734 = vmatprep.subr.bf16.mxu0 0
        %3735 = vmatpush1.bf16.msra.mxu0 0
        %3736 = vmatprep.subr.bf16.mxu0 0
        %3737 = vmatpush1.bf16.msra.mxu0 0
        %3738 = vmatprep.subr.bf16.mxu0 0
        %3739 = vmatpush1.bf16.msra.mxu0 0
        %3740 = vmatprep.subr.bf16.mxu0 0
        %3741 = vmatpush1.bf16.msra.mxu0 0
        %3742 = vmatprep.subr.bf16.mxu0 0
        %3743 = vmatpush1.bf16.msra.mxu0 0
        %3744 = vmatprep.subr.bf16.mxu0 0
        %3745 = vmatpush1.bf16.msra.mxu0 0
        %3746 = vmatprep.subr.bf16.mxu0 0
        %3747 = vmatpush1.bf16.msra.mxu0 0
        %3748 = vmatprep.subr.bf16.mxu0 0
        %3749 = vmatpush1.bf16.msra.mxu0 0
        %3750 = vmatprep.subr.bf16.mxu0 0
        %3751 = vmatpush1.bf16.msra.mxu0 0
        %3752 = vmatprep.subr.bf16.mxu0 0
        %3753 = vmatpush1.bf16.msra.mxu0 0
        %3754 = vmatprep.subr.bf16.mxu0 0
        %3755 = vmatpush1.bf16.msra.mxu0 0
        %3756 = vmatprep.mubr.bf16.mxu0 0
        %3757 = vmatmul.mubr.bf16.gmra.mrb[0].mxu0 %v3719
        %v3758 = vpop.f32.mrb[0].mxu0
        %v3759 = vadd.f32 0.0, %v3758
        %v3760 = vpop.f32.mrb[0].mxu0
        %v3761 = vpop.f32.mrb[0].mxu0
        %v3762 = vpop.f32.mrb[0].mxu0
        %3763 = vdwg.mxu0
        %3764 = vrot.lane.b32.xlu0 %v2937, 32
        %v3765 = vpop.permute.xlu0 %3764
        %v3767 = vsel %vm1265, %v3715, 0
        %v3770 = vsel %vm1293, %v3765, 0
        %3772 = vmatprep.subr.bf16.mxu0 0
        %3773 = vmatpush1.bf16.msra.mxu0 %v3770
        %3774 = vmatprep.subr.bf16.mxu0 0
        %3775 = vmatpush1.bf16.msra.mxu0 0
        %3776 = vmatprep.subr.bf16.mxu0 0
        %3777 = vmatpush1.bf16.msra.mxu0 0
        %3778 = vmatprep.subr.bf16.mxu0 0
        %3779 = vmatpush1.bf16.msra.mxu0 0
        %3780 = vmatprep.subr.bf16.mxu0 0
        %3781 = vmatpush1.bf16.msra.mxu0 0
        %3782 = vmatprep.subr.bf16.mxu0 0
        %3783 = vmatpush1.bf16.msra.mxu0 0
        %3784 = vmatprep.subr.bf16.mxu0 0
        %3785 = vmatpush1.bf16.msra.mxu0 0
        %3786 = vmatprep.subr.bf16.mxu0 0
        %3787 = vmatpush1.bf16.msra.mxu0 0
        %3788 = vmatprep.subr.bf16.mxu0 0
        %3789 = vmatpush1.bf16.msra.mxu0 0
        %3790 = vmatprep.subr.bf16.mxu0 0
        %3791 = vmatpush1.bf16.msra.mxu0 0
        %3792 = vmatprep.subr.bf16.mxu0 0
        %3793 = vmatpush1.bf16.msra.mxu0 0
        %3794 = vmatprep.subr.bf16.mxu0 0
        %3795 = vmatpush1.bf16.msra.mxu0 0
        %3796 = vmatprep.subr.bf16.mxu0 0
        %3797 = vmatpush1.bf16.msra.mxu0 0
        %3798 = vmatprep.subr.bf16.mxu0 0
        %3799 = vmatpush1.bf16.msra.mxu0 0
        %3800 = vmatprep.subr.bf16.mxu0 0
        %3801 = vmatpush1.bf16.msra.mxu0 0
        %3802 = vmatprep.subr.bf16.mxu0 0
        %3803 = vmatpush1.bf16.msra.mxu0 0
        %3804 = vmatprep.mubr.bf16.mxu0 0
        %3805 = vmatmul.mubr.bf16.gmra.mrb[0].mxu0 %v3767
        %v3806 = vpop.f32.mrb[0].mxu0
        %v3807 = vadd.f32 0.0, %v3806
        %v3808 = vpop.f32.mrb[0].mxu0
        %v3809 = vpop.f32.mrb[0].mxu0
        %v3810 = vpop.f32.mrb[0].mxu0
        %3811 = vdwg.mxu0
        %3814 = vrot.lane.b32.xlu0 %v3318, 32
        %v3815 = vpop.permute.xlu0 %3814
        %3816 = vrot.lane.b32.xlu0 %v3367, 32
        %v3817 = vpop.permute.xlu0 %3816
        %3822 = vrot.lane.b32.xlu0 %v3539, 64
        %v3823 = vpop.permute.xlu0 %3822
        %3824 = vrot.lane.b32.xlu0 %v3587, 64
        %v3825 = vpop.permute.xlu0 %3824
        %3830 = vrot.lane.b32.xlu0 %v3759, 96
        %v3831 = vpop.permute.xlu0 %3830
        %3832 = vrot.lane.b32.xlu0 %v3807, 96
        %v3833 = vpop.permute.xlu0 %3832
        %v3836 = vsel %vm1172, %v3095, %v3815
        %v3837 = vsel %vm1172, %v3141, %v3817
        %v3838 = vsel %vm2075, %v3836, %v3823
        %v3839 = vsel %vm2075, %v3837, %v3825
        %v3840 = vsel %vm2078, %v3838, %v3831
        %v3841 = vsel %vm2078, %v3839, %v3833
        %v3842 = vpack.c.bf16 %v3841, %v3840
        %3843 = vmatprep.subr.bf16.mxu0 0
        %3844 = vmatpush1.bf16.msra.mxu0 %v2120
        %3845 = vmatprep.subr.bf16.mxu0 0
        %3846 = vmatpush1.bf16.msra.mxu0 %v2121
        %3847 = vmatprep.subr.bf16.mxu0 0
        %3848 = vmatpush1.bf16.msra.mxu0 %v2122
        %3849 = vmatprep.subr.bf16.mxu0 0
        %3850 = vmatpush1.bf16.msra.mxu0 %v2123
        %3851 = vmatprep.subr.bf16.mxu0 0
        %3852 = vmatpush1.bf16.msra.mxu0 %v2124
        %3853 = vmatprep.subr.bf16.mxu0 0
        %3854 = vmatpush1.bf16.msra.mxu0 %v2125
        %3855 = vmatprep.subr.bf16.mxu0 0
        %3856 = vmatpush1.bf16.msra.mxu0 %v2126
        %3857 = vmatprep.subr.bf16.mxu0 0
        %3858 = vmatpush1.bf16.msra.mxu0 %v2127
        %3859 = vmatprep.subr.bf16.mxu0 0
        %3860 = vmatpush1.bf16.msra.mxu0 0
        %3861 = vmatprep.subr.bf16.mxu0 0
        %3862 = vmatpush1.bf16.msra.mxu0 0
        %3863 = vmatprep.subr.bf16.mxu0 0
        %3864 = vmatpush1.bf16.msra.mxu0 0
        %3865 = vmatprep.subr.bf16.mxu0 0
        %3866 = vmatpush1.bf16.msra.mxu0 0
        %3867 = vmatprep.subr.bf16.mxu0 0
        %3868 = vmatpush1.bf16.msra.mxu0 0
        %3869 = vmatprep.subr.bf16.mxu0 0
        %3870 = vmatpush1.bf16.msra.mxu0 0
        %3871 = vmatprep.subr.bf16.mxu0 0
        %3872 = vmatpush1.bf16.msra.mxu0 0
        %3873 = vmatprep.subr.bf16.mxu0 0
        %3874 = vmatpush1.bf16.msra.mxu0 0
        %3875 = vmatprep.mubr.bf16.mxu0 0
        %3876 = vmatmul.mubr.bf16.gmra.mrb[0].mxu0 %v3842
        %v3877 = vpop.f32.mrb[0].mxu0
        %v3878 = vadd.f32 %v2086, %v3877
        %v3879 = vpop.f32.mrb[0].mxu0
        %v3880 = vpop.f32.mrb[0].mxu0
        %v3881 = vadd.f32 %v2086, %v3880
        %v3882 = vpop.f32.mrb[0].mxu0
        %3883 = vdwg.mxu0
        %v3884 = vadd.f32 %v2817, %v3878
        %v3885 = vadd.f32 %v2818, %v3881
        %3886 = vadd.xlane.f32.xlu0 %v3884
        %v3887 = vpop.xlane.xlu0 %3886
        %3888 = vadd.xlane.f32.xlu0 %v3885
        %v3889 = vpop.xlane.xlu0 %3888
        %v3890 = vmul.f32 %v3887, %v888
        %v3891 = vmul.f32 %v3889, %v888
        %v3892 = vsub.f32 %v3884, %v3890
        %v3893 = vsub.f32 %v3885, %v3891
        %v3894 = vmul.f32 %v3892, %v3892
        %v3895 = vmul.f32 %v3893, %v3893
        %3896 = vadd.xlane.f32.xlu0 %v3894
        %v3897 = vpop.xlane.xlu0 %3896
        %3898 = vadd.xlane.f32.xlu0 %v3895
        %v3899 = vpop.xlane.xlu0 %3898
        %v3900 = vmul.f32 %v3897, %v888
        %v3901 = vmul.f32 %v3899, %v888
        %v3902 = vadd.f32 %v3900, 1e-05
        %v3903 = vadd.f32 %v3901, 1e-05
        %v3904 = vrsqrt.pop %v3902
        %v3905 = vrsqrt.pop %v3903
        %v3906 = vmul.f32 %v3892, %v3904
        %v3907 = vmul.f32 %v3893, %v3905
        %v3908 = vmul.f32 %v3906, %v2205
        %v3909 = vmul.f32 %v3907, %v2205
        %v3910 = vadd.f32 %v3908, %v2213
        %v3911 = vadd.f32 %v3909, %v2213
        %v3912 = vpack.c.bf16 %v3911, %v3910
        %3913 = vmatprep.subr.bf16.mxu0 %v2336
        %3914 = vmatpush1.bf16.msra.mxu0 %v2335
        %3915 = vmatprep.subr.bf16.mxu0 %v2340
        %3916 = vmatpush1.bf16.msra.mxu0 %v2339
        %3917 = vmatprep.subr.bf16.mxu0 %v2344
        %3918 = vmatpush1.bf16.msra.mxu0 %v2343
        %3919 = vmatprep.subr.bf16.mxu0 %v2348
        %3920 = vmatpush1.bf16.msra.mxu0 %v2347
        %3921 = vmatprep.subr.bf16.mxu0 %v2352
        %3922 = vmatpush1.bf16.msra.mxu0 %v2351
        %3923 = vmatprep.subr.bf16.mxu0 %v2356
        %3924 = vmatpush1.bf16.msra.mxu0 %v2355
        %3925 = vmatprep.subr.bf16.mxu0 %v2360
        %3926 = vmatpush1.bf16.msra.mxu0 %v2359
        %3927 = vmatprep.subr.bf16.mxu0 %v2364
        %3928 = vmatpush1.bf16.msra.mxu0 %v2363
        %3929 = vmatprep.subr.bf16.mxu0 0
        %3930 = vmatpush1.bf16.msra.mxu0 0
        %3931 = vmatprep.subr.bf16.mxu0 0
        %3932 = vmatpush1.bf16.msra.mxu0 0
        %3933 = vmatprep.subr.bf16.mxu0 0
        %3934 = vmatpush1.bf16.msra.mxu0 0
        %3935 = vmatprep.subr.bf16.mxu0 0
        %3936 = vmatpush1.bf16.msra.mxu0 0
        %3937 = vmatprep.subr.bf16.mxu0 0
        %3938 = vmatpush1.bf16.msra.mxu0 0
        %3939 = vmatprep.subr.bf16.mxu0 0
        %3940 = vmatpush1.bf16.msra.mxu0 0
        %3941 = vmatprep.subr.bf16.mxu0 0
        %3942 = vmatpush1.bf16.msra.mxu0 0
        %3943 = vmatprep.subr.bf16.mxu0 0
        %3944 = vmatpush1.bf16.msra.mxu0 0
        %3945 = vmatprep.mubr.bf16.mxu0 0
        %3946 = vmatmul.mubr.bf16.gmra.mrb[0].mxu0 %v3912
        %v3947 = vpop.f32.mrb[0].mxu0
        %v3948 = vadd.f32 %v2222, %v3947
        %v3949 = vpop.f32.mrb[0].mxu0
        %v3950 = vadd.f32 %v2226, %v3949
        %v3951 = vpop.f32.mrb[0].mxu0
        %v3952 = vadd.f32 %v2222, %v3951
        %v3953 = vpop.f32.mrb[0].mxu0
        %v3954 = vadd.f32 %v2226, %v3953
        %3955 = vdwg.mxu0
        %3956 = vmatprep.subr.bf16.mxu0 %v2338
        %3957 = vmatpush1.bf16.msra.mxu0 %v2337
        %3958 = vmatprep.subr.bf16.mxu0 %v2342
        %3959 = vmatpush1.bf16.msra.mxu0 %v2341
        %3960 = vmatprep.subr.bf16.mxu0 %v2346
        %3961 = vmatpush1.bf16.msra.mxu0 %v2345
        %3962 = vmatprep.subr.bf16.mxu0 %v2350
        %3963 = vmatpush1.bf16.msra.mxu0 %v2349
        %3964 = vmatprep.subr.bf16.mxu0 %v2354
        %3965 = vmatpush1.bf16.msra.mxu0 %v2353
        %3966 = vmatprep.subr.bf16.mxu0 %v2358
        %3967 = vmatpush1.bf16.msra.mxu0 %v2357
        %3968 = vmatprep.subr.bf16.mxu0 %v2362
        %3969 = vmatpush1.bf16.msra.mxu0 %v2361
        %3970 = vmatprep.subr.bf16.mxu0 %v2366
        %3971 = vmatpush1.bf16.msra.mxu0 %v2365
        %3972 = vmatprep.subr.bf16.mxu0 0
        %3973 = vmatpush1.bf16.msra.mxu0 0
        %3974 = vmatprep.subr.bf16.mxu0 0
        %3975 = vmatpush1.bf16.msra.mxu0 0
        %3976 = vmatprep.subr.bf16.mxu0 0
        %3977 = vmatpush1.bf16.msra.mxu0 0
        %3978 = vmatprep.subr.bf16.mxu0 0
        %3979 = vmatpush1.bf16.msra.mxu0 0
        %3980 = vmatprep.subr.bf16.mxu0 0
        %3981 = vmatpush1.bf16.msra.mxu0 0
        %3982 = vmatprep.subr.bf16.mxu0 0
        %3983 = vmatpush1.bf16.msra.mxu0 0
        %3984 = vmatprep.subr.bf16.mxu0 0
        %3985 = vmatpush1.bf16.msra.mxu0 0
        %3986 = vmatprep.subr.bf16.mxu0 0
        %3987 = vmatpush1.bf16.msra.mxu0 0
        %3988 = vmatprep.mubr.bf16.mxu0 0
        %3989 = vmatmul.mubr.bf16.gmra.mrb[0].mxu0 %v3912
        %v3990 = vpop.f32.mrb[0].mxu0
        %v3991 = vadd.f32 %v2230, %v3990
        %v3992 = vpop.f32.mrb[0].mxu0
        %v3993 = vadd.f32 %v2234, %v3992
        %v3994 = vpop.f32.mrb[0].mxu0
        %v3995 = vadd.f32 %v2230, %v3994
        %v3996 = vpop.f32.mrb[0].mxu0
        %v3997 = vadd.f32 %v2234, %v3996
        %3998 = vdwg.mxu0
        %v3999 = vmul.f32 %v3948, -1.702
        %v4000 = vmul.f32 %v3950, -1.702
        %v4001 = vmul.f32 %v3991, -1.702
        %v4002 = vmul.f32 %v3993, -1.702
        %v4003 = vmul.f32 %v3952, -1.702
        %v4004 = vmul.f32 %v3954, -1.702
        %v4005 = vmul.f32 %v3995, -1.702
        %v4006 = vmul.f32 %v3997, -1.702
        %v4007 = vmul.f32 %v3999, 1.442695
        %v4008 = vpow.pop %v4007
        %v4009 = vmul.f32 %v4000, 1.442695
        %v4010 = vpow.pop %v4009
        %v4011 = vmul.f32 %v4001, 1.442695
        %v4012 = vpow.pop %v4011
        %v4013 = vmul.f32 %v4002, 1.442695
        %v4014 = vpow.pop %v4013
        %v4015 = vmul.f32 %v4003, 1.442695
        %v4016 = vpow.pop %v4015
        %v4017 = vmul.f32 %v4004, 1.442695
        %v4018 = vpow.pop %v4017
        %v4019 = vmul.f32 %v4005, 1.442695
        %v4020 = vpow.pop %v4019
        %v4021 = vmul.f32 %v4006, 1.442695
        %v4022 = vpow.pop %v4021
        %v4023 = vadd.f32 %v4008, 1.0
        %v4024 = vadd.f32 %v4010, 1.0
        %v4025 = vadd.f32 %v4012, 1.0
        %v4026 = vadd.f32 %v4014, 1.0
        %v4027 = vadd.f32 %v4016, 1.0
        %v4028 = vadd.f32 %v4018, 1.0
        %v4029 = vadd.f32 %v4020, 1.0
        %v4030 = vadd.f32 %v4022, 1.0
        %v4031 = vrcp.pop %v4023
        %v4032 = vrcp.pop %v4024
        %v4033 = vrcp.pop %v4025
        %v4034 = vrcp.pop %v4026
        %v4035 = vrcp.pop %v4027
        %v4036 = vrcp.pop %v4028
        %v4037 = vrcp.pop %v4029
        %v4038 = vrcp.pop %v4030
        %v4039 = vmul.f32 %v3948, %v4031
        %v4040 = vmul.f32 %v3950, %v4032
        %v4041 = vmul.f32 %v3991, %v4033
        %v4042 = vmul.f32 %v3993, %v4034
        %v4043 = vmul.f32 %v3952, %v4035
        %v4044 = vmul.f32 %v3954, %v4036
        %v4045 = vmul.f32 %v3995, %v4037
        %v4046 = vmul.f32 %v3997, %v4038
        %v4047 = vpack.c.bf16 %v4043, %v4039
        %v4048 = vpack.c.bf16 %v4044, %v4040
        %v4049 = vpack.c.bf16 %v4045, %v4041
        %v4050 = vpack.c.bf16 %v4046, %v4042
        %4051 = vmatprep.subr.bf16.mxu0 0
        %4052 = vmatpush1.bf16.msra.mxu0 %v2671
        %4053 = vmatprep.subr.bf16.mxu0 0
        %4054 = vmatpush1.bf16.msra.mxu0 %v2672
        %4055 = vmatprep.subr.bf16.mxu0 0
        %4056 = vmatpush1.bf16.msra.mxu0 %v2673
        %4057 = vmatprep.subr.bf16.mxu0 0
        %4058 = vmatpush1.bf16.msra.mxu0 %v2674
        %4059 = vmatprep.subr.bf16.mxu0 0
        %4060 = vmatpush1.bf16.msra.mxu0 %v2675
        %4061 = vmatprep.subr.bf16.mxu0 0
        %4062 = vmatpush1.bf16.msra.mxu0 %v2676
        %4063 = vmatprep.subr.bf16.mxu0 0
        %4064 = vmatpush1.bf16.msra.mxu0 %v2677
        %4065 = vmatprep.subr.bf16.mxu0 0
        %4066 = vmatpush1.bf16.msra.mxu0 %v2678
        %4067 = vmatprep.subr.bf16.mxu0 0
        %4068 = vmatpush1.bf16.msra.mxu0 %v2679
        %4069 = vmatprep.subr.bf16.mxu0 0
        %4070 = vmatpush1.bf16.msra.mxu0 %v2680
        %4071 = vmatprep.subr.bf16.mxu0 0
        %4072 = vmatpush1.bf16.msra.mxu0 %v2681
        %4073 = vmatprep.subr.bf16.mxu0 0
        %4074 = vmatpush1.bf16.msra.mxu0 %v2682
        %4075 = vmatprep.subr.bf16.mxu0 0
        %4076 = vmatpush1.bf16.msra.mxu0 %v2683
        %4077 = vmatprep.subr.bf16.mxu0 0
        %4078 = vmatpush1.bf16.msra.mxu0 %v2684
        %4079 = vmatprep.subr.bf16.mxu0 0
        %4080 = vmatpush1.bf16.msra.mxu0 %v2685
        %4081 = vmatprep.subr.bf16.mxu0 0
        %4082 = vmatpush1.bf16.msra.mxu0 %v2686
        %4083 = vmatprep.mubr.bf16.mxu0 %v4048
        %4084 = vmatmul.mubr.bf16.gmra.mrb[0].mxu0 %v4047
        %v4085 = vpop.f32.mrb[0].mxu0
        %v4086 = vadd.f32 %v2541, %v4085
        %v4087 = vpop.f32.mrb[0].mxu0
        %v4088 = vpop.f32.mrb[0].mxu0
        %v4089 = vadd.f32 %v2541, %v4088
        %v4090 = vpop.f32.mrb[0].mxu0
        %4091 = vdwg.mxu0
        %4092 = vmatprep.subr.bf16.mxu0 0
        %4093 = vmatpush1.bf16.msra.mxu0 %v2687
        %4094 = vmatprep.subr.bf16.mxu0 0
        %4095 = vmatpush1.bf16.msra.mxu0 %v2688
        %4096 = vmatprep.subr.bf16.mxu0 0
        %4097 = vmatpush1.bf16.msra.mxu0 %v2689
        %4098 = vmatprep.subr.bf16.mxu0 0
        %4099 = vmatpush1.bf16.msra.mxu0 %v2690
        %4100 = vmatprep.subr.bf16.mxu0 0
        %4101 = vmatpush1.bf16.msra.mxu0 %v2691
        %4102 = vmatprep.subr.bf16.mxu0 0
        %4103 = vmatpush1.bf16.msra.mxu0 %v2692
        %4104 = vmatprep.subr.bf16.mxu0 0
        %4105 = vmatpush1.bf16.msra.mxu0 %v2693
        %4106 = vmatprep.subr.bf16.mxu0 0
        %4107 = vmatpush1.bf16.msra.mxu0 %v2694
        %4108 = vmatprep.subr.bf16.mxu0 0
        %4109 = vmatpush1.bf16.msra.mxu0 %v2695
        %4110 = vmatprep.subr.bf16.mxu0 0
        %4111 = vmatpush1.bf16.msra.mxu0 %v2696
        %4112 = vmatprep.subr.bf16.mxu0 0
        %4113 = vmatpush1.bf16.msra.mxu0 %v2697
        %4114 = vmatprep.subr.bf16.mxu0 0
        %4115 = vmatpush1.bf16.msra.mxu0 %v2698
        %4116 = vmatprep.subr.bf16.mxu0 0
        %4117 = vmatpush1.bf16.msra.mxu0 %v2699
        %4118 = vmatprep.subr.bf16.mxu0 0
        %4119 = vmatpush1.bf16.msra.mxu0 %v2700
        %4120 = vmatprep.subr.bf16.mxu0 0
        %4121 = vmatpush1.bf16.msra.mxu0 %v2701
        %4122 = vmatprep.subr.bf16.mxu0 0
        %4123 = vmatpush1.bf16.msra.mxu0 %v2702
        %4124 = vmatprep.mubr.bf16.mxu0 %v4050
        %4125 = vmatmul.mubr.bf16.gmra.mrb[0].mxu0 %v4049
        %v4126 = vpop.f32.mrb[0].mxu0
        %v4127 = vadd.f32 %v4086, %v4126
        %v4128 = vpop.f32.mrb[0].mxu0
        %v4129 = vpop.f32.mrb[0].mxu0
        %v4130 = vadd.f32 %v4089, %v4129
        %v4131 = vpop.f32.mrb[0].mxu0
        %4132 = vdwg.mxu0
        %v4133 = vadd.f32 %v3884, %v4127
        %v4134 = vadd.f32 %v3885, %v4130
        %4136 = vset.pattern.permute.xlu0 0
        %4137 = vperm.xlu0 %4136, %v726
        %v4138 = vpop.permute.xlu0 %4137
        %4141 = vset.pattern.permute.xlu0 0
        %4142 = vperm.xlu0 %4141, %v727
        %v4143 = vpop.permute.xlu0 %4142
        %v4145 = vmul.f32 %v4133, %v4138
        %v4146 = vmul.f32 %v4134, %v4143
        %4147 = vadd.xlane.f32.xlu0 %v4145
        %v4148 = vpop.xlane.xlu0 %4147
        %4149 = vadd.xlane.f32.xlu0 %v4146
        %v4150 = vpop.xlane.xlu0 %4149
        %v4151 = vmul.f32 %v4148, %v888
        %v4152 = vmul.f32 %v4150, %v888
        %v4153 = vsub.f32 %v4145, %v4151
        %v4154 = vsub.f32 %v4146, %v4152
        %v4155 = vmul.f32 %v4153, %v4153
        %v4156 = vmul.f32 %v4154, %v4154
        %4157 = vadd.xlane.f32.xlu0 %v4155
        %v4158 = vpop.xlane.xlu0 %4157
        %4159 = vadd.xlane.f32.xlu0 %v4156
        %v4160 = vpop.xlane.xlu0 %4159
        %v4161 = vmul.f32 %v4158, %v888
        %v4162 = vmul.f32 %v4160, %v888
        %v4163 = vadd.f32 %v4161, 1e-05
        %v4164 = vadd.f32 %v4162, 1e-05
        %v4165 = vrsqrt.pop %v4163
        %v4166 = vrsqrt.pop %v4164
        %v4167 = vmul.f32 %v4153, %v4165
        %v4168 = vmul.f32 %v4154, %v4166
        %v4170 = vlaneseq
        %v4171 = vshrl.u32 %v4170, 7
        %v4172 = vsub.s32 0, %v4171
        %v4173 = vrot.slane %v734, %v4172
        %v4175 = vmul.f32 %v4167, %v4173
        %v4176 = vmul.f32 %v4168, %v4173
        %v4178 = vlaneseq
        %v4179 = vshrl.u32 %v4178, 7
        %v4180 = vsub.s32 0, %v4179
        %v4181 = vrot.slane %v735, %v4180
        %v4183 = vadd.f32 %v4175, %v4181
        %v4184 = vadd.f32 %v4176, %v4181
        %4185 = vst [vmem:[%s704] sm:$0xff] %v4183
        %4186 = vst [vmem:[%s704 + $0x8] sm:$0xff] %v4184
        %s4187 = sand.u32 %s417, 1
        %s4188 = scalar_lea.sflag [#allocation4], %s4187
        %s4189 = sand.u32 %s417, 1
        %s4190 = smul.addr %s4189, 16
        %s4191 = scalar_lea.vmem [#allocation19], %s4190
        // Predicated region
        $region129: #{cluster_transformer_forward.1} parent=87 // pred_check
          %p4192 = pneg %p427
        $region130: #{cluster_transformer_forward.1} parent=87 // pred_check_branch
          %4194 = sbr.rel (%p4192) target = $region132
        $region131: #{cluster_transformer_forward.1} parent=87 // pred_region
          %s4195 = smul.u32 2, %s37
          %s4197 = ssub.s32 256, 256
          %4198 = vsyncadd %s4188, %s4197
          %s4199 = smul.addr %s4195, 128
          %s4200 = scalar_lea.hbm %s17, %s4199
          %s4201 = sshll.u32 %s4191, 4
          %s4202 = int_to_ptr.vmem [resolvable:$true] %s4201
          %4207 = dma.vmem_to_hbm [thread:$0]  %s4202, 256, %s4200, %s4188, 128, 128, 8
        $region132: #{cluster_transformer_forward.1} parent=87 // pred_fallthru
          _
      $region88: #{cluster_transformer_forward.1} parent=5 // pred_fallthru
        _
      %p4208 = scmp.le.s32.totalorder 2, %s32
      // Predicated region
      $region133: #{cluster_transformer_forward.1} parent=5 // pred_check
        %p4209 = pneg %p4208
      $region134: #{cluster_transformer_forward.1} parent=5 // pred_check_branch
        %4211 = sbr.rel (%p4209) target = $region136
      $region135: #{cluster_transformer_forward.1} parent=5 // pred_region
        %s4212 = ssub.s32 %s32, 2
        // Predicated region
        $region137: #{cluster_transformer_forward.1} parent=135 // pred_check
          %p4213 = pneg %p433
        $region138: #{cluster_transformer_forward.1} parent=135 // pred_check_branch
          %4215 = sbr.rel (%p4213) target = $region140
        $region139: #{cluster_transformer_forward.1} parent=135 // pred_region
          %s4216 = sand.u32 %s418, 1
          %s4217 = scalar_lea.sflag [#allocation4], %s4216
          %s4218 = sand.u32 %s418, 1
          %s4219 = smul.addr %s4218, 16
          %s4220 = scalar_lea.vmem [#allocation19], %s4219
          %4221 = dma.done %s4217, 256
        $region140: #{cluster_transformer_forward.1} parent=135 // pred_fallthru
          _
      $region136: #{cluster_transformer_forward.1} parent=5 // pred_fallthru
        _
    $region6: #{cluster_transformer_forward.1} parent=1 // loop_footer
      %s36 = sadd.s32 1, %s32
    $region7: #{cluster_transformer_forward.1} parent=1 // loop_footer_branch
      %31 = sbr.rel target = $region3
    $region8: #{cluster_transformer_forward.1} parent=1 // loop_exit
      _
    %4222 = vsyncpa [#allocation3], 1
    %s4223 = scalar_lea.sflag [#allocation3], 1
    %4224 = vsyncpa %s4223, 1
    %4225 = vsyncpa [#allocation6], 1
    %4226 = vsyncpa [#allocation9], 1
    %4227 = vsyncpa [#allocation12], 1
    %4228 = vsyncpa [#allocation15], 1
    %4229 = vsyncpa [#allocation18], 1
    %4230 = vsyncpa [#allocation4], 1
    %s4231 = scalar_lea.sflag [#allocation4], 1
    %4232 = vsyncpa %s4231, 1

</llo_original>
